<compile_context>
chip_gen: v5e
topology: v5e:2x2
jax: 0.10.0
libtpu: 0.0.40
codegen_flags: <defaults>
</compile_context>

<pallas_src>
import functools

import jax
import jax.numpy as jnp
from jax.experimental import pallas as pl
from jax.experimental.pallas import tpu as pltpu

EPS = 1e-5


@functools.lru_cache(maxsize=None)
def _vmem_limit_bytes():
  """Per-chip scoped-VMEM limit: ~70% of physical VMEM, clamped to [32, 100] MiB
  (v5e/v6e have 128 MiB physical, v7x has 64 MiB).  Falls back to a safe value
  if the trace-time hardware query is unavailable."""
  try:
    cap = int(getattr(pltpu.get_tpu_info(), "vmem_capacity_bytes"))
  except Exception:
    cap = 64 * 1024 * 1024
  return max(32 * 1024 * 1024, min(int(cap * 0.70), 100 * 1024 * 1024))


def _cparams(dimension_semantics):
  return pltpu.CompilerParams(dimension_semantics=dimension_semantics,
                              vmem_limit_bytes=_vmem_limit_bytes())


def _round_up(x, m):
  return (x + m - 1) // m * m


# ---------------------------------------------------------------------------
# Kernels
# ---------------------------------------------------------------------------


def _stats1_kernel(x_ref, mask_ref, o_ref):
  """Per-tile partial sums for BN1 batch stats of (x * mask): sum, sum-of-squares.

  Zero-padded tail rows of x contribute exactly zero, so no masking is needed.
  """
  xm = x_ref[...].astype(jnp.float32) * mask_ref[...]
  o_ref[0, 0:1, :] = jnp.sum(xm, axis=0, keepdims=True)
  o_ref[0, 1:2, :] = jnp.sum(xm * xm, axis=0, keepdims=True)


def _bn1_conv1_kernel(x_ref, a1_ref, c1_ref, w1_ref, cb1_ref, y_ref, st_ref, *,
                      tile_rows, m_total, masked_tail):
  """Folded (mask*BN1) affine -> ReLU -> 1x1 conv (bf16 MXU operands, f32 acc).

  Also emits per-tile partial sums for the BN2 batch statistics of the f32
  conv1 output.  The stored y stream is bf16 (largest HBM stream of the block).
  """
  x = x_ref[...].astype(jnp.float32)
  t = jnp.maximum(x * a1_ref[...] + c1_ref[...], 0.0)
  y = jnp.dot(t.astype(jnp.bfloat16), w1_ref[...],
              preferred_element_type=jnp.float32) + cb1_ref[...]
  y_ref[...] = y.astype(jnp.bfloat16)
  if masked_tail:
    # Zero-padded tail rows of x produce a nonzero constant y row; keep them
    # out of the BN2 statistics.  Statically skipped when the tiling is exact.
    row = (pl.program_id(0) * tile_rows
           + jax.lax.broadcasted_iota(jnp.int32, (tile_rows, 1), 0))
    y = jnp.where(row < m_total, y, 0.0)
  st_ref[0, 0:1, :] = jnp.sum(y, axis=0, keepdims=True)
  st_ref[0, 1:2, :] = jnp.sum(y * y, axis=0, keepdims=True)


def _conv2_kernel(y_ref, a2_ref, c2_ref, w2_ref, cb2_ref, o_ref, *, H, W, C1):
  """Fused BN2 affine -> ReLU -> 3x3 conv (pad=1) + bias for one whole image.

  Each of the 9 taps is a single combined shift of the flattened (H*W, C1)
  activation: shift s = (di-1)*W + (dj-1), built as a zero-filled slice concat.
  The zero fill covers every vertically-out-of-image source row (and every
  out-of-range flat index), so only the horizontal wrap inside a row needs a
  mask (column w-1 invalid at w==0, column w+1 invalid at w==W-1).  The nine
  (H*W, C1) x (C1, Cout) bf16 matmuls accumulate into one f32 accumulator — no
  9*C1 lane concatenation, so no cross-lane relayout.
  """
  cout = o_ref.shape[-1]
  act = jnp.maximum(
      y_ref[0].astype(jnp.float32).reshape(H * W, C1) * a2_ref[...] + c2_ref[...],
      0.0).astype(jnp.bfloat16)
  w2 = w2_ref[...]                                             # (9*C1, Cout) bf16

  # Column index of every output pixel, lane-narrow (H*W, 1), hoisted once.
  wpos = jax.lax.broadcasted_iota(jnp.int32, (H, W, 1), 1).reshape(H * W, 1)
  keep_left = wpos >= 1                                        # tap column w-1 valid
  keep_right = wpos <= W - 2                                   # tap column w+1 valid

  acc = jnp.zeros((H * W, cout), jnp.float32)
  for di in range(3):
    for dj in range(3):
      s = (di - 1) * W + (dj - 1)          # flattened-pixel shift of this tap
      if s > 0:
        tap = jnp.concatenate(
            [act[s:, :], jnp.zeros((s, C1), jnp.bfloat16)], axis=0)
      elif s < 0:
        tap = jnp.concatenate(
            [jnp.zeros((-s, C1), jnp.bfloat16), act[:s, :]], axis=0)
      else:
        tap = act
      if dj == 0:
        tap = jnp.where(keep_left, tap, 0.0)
      elif dj == 2:
        tap = jnp.where(keep_right, tap, 0.0)
      k0 = (di * 3 + dj) * C1
      acc = acc + jnp.dot(tap, w2[k0:k0 + C1, :],
                          preferred_element_type=jnp.float32)
  o_ref[0] = acc + cb2_ref[...]


# ---------------------------------------------------------------------------
# Parameters
# ---------------------------------------------------------------------------


def init_params(key, in_planes, out_planes):
  c1 = 4 * out_planes
  ks = jax.random.split(key, 8)
  return {
      # nn.Parameter mask (in_planes,1,1) filled True -> 1.0 per channel.
      "mask": jnp.ones((1, in_planes), jnp.float32),
      "g1": 1.0 + 0.1 * jax.random.normal(ks[0], (1, in_planes), jnp.float32),
      "b1": 0.1 * jax.random.normal(ks[1], (1, in_planes), jnp.float32),
      # conv1 weight (PyTorch: (4*out, in, 1, 1)) stored transposed as (in, 4*out).
      "w1": 0.1 * jax.random.normal(ks[2], (in_planes, c1), jnp.float32),
      "cb1": 0.1 * jax.random.normal(ks[3], (1, c1), jnp.float32),
      "g2": 1.0 + 0.1 * jax.random.normal(ks[4], (1, c1), jnp.float32),
      "b2": 0.1 * jax.random.normal(ks[5], (1, c1), jnp.float32),
      # conv2 weight (PyTorch: (out, 4*out, 3, 3)) stored as an im2col matrix
      # (9*4*out, out): row (kh*3+kw)*C1 + ci  <->  torch weight[co, ci, kh, kw].
      "w2": 0.1 * jax.random.normal(ks[6], (9 * c1, out_planes), jnp.float32),
      "cb2": 0.1 * jax.random.normal(ks[7], (1, out_planes), jnp.float32),
  }


# ---------------------------------------------------------------------------
# Forward pass
# ---------------------------------------------------------------------------


def masked_bottleneck_block(x_nchw, params, *, tile_m=1024):
  N, Cin, H, W = x_nchw.shape
  C1 = params["w1"].shape[1]
  Cout = params["w2"].shape[1]
  M = N * H * W

  # NCHW -> flattened channels-last pixels (layout glue for the PyTorch
  # interface).  Written as bf16 so the two subsequent HBM reads of x (stats
  # pass + conv1 pass) are halved; all accumulation stays f32.
  x2d = jnp.transpose(x_nchw, (0, 2, 3, 1)).reshape(M, Cin).astype(jnp.bfloat16)

  # Robust, bf16-sublane-aligned pixel tiling with an optional zero-padded tail.
  TM = min(_round_up(tile_m, 16), _round_up(M, 16))
  Mp = _round_up(M, TM)
  nt = Mp // TM
  pad = Mp - M
  if pad:
    x2d = jnp.pad(x2d, ((0, pad), (0, 0)))

  mask = params["mask"].astype(jnp.float32)

  # ---- Pass 1: BN1 batch statistics (per-tile partial sum / sum-of-squares). ----
  part1 = pl.pallas_call(
      _stats1_kernel,
      grid=(nt,),
      in_specs=[pl.BlockSpec((TM, Cin), lambda i: (i, 0)),
                pl.BlockSpec((1, Cin), lambda i: (0, 0))],
      out_specs=pl.BlockSpec((1, 2, Cin), lambda i: (i, 0, 0)),
      out_shape=jax.ShapeDtypeStruct((nt, 2, Cin), jnp.float32),
      compiler_params=_cparams(("parallel",)),
  )(x2d, mask)

  # Tiny O(C) reductions + BN1 fold in the wrapper (single-pass variance; f32
  # accumulators are ample for per-tile partials at these magnitudes).
  s1 = jnp.sum(part1[:, 0, :], axis=0, keepdims=True)
  ss1 = jnp.sum(part1[:, 1, :], axis=0, keepdims=True)
  mu1 = s1 / M
  var1 = jnp.maximum(ss1 / M - mu1 * mu1, 0.0)
  inv1 = jax.lax.rsqrt(var1 + EPS)
  a1 = mask * params["g1"] * inv1                        # (1, Cin)
  c1 = params["b1"] - mu1 * params["g1"] * inv1          # (1, Cin)

  # ---- Pass 2: folded BN1 + ReLU + 1x1 conv, plus BN2 partial statistics. ----
  w1_bf = params["w1"].astype(jnp.bfloat16)
  kernel2 = functools.partial(_bn1_conv1_kernel, tile_rows=TM, m_total=M,
                              masked_tail=pad > 0)
  y, part2 = pl.pallas_call(
      kernel2,
      grid=(nt,),
      in_specs=[pl.BlockSpec((TM, Cin), lambda i: (i, 0)),
                pl.BlockSpec((1, Cin), lambda i: (0, 0)),
                pl.BlockSpec((1, Cin), lambda i: (0, 0)),
                pl.BlockSpec((Cin, C1), lambda i: (0, 0)),
                pl.BlockSpec((1, C1), lambda i: (0, 0))],
      out_specs=(pl.BlockSpec((TM, C1), lambda i: (i, 0)),
                 pl.BlockSpec((1, 2, C1), lambda i: (i, 0, 0))),
      out_shape=(jax.ShapeDtypeStruct((Mp, C1), jnp.bfloat16),
                 jax.ShapeDtypeStruct((nt, 2, C1), jnp.float32)),
      compiler_params=_cparams(("parallel",)),
  )(x2d, a1, c1, w1_bf, params["cb1"])

  s2 = jnp.sum(part2[:, 0, :], axis=0, keepdims=True)
  ss2 = jnp.sum(part2[:, 1, :], axis=0, keepdims=True)
  mu2 = s2 / M
  var2 = jnp.maximum(ss2 / M - mu2 * mu2, 0.0)
  inv2 = jax.lax.rsqrt(var2 + EPS)
  a2 = params["g2"] * inv2                               # (1, C1)
  c2 = params["b2"] - mu2 * params["g2"] * inv2          # (1, C1)

  # ---- Pass 3: fused BN2 + ReLU + 3x3 conv + bias, one image per grid step. ----
  y4 = y[:M].reshape(N, H, W, C1)                        # drop padded tail rows
  w2_bf = params["w2"].astype(jnp.bfloat16)              # (9*C1, Cout)

  out3 = pl.pallas_call(
      functools.partial(_conv2_kernel, H=H, W=W, C1=C1),
      grid=(N,),
      in_specs=[pl.BlockSpec((1, H, W, C1), lambda n: (n, 0, 0, 0)),
                pl.BlockSpec((1, C1), lambda n: (0, 0)),
                pl.BlockSpec((1, C1), lambda n: (0, 0)),
                pl.BlockSpec((9 * C1, Cout), lambda n: (0, 0)),
                pl.BlockSpec((1, Cout), lambda n: (0, 0))],
      out_specs=pl.BlockSpec((1, H * W, Cout), lambda n: (n, 0, 0)),
      out_shape=jax.ShapeDtypeStruct((N, H * W, Cout), jnp.float32),
      compiler_params=_cparams(("parallel",)),
  )(y4, a2, c2, w2_bf, params["cb2"])

  out_nchw = jnp.transpose(out3.reshape(N, H, W, Cout), (0, 3, 1, 2))
  # torch.cat([x, out], dim=1)
  return jnp.concatenate([x_nchw.astype(jnp.float32), out_nchw], axis=1)


# ---------------------------------------------------------------------------
# Pure-JAX reference (f32 end-to-end) for a tolerance check.
# ---------------------------------------------------------------------------


def _reference(x_nchw, params):
  N, Cin, H, W = x_nchw.shape
  C1 = params["w1"].shape[1]
  Cout = params["w2"].shape[1]
  x = jnp.transpose(x_nchw, (0, 2, 3, 1)).reshape(-1, Cin).astype(jnp.float32)
  xm = x * params["mask"]
  mu1 = jnp.mean(xm, axis=0, keepdims=True)
  var1 = jnp.mean((xm - mu1) ** 2, axis=0, keepdims=True)
  t = jnp.maximum((xm - mu1) * jax.lax.rsqrt(var1 + EPS) * params["g1"]
                  + params["b1"], 0.0)
  y = t @ params["w1"] + params["cb1"]
  mu2 = jnp.mean(y, axis=0, keepdims=True)
  var2 = jnp.mean((y - mu2) ** 2, axis=0, keepdims=True)
  u = jnp.maximum((y - mu2) * jax.lax.rsqrt(var2 + EPS) * params["g2"]
                  + params["b2"], 0.0)
  up = jnp.pad(u.reshape(N, H, W, C1), ((0, 0), (1, 1), (1, 1), (0, 0)))
  acc = jnp.zeros((N * H * W, Cout), jnp.float32)
  for di in range(3):
    for dj in range(3):
      k = di * 3 + dj
      p = up[:, di:di + H, dj:dj + W, :].reshape(-1, C1)
      acc = acc + p @ params["w2"][k * C1:(k + 1) * C1]
  out = acc + params["cb2"]
  out = jnp.transpose(out.reshape(N, H, W, Cout), (0, 3, 1, 2))
  return jnp.concatenate([x_nchw.astype(jnp.float32), out], axis=1)


if __name__ == "__main__":
  # Small shapes consistent with the module: NCHW input, in_planes=8, out_planes=8.
  N, in_planes, out_planes, H, W = 2, 8, 8, 16, 16
  key = jax.random.PRNGKey(0)
  kx, kp = jax.random.split(key)
  x = jax.random.normal(kx, (N, in_planes, H, W), jnp.float32)
  params = init_params(kp, in_planes, out_planes)

  # TODO(synk): createMask() / mask_holes top-k pruning is not part of forward();
  # the mask stays all-True as at module init, matching PyTorch default behavior.
  fwd = jax.jit(functools.partial(masked_bottleneck_block, tile_m=1024))
  y = jax.block_until_ready(fwd(x, params))

  assert y.shape == (N, in_planes + out_planes, H, W), y.shape

  # Mixed abs/rel tolerance: the kernel path uses bf16 inputs / operands /
  # intermediate y (f32 accumulation throughout) plus single-pass variance,
  # while the reference is pure f32.
  ref = _reference(x, params)
  err = float(jnp.max(jnp.abs(y - ref)))
  tol = 5e-2 + 5e-2 * float(jnp.max(jnp.abs(ref)))
  assert err < tol, f"max abs error vs reference too large: {err} (tol {tol})"

  print("KERNEL_OK")
</pallas_src>

<mosaic_0001>
module attributes {stable_mosaic.version = 11 : i64} {
  func.func @_conv2_kernel(%arg0: i32, %arg1: memref<1x16x16x32xbf16, #tpu.memory_space<vmem>>, %arg2: memref<1x32xf32, #tpu.memory_space<vmem>>, %arg3: memref<1x32xf32, #tpu.memory_space<vmem>>, %arg4: memref<288x8xbf16, #tpu.memory_space<vmem>>, %arg5: memref<1x8xf32, #tpu.memory_space<vmem>>, %arg6: memref<1x256x8xf32, #tpu.memory_space<vmem>>) attributes {dimension_semantics = [#tpu.dimension_semantics<parallel>], iteration_bounds = array<i64: 2>, scalar_prefetch = 0 : i64, scratch_operands = 0 : i64, tpu.core_type = #tpu.core_type<tc>, window_params = [{transform_indices = @transform_0, window_bounds = array<i64: 1, 16, 16, 32>}, {pipeline_mode = #tpu.pipeline_mode<synchronous>, transform_indices = @transform_1, window_bounds = array<i64: 1, 32>}, {pipeline_mode = #tpu.pipeline_mode<synchronous>, transform_indices = @transform_2, window_bounds = array<i64: 1, 32>}, {pipeline_mode = #tpu.pipeline_mode<synchronous>, transform_indices = @transform_3, window_bounds = array<i64: 288, 8>}, {pipeline_mode = #tpu.pipeline_mode<synchronous>, transform_indices = @transform_4, window_bounds = array<i64: 1, 8>}, {transform_indices = @transform_5, window_bounds = array<i64: 1, 256, 8>}]} {
    %c0 = arith.constant 0 : index
    %c0_0 = arith.constant 0 : index
    %c0_1 = arith.constant 0 : index
    %c0_2 = arith.constant 0 : index
    %0 = vector.load %arg1[%c0, %c0_0, %c0_1, %c0_2] : memref<1x16x16x32xbf16, #tpu.memory_space<vmem>>, vector<1x16x16x32xbf16>
    %1 = vector.shape_cast %0 : vector<1x16x16x32xbf16> to vector<16x16x32xbf16>
    %2 = arith.extf %1 : vector<16x16x32xbf16> to vector<16x16x32xf32>
    %3 = vector.shape_cast %2 : vector<16x16x32xf32> to vector<256x32xf32>
    %c0_3 = arith.constant 0 : index
    %c0_4 = arith.constant 0 : index
    %4 = vector.load %arg2[%c0_3, %c0_4] : memref<1x32xf32, #tpu.memory_space<vmem>>, vector<1x32xf32>
    %5 = vector.broadcast %4 : vector<1x32xf32> to vector<256x32xf32>
    %6 = arith.mulf %3, %5 : vector<256x32xf32>
    %c0_5 = arith.constant 0 : index
    %c0_6 = arith.constant 0 : index
    %7 = vector.load %arg3[%c0_5, %c0_6] : memref<1x32xf32, #tpu.memory_space<vmem>>, vector<1x32xf32>
    %8 = vector.broadcast %7 : vector<1x32xf32> to vector<256x32xf32>
    %9 = arith.addf %6, %8 : vector<256x32xf32>
    %cst = arith.constant 0.000000e+00 : f32
    %10 = vector.broadcast %cst : f32 to vector<256x32xf32>
    %11 = arith.maximumf %9, %10 : vector<256x32xf32>
    %12 = arith.truncf %11 : vector<256x32xf32> to vector<256x32xbf16>
    %c0_7 = arith.constant 0 : index
    %c0_8 = arith.constant 0 : index
    %13 = vector.load %arg4[%c0_7, %c0_8] : memref<288x8xbf16, #tpu.memory_space<vmem>>, vector<288x8xbf16>
    %14 = tpu.iota {dimensions = array<i32: 1>} : vector<16x16x1xi32>
    %15 = vector.shape_cast %14 : vector<16x16x1xi32> to vector<256x1xi32>
    %c1_i32 = arith.constant 1 : i32
    %16 = vector.broadcast %c1_i32 : i32 to vector<256x1xi32>
    %17 = arith.cmpi sge, %15, %16 : vector<256x1xi32>
    %c14_i32 = arith.constant 14 : i32
    %18 = vector.broadcast %c14_i32 : i32 to vector<256x1xi32>
    %19 = arith.cmpi sle, %15, %18 : vector<256x1xi32>
    %cst_9 = arith.constant 0.000000e+00 : f32
    %20 = vector.broadcast %cst_9 : f32 to vector<256x8xf32>
    %cst_10 = arith.constant 0.000000e+00 : bf16
    %21 = vector.broadcast %cst_10 : bf16 to vector<17x32xbf16>
    %22 = vector.extract_strided_slice %12 {offsets = [0, 0], sizes = [239, 32], strides = [1, 1]} : vector<256x32xbf16> to vector<239x32xbf16>
    %23 = tpu.concatenate %21, %22 in 0 : vector<17x32xbf16>, vector<239x32xbf16> -> vector<256x32xbf16>
    %cst_11 = arith.constant 0.000000e+00 : f32
    %24 = arith.truncf %cst_11 : f32 to bf16
    %25 = vector.shape_cast %17 : vector<256x1xi1> to vector<256x1xi1>
    %26 = vector.broadcast %25 : vector<256x1xi1> to vector<256x32xi1>
    %27 = vector.broadcast %24 : bf16 to vector<256x32xbf16>
    %28 = arith.select %26, %23, %27 : vector<256x32xi1>, vector<256x32xbf16>
    %29 = vector.extract_strided_slice %13 {offsets = [0, 0], sizes = [32, 8], strides = [1, 1]} : vector<288x8xbf16> to vector<32x8xbf16>
    %cst_12 = arith.constant dense<0.000000e+00> : vector<256x8xf32>
    %30 = tpu.matmul %28, %29, %cst_12 {dimension_numbers = #tpu.dot_dimension_numbers<[1], [0], [0], [1], [0, 0, 1, 1], [], []>} : vector<256x32xbf16>, vector<32x8xbf16>, vector<256x8xf32> -> vector<256x8xf32>
    %31 = arith.addf %20, %30 : vector<256x8xf32>
    %cst_13 = arith.constant 0.000000e+00 : bf16
    %32 = vector.broadcast %cst_13 : bf16 to vector<16x32xbf16>
    %33 = vector.extract_strided_slice %12 {offsets = [0, 0], sizes = [240, 32], strides = [1, 1]} : vector<256x32xbf16> to vector<240x32xbf16>
    %34 = tpu.concatenate %32, %33 in 0 : vector<16x32xbf16>, vector<240x32xbf16> -> vector<256x32xbf16>
    %35 = vector.extract_strided_slice %13 {offsets = [32, 0], sizes = [32, 8], strides = [1, 1]} : vector<288x8xbf16> to vector<32x8xbf16>
    %cst_14 = arith.constant dense<0.000000e+00> : vector<256x8xf32>
    %36 = tpu.matmul %34, %35, %cst_14 {dimension_numbers = #tpu.dot_dimension_numbers<[1], [0], [0], [1], [0, 0, 1, 1], [], []>} : vector<256x32xbf16>, vector<32x8xbf16>, vector<256x8xf32> -> vector<256x8xf32>
    %37 = arith.addf %31, %36 : vector<256x8xf32>
    %cst_15 = arith.constant 0.000000e+00 : bf16
    %38 = vector.broadcast %cst_15 : bf16 to vector<15x32xbf16>
    %39 = vector.extract_strided_slice %12 {offsets = [0, 0], sizes = [241, 32], strides = [1, 1]} : vector<256x32xbf16> to vector<241x32xbf16>
    %40 = tpu.concatenate %38, %39 in 0 : vector<15x32xbf16>, vector<241x32xbf16> -> vector<256x32xbf16>
    %cst_16 = arith.constant 0.000000e+00 : f32
    %41 = arith.truncf %cst_16 : f32 to bf16
    %42 = vector.shape_cast %19 : vector<256x1xi1> to vector<256x1xi1>
    %43 = vector.broadcast %42 : vector<256x1xi1> to vector<256x32xi1>
    %44 = vector.broadcast %41 : bf16 to vector<256x32xbf16>
    %45 = arith.select %43, %40, %44 : vector<256x32xi1>, vector<256x32xbf16>
    %46 = vector.extract_strided_slice %13 {offsets = [64, 0], sizes = [32, 8], strides = [1, 1]} : vector<288x8xbf16> to vector<32x8xbf16>
    %cst_17 = arith.constant dense<0.000000e+00> : vector<256x8xf32>
    %47 = tpu.matmul %45, %46, %cst_17 {dimension_numbers = #tpu.dot_dimension_numbers<[1], [0], [0], [1], [0, 0, 1, 1], [], []>} : vector<256x32xbf16>, vector<32x8xbf16>, vector<256x8xf32> -> vector<256x8xf32>
    %48 = arith.addf %37, %47 : vector<256x8xf32>
    %cst_18 = arith.constant 0.000000e+00 : bf16
    %49 = vector.broadcast %cst_18 : bf16 to vector<1x32xbf16>
    %50 = vector.extract_strided_slice %12 {offsets = [0, 0], sizes = [255, 32], strides = [1, 1]} : vector<256x32xbf16> to vector<255x32xbf16>
    %51 = tpu.concatenate %49, %50 in 0 : vector<1x32xbf16>, vector<255x32xbf16> -> vector<256x32xbf16>
    %cst_19 = arith.constant 0.000000e+00 : f32
    %52 = arith.truncf %cst_19 : f32 to bf16
    %53 = vector.shape_cast %17 : vector<256x1xi1> to vector<256x1xi1>
    %54 = vector.broadcast %53 : vector<256x1xi1> to vector<256x32xi1>
    %55 = vector.broadcast %52 : bf16 to vector<256x32xbf16>
    %56 = arith.select %54, %51, %55 : vector<256x32xi1>, vector<256x32xbf16>
    %57 = vector.extract_strided_slice %13 {offsets = [96, 0], sizes = [32, 8], strides = [1, 1]} : vector<288x8xbf16> to vector<32x8xbf16>
    %cst_20 = arith.constant dense<0.000000e+00> : vector<256x8xf32>
    %58 = tpu.matmul %56, %57, %cst_20 {dimension_numbers = #tpu.dot_dimension_numbers<[1], [0], [0], [1], [0, 0, 1, 1], [], []>} : vector<256x32xbf16>, vector<32x8xbf16>, vector<256x8xf32> -> vector<256x8xf32>
    %59 = arith.addf %48, %58 : vector<256x8xf32>
    %60 = vector.extract_strided_slice %13 {offsets = [128, 0], sizes = [32, 8], strides = [1, 1]} : vector<288x8xbf16> to vector<32x8xbf16>
    %cst_21 = arith.constant dense<0.000000e+00> : vector<256x8xf32>
    %61 = tpu.matmul %12, %60, %cst_21 {dimension_numbers = #tpu.dot_dimension_numbers<[1], [0], [0], [1], [0, 0, 1, 1], [], []>} : vector<256x32xbf16>, vector<32x8xbf16>, vector<256x8xf32> -> vector<256x8xf32>
    %62 = arith.addf %59, %61 : vector<256x8xf32>
    %63 = vector.extract_strided_slice %12 {offsets = [1, 0], sizes = [255, 32], strides = [1, 1]} : vector<256x32xbf16> to vector<255x32xbf16>
    %cst_22 = arith.constant 0.000000e+00 : bf16
    %64 = vector.broadcast %cst_22 : bf16 to vector<1x32xbf16>
    %65 = tpu.concatenate %63, %64 in 0 : vector<255x32xbf16>, vector<1x32xbf16> -> vector<256x32xbf16>
    %cst_23 = arith.constant 0.000000e+00 : f32
    %66 = arith.truncf %cst_23 : f32 to bf16
    %67 = vector.shape_cast %19 : vector<256x1xi1> to vector<256x1xi1>
    %68 = vector.broadcast %67 : vector<256x1xi1> to vector<256x32xi1>
    %69 = vector.broadcast %66 : bf16 to vector<256x32xbf16>
    %70 = arith.select %68, %65, %69 : vector<256x32xi1>, vector<256x32xbf16>
    %71 = vector.extract_strided_slice %13 {offsets = [160, 0], sizes = [32, 8], strides = [1, 1]} : vector<288x8xbf16> to vector<32x8xbf16>
    %cst_24 = arith.constant dense<0.000000e+00> : vector<256x8xf32>
    %72 = tpu.matmul %70, %71, %cst_24 {dimension_numbers = #tpu.dot_dimension_numbers<[1], [0], [0], [1], [0, 0, 1, 1], [], []>} : vector<256x32xbf16>, vector<32x8xbf16>, vector<256x8xf32> -> vector<256x8xf32>
    %73 = arith.addf %62, %72 : vector<256x8xf32>
    %74 = vector.extract_strided_slice %12 {offsets = [15, 0], sizes = [241, 32], strides = [1, 1]} : vector<256x32xbf16> to vector<241x32xbf16>
    %cst_25 = arith.constant 0.000000e+00 : bf16
    %75 = vector.broadcast %cst_25 : bf16 to vector<15x32xbf16>
    %76 = tpu.concatenate %74, %75 in 0 : vector<241x32xbf16>, vector<15x32xbf16> -> vector<256x32xbf16>
    %cst_26 = arith.constant 0.000000e+00 : f32
    %77 = arith.truncf %cst_26 : f32 to bf16
    %78 = vector.shape_cast %17 : vector<256x1xi1> to vector<256x1xi1>
    %79 = vector.broadcast %78 : vector<256x1xi1> to vector<256x32xi1>
    %80 = vector.broadcast %77 : bf16 to vector<256x32xbf16>
    %81 = arith.select %79, %76, %80 : vector<256x32xi1>, vector<256x32xbf16>
    %82 = vector.extract_strided_slice %13 {offsets = [192, 0], sizes = [32, 8], strides = [1, 1]} : vector<288x8xbf16> to vector<32x8xbf16>
    %cst_27 = arith.constant dense<0.000000e+00> : vector<256x8xf32>
    %83 = tpu.matmul %81, %82, %cst_27 {dimension_numbers = #tpu.dot_dimension_numbers<[1], [0], [0], [1], [0, 0, 1, 1], [], []>} : vector<256x32xbf16>, vector<32x8xbf16>, vector<256x8xf32> -> vector<256x8xf32>
    %84 = arith.addf %73, %83 : vector<256x8xf32>
    %85 = vector.extract_strided_slice %12 {offsets = [16, 0], sizes = [240, 32], strides = [1, 1]} : vector<256x32xbf16> to vector<240x32xbf16>
    %cst_28 = arith.constant 0.000000e+00 : bf16
    %86 = vector.broadcast %cst_28 : bf16 to vector<16x32xbf16>
    %87 = tpu.concatenate %85, %86 in 0 : vector<240x32xbf16>, vector<16x32xbf16> -> vector<256x32xbf16>
    %88 = vector.extract_strided_slice %13 {offsets = [224, 0], sizes = [32, 8], strides = [1, 1]} : vector<288x8xbf16> to vector<32x8xbf16>
    %cst_29 = arith.constant dense<0.000000e+00> : vector<256x8xf32>
    %89 = tpu.matmul %87, %88, %cst_29 {dimension_numbers = #tpu.dot_dimension_numbers<[1], [0], [0], [1], [0, 0, 1, 1], [], []>} : vector<256x32xbf16>, vector<32x8xbf16>, vector<256x8xf32> -> vector<256x8xf32>
    %90 = arith.addf %84, %89 : vector<256x8xf32>
    %91 = vector.extract_strided_slice %12 {offsets = [17, 0], sizes = [239, 32], strides = [1, 1]} : vector<256x32xbf16> to vector<239x32xbf16>
    %cst_30 = arith.constant 0.000000e+00 : bf16
    %92 = vector.broadcast %cst_30 : bf16 to vector<17x32xbf16>
    %93 = tpu.concatenate %91, %92 in 0 : vector<239x32xbf16>, vector<17x32xbf16> -> vector<256x32xbf16>
    %cst_31 = arith.constant 0.000000e+00 : f32
    %94 = arith.truncf %cst_31 : f32 to bf16
    %95 = vector.shape_cast %19 : vector<256x1xi1> to vector<256x1xi1>
    %96 = vector.broadcast %95 : vector<256x1xi1> to vector<256x32xi1>
    %97 = vector.broadcast %94 : bf16 to vector<256x32xbf16>
    %98 = arith.select %96, %93, %97 : vector<256x32xi1>, vector<256x32xbf16>
    %99 = vector.extract_strided_slice %13 {offsets = [256, 0], sizes = [32, 8], strides = [1, 1]} : vector<288x8xbf16> to vector<32x8xbf16>
    %cst_32 = arith.constant dense<0.000000e+00> : vector<256x8xf32>
    %100 = tpu.matmul %98, %99, %cst_32 {dimension_numbers = #tpu.dot_dimension_numbers<[1], [0], [0], [1], [0, 0, 1, 1], [], []>} : vector<256x32xbf16>, vector<32x8xbf16>, vector<256x8xf32> -> vector<256x8xf32>
    %101 = arith.addf %90, %100 : vector<256x8xf32>
    %c0_33 = arith.constant 0 : index
    %c0_34 = arith.constant 0 : index
    %102 = vector.load %arg5[%c0_33, %c0_34] : memref<1x8xf32, #tpu.memory_space<vmem>>, vector<1x8xf32>
    %103 = vector.broadcast %102 : vector<1x8xf32> to vector<256x8xf32>
    %104 = arith.addf %101, %103 : vector<256x8xf32>
    %c0_35 = arith.constant 0 : index
    %c0_36 = arith.constant 0 : index
    %c0_37 = arith.constant 0 : index
    %105 = vector.load %arg6[%c0_35, %c0_36, %c0_37] : memref<1x256x8xf32, #tpu.memory_space<vmem>>, vector<1x256x8xf32>
    %106 = vector.shape_cast %105 : vector<1x256x8xf32> to vector<256x8xf32>
    %107 = vector.shape_cast %104 : vector<256x8xf32> to vector<1x256x8xf32>
    tpu.vector_store %arg6[%c0_35, %c0_36, %c0_37], %107 {strides = array<i32>} : memref<1x256x8xf32, #tpu.memory_space<vmem>>, vector<1x256x8xf32>,
    return
  }
  func.func @transform_0(%arg0: i32) -> (i32, i32, i32, i32) {
    %c0_i32 = arith.constant 0 : i32
    %c0_i32_0 = arith.constant 0 : i32
    %c0_i32_1 = arith.constant 0 : i32
    %c0_i32_2 = arith.constant 0 : i32
    return %arg0, %c0_i32, %c0_i32_0, %c0_i32_1 : i32, i32, i32, i32
  }
  func.func @transform_1(%arg0: i32) -> (i32, i32) {
    %c0_i32 = arith.constant 0 : i32
    %c0_i32_0 = arith.constant 0 : i32
    %c0_i32_1 = arith.constant 0 : i32
    return %c0_i32, %c0_i32_0 : i32, i32
  }
  func.func @transform_2(%arg0: i32) -> (i32, i32) {
    %c0_i32 = arith.constant 0 : i32
    %c0_i32_0 = arith.constant 0 : i32
    %c0_i32_1 = arith.constant 0 : i32
    return %c0_i32, %c0_i32_0 : i32, i32
  }
  func.func @transform_3(%arg0: i32) -> (i32, i32) {
    %c0_i32 = arith.constant 0 : i32
    %c0_i32_0 = arith.constant 0 : i32
    %c0_i32_1 = arith.constant 0 : i32
    return %c0_i32, %c0_i32_0 : i32, i32
  }
  func.func @transform_4(%arg0: i32) -> (i32, i32) {
    %c0_i32 = arith.constant 0 : i32
    %c0_i32_0 = arith.constant 0 : i32
    %c0_i32_1 = arith.constant 0 : i32
    return %c0_i32, %c0_i32_0 : i32, i32
  }
  func.func @transform_5(%arg0: i32) -> (i32, i32, i32) {
    %c0_i32 = arith.constant 0 : i32
    %c0_i32_0 = arith.constant 0 : i32
    %c0_i32_1 = arith.constant 0 : i32
    return %arg0, %c0_i32, %c0_i32_0 : i32, i32, i32
  }
}

module attributes {stable_mosaic.version = 11 : i64} {
  func.func @_stats1_kernel(%arg0: i32, %arg1: memref<512x8xbf16, #tpu.memory_space<vmem>>, %arg2: memref<1x8xf32, #tpu.memory_space<vmem>>, %arg3: memref<1x2x8xf32, #tpu.memory_space<vmem>>) attributes {dimension_semantics = [#tpu.dimension_semantics<parallel>], iteration_bounds = array<i64: 1>, scalar_prefetch = 0 : i64, scratch_operands = 0 : i64, tpu.core_type = #tpu.core_type<tc>, window_params = [{transform_indices = @transform_0, window_bounds = array<i64: 512, 8>}, {pipeline_mode = #tpu.pipeline_mode<synchronous>, transform_indices = @transform_1, window_bounds = array<i64: 1, 8>}, {transform_indices = @transform_2, window_bounds = array<i64: 1, 2, 8>}]} {
    %c0 = arith.constant 0 : index
    %c0_0 = arith.constant 0 : index
    %0 = vector.load %arg1[%c0, %c0_0] : memref<512x8xbf16, #tpu.memory_space<vmem>>, vector<512x8xbf16>
    %1 = arith.extf %0 : vector<512x8xbf16> to vector<512x8xf32>
    %c0_1 = arith.constant 0 : index
    %c0_2 = arith.constant 0 : index
    %2 = vector.load %arg2[%c0_1, %c0_2] : memref<1x8xf32, #tpu.memory_space<vmem>>, vector<1x8xf32>
    %3 = vector.broadcast %2 : vector<1x8xf32> to vector<512x8xf32>
    %4 = arith.mulf %1, %3 : vector<512x8xf32>
    %cst = arith.constant dense<0.000000e+00> : vector<8xf32>
    %5 = vector.multi_reduction <add>, %4, %cst [0] : vector<512x8xf32> to vector<8xf32>
    %6 = vector.shape_cast %5 : vector<8xf32> to vector<1x8xf32>
    %c0_3 = arith.constant 0 : index
    %c0_4 = arith.constant 0 : index
    %c0_5 = arith.constant 0 : index
    %7 = vector.load %arg3[%c0_3, %c0_4, %c0_5] : memref<1x2x8xf32, #tpu.memory_space<vmem>>, vector<1x1x8xf32>
    %8 = vector.shape_cast %7 : vector<1x1x8xf32> to vector<1x8xf32>
    %9 = vector.shape_cast %6 : vector<1x8xf32> to vector<1x1x8xf32>
    tpu.vector_store %arg3[%c0_3, %c0_4, %c0_5], %9 {strides = array<i32>} : memref<1x2x8xf32, #tpu.memory_space<vmem>>, vector<1x1x8xf32>,
    %10 = arith.mulf %4, %4 : vector<512x8xf32>
    %cst_6 = arith.constant dense<0.000000e+00> : vector<8xf32>
    %11 = vector.multi_reduction <add>, %10, %cst_6 [0] : vector<512x8xf32> to vector<8xf32>
    %12 = vector.shape_cast %11 : vector<8xf32> to vector<1x8xf32>
    %c0_7 = arith.constant 0 : index
    %c1 = arith.constant 1 : index
    %c0_8 = arith.constant 0 : index
    %13 = vector.load %arg3[%c0_7, %c1, %c0_8] : memref<1x2x8xf32, #tpu.memory_space<vmem>>, vector<1x1x8xf32>
    %14 = vector.shape_cast %13 : vector<1x1x8xf32> to vector<1x8xf32>
    %15 = vector.shape_cast %12 : vector<1x8xf32> to vector<1x1x8xf32>
    tpu.vector_store %arg3[%c0_7, %c1, %c0_8], %15 {strides = array<i32>} : memref<1x2x8xf32, #tpu.memory_space<vmem>>, vector<1x1x8xf32>,
    return
  }
  func.func @transform_0(%arg0: i32) -> (i32, i32) {
    %c0_i32 = arith.constant 0 : i32
    %c0_i32_0 = arith.constant 0 : i32
    return %arg0, %c0_i32 : i32, i32
  }
  func.func @transform_1(%arg0: i32) -> (i32, i32) {
    %c0_i32 = arith.constant 0 : i32
    %c0_i32_0 = arith.constant 0 : i32
    %c0_i32_1 = arith.constant 0 : i32
    return %c0_i32, %c0_i32_0 : i32, i32
  }
  func.func @transform_2(%arg0: i32) -> (i32, i32, i32) {
    %c0_i32 = arith.constant 0 : i32
    %c0_i32_0 = arith.constant 0 : i32
    %c0_i32_1 = arith.constant 0 : i32
    return %arg0, %c0_i32, %c0_i32_0 : i32, i32, i32
  }
}

module attributes {stable_mosaic.version = 11 : i64} {
  func.func @_bn1_conv1_kernel(%arg0: i32, %arg1: memref<512x8xbf16, #tpu.memory_space<vmem>>, %arg2: memref<1x8xf32, #tpu.memory_space<vmem>>, %arg3: memref<1x8xf32, #tpu.memory_space<vmem>>, %arg4: memref<8x32xbf16, #tpu.memory_space<vmem>>, %arg5: memref<1x32xf32, #tpu.memory_space<vmem>>, %arg6: memref<512x32xbf16, #tpu.memory_space<vmem>>, %arg7: memref<1x2x32xf32, #tpu.memory_space<vmem>>) attributes {dimension_semantics = [#tpu.dimension_semantics<parallel>], iteration_bounds = array<i64: 1>, scalar_prefetch = 0 : i64, scratch_operands = 0 : i64, tpu.core_type = #tpu.core_type<tc>, window_params = [{transform_indices = @transform_0, window_bounds = array<i64: 512, 8>}, {pipeline_mode = #tpu.pipeline_mode<synchronous>, transform_indices = @transform_1, window_bounds = array<i64: 1, 8>}, {pipeline_mode = #tpu.pipeline_mode<synchronous>, transform_indices = @transform_2, window_bounds = array<i64: 1, 8>}, {pipeline_mode = #tpu.pipeline_mode<synchronous>, transform_indices = @transform_3, window_bounds = array<i64: 8, 32>}, {pipeline_mode = #tpu.pipeline_mode<synchronous>, transform_indices = @transform_4, window_bounds = array<i64: 1, 32>}, {transform_indices = @transform_5, window_bounds = array<i64: 512, 32>}, {transform_indices = @transform_6, window_bounds = array<i64: 1, 2, 32>}]} {
    %c0 = arith.constant 0 : index
    %c0_0 = arith.constant 0 : index
    %0 = vector.load %arg1[%c0, %c0_0] : memref<512x8xbf16, #tpu.memory_space<vmem>>, vector<512x8xbf16>
    %1 = arith.extf %0 : vector<512x8xbf16> to vector<512x8xf32>
    %c0_1 = arith.constant 0 : index
    %c0_2 = arith.constant 0 : index
    %2 = vector.load %arg2[%c0_1, %c0_2] : memref<1x8xf32, #tpu.memory_space<vmem>>, vector<1x8xf32>
    %3 = vector.broadcast %2 : vector<1x8xf32> to vector<512x8xf32>
    %4 = arith.mulf %1, %3 : vector<512x8xf32>
    %c0_3 = arith.constant 0 : index
    %c0_4 = arith.constant 0 : index
    %5 = vector.load %arg3[%c0_3, %c0_4] : memref<1x8xf32, #tpu.memory_space<vmem>>, vector<1x8xf32>
    %6 = vector.broadcast %5 : vector<1x8xf32> to vector<512x8xf32>
    %7 = arith.addf %4, %6 : vector<512x8xf32>
    %cst = arith.constant 0.000000e+00 : f32
    %8 = vector.broadcast %cst : f32 to vector<512x8xf32>
    %9 = arith.maximumf %7, %8 : vector<512x8xf32>
    %10 = arith.truncf %9 : vector<512x8xf32> to vector<512x8xbf16>
    %c0_5 = arith.constant 0 : index
    %c0_6 = arith.constant 0 : index
    %11 = vector.load %arg4[%c0_5, %c0_6] : memref<8x32xbf16, #tpu.memory_space<vmem>>, vector<8x32xbf16>
    %cst_7 = arith.constant dense<0.000000e+00> : vector<512x32xf32>
    %12 = tpu.matmul %10, %11, %cst_7 {dimension_numbers = #tpu.dot_dimension_numbers<[1], [0], [0], [1], [0, 0, 1, 1], [], []>} : vector<512x8xbf16>, vector<8x32xbf16>, vector<512x32xf32> -> vector<512x32xf32>
    %c0_8 = arith.constant 0 : index
    %c0_9 = arith.constant 0 : index
    %13 = vector.load %arg5[%c0_8, %c0_9] : memref<1x32xf32, #tpu.memory_space<vmem>>, vector<1x32xf32>
    %14 = vector.broadcast %13 : vector<1x32xf32> to vector<512x32xf32>
    %15 = arith.addf %12, %14 : vector<512x32xf32>
    %16 = arith.truncf %15 : vector<512x32xf32> to vector<512x32xbf16>
    %c0_10 = arith.constant 0 : index
    %c0_11 = arith.constant 0 : index
    %17 = vector.load %arg6[%c0_10, %c0_11] : memref<512x32xbf16, #tpu.memory_space<vmem>>, vector<512x32xbf16>
    tpu.vector_store %arg6[%c0_10, %c0_11], %16 {strides = array<i32>} : memref<512x32xbf16, #tpu.memory_space<vmem>>, vector<512x32xbf16>,
    %cst_12 = arith.constant dense<0.000000e+00> : vector<32xf32>
    %18 = vector.multi_reduction <add>, %15, %cst_12 [0] : vector<512x32xf32> to vector<32xf32>
    %19 = vector.shape_cast %18 : vector<32xf32> to vector<1x32xf32>
    %c0_13 = arith.constant 0 : index
    %c0_14 = arith.constant 0 : index
    %c0_15 = arith.constant 0 : index
    %20 = vector.load %arg7[%c0_13, %c0_14, %c0_15] : memref<1x2x32xf32, #tpu.memory_space<vmem>>, vector<1x1x32xf32>
    %21 = vector.shape_cast %20 : vector<1x1x32xf32> to vector<1x32xf32>
    %22 = vector.shape_cast %19 : vector<1x32xf32> to vector<1x1x32xf32>
    tpu.vector_store %arg7[%c0_13, %c0_14, %c0_15], %22 {strides = array<i32>} : memref<1x2x32xf32, #tpu.memory_space<vmem>>, vector<1x1x32xf32>,
    %23 = arith.mulf %15, %15 : vector<512x32xf32>
    %cst_16 = arith.constant dense<0.000000e+00> : vector<32xf32>
    %24 = vector.multi_reduction <add>, %23, %cst_16 [0] : vector<512x32xf32> to vector<32xf32>
    %25 = vector.shape_cast %24 : vector<32xf32> to vector<1x32xf32>
    %c0_17 = arith.constant 0 : index
    %c1 = arith.constant 1 : index
    %c0_18 = arith.constant 0 : index
    %26 = vector.load %arg7[%c0_17, %c1, %c0_18] : memref<1x2x32xf32, #tpu.memory_space<vmem>>, vector<1x1x32xf32>
    %27 = vector.shape_cast %26 : vector<1x1x32xf32> to vector<1x32xf32>
    %28 = vector.shape_cast %25 : vector<1x32xf32> to vector<1x1x32xf32>
    tpu.vector_store %arg7[%c0_17, %c1, %c0_18], %28 {strides = array<i32>} : memref<1x2x32xf32, #tpu.memory_space<vmem>>, vector<1x1x32xf32>,
    return
  }
  func.func @transform_0(%arg0: i32) -> (i32, i32) {
    %c0_i32 = arith.constant 0 : i32
    %c0_i32_0 = arith.constant 0 : i32
    return %arg0, %c0_i32 : i32, i32
  }
  func.func @transform_1(%arg0: i32) -> (i32, i32) {
    %c0_i32 = arith.constant 0 : i32
    %c0_i32_0 = arith.constant 0 : i32
    %c0_i32_1 = arith.constant 0 : i32
    return %c0_i32, %c0_i32_0 : i32, i32
  }
  func.func @transform_2(%arg0: i32) -> (i32, i32) {
    %c0_i32 = arith.constant 0 : i32
    %c0_i32_0 = arith.constant 0 : i32
    %c0_i32_1 = arith.constant 0 : i32
    return %c0_i32, %c0_i32_0 : i32, i32
  }
  func.func @transform_3(%arg0: i32) -> (i32, i32) {
    %c0_i32 = arith.constant 0 : i32
    %c0_i32_0 = arith.constant 0 : i32
    %c0_i32_1 = arith.constant 0 : i32
    return %c0_i32, %c0_i32_0 : i32, i32
  }
  func.func @transform_4(%arg0: i32) -> (i32, i32) {
    %c0_i32 = arith.constant 0 : i32
    %c0_i32_0 = arith.constant 0 : i32
    %c0_i32_1 = arith.constant 0 : i32
    return %c0_i32, %c0_i32_0 : i32, i32
  }
  func.func @transform_5(%arg0: i32) -> (i32, i32) {
    %c0_i32 = arith.constant 0 : i32
    %c0_i32_0 = arith.constant 0 : i32
    return %arg0, %c0_i32 : i32, i32
  }
  func.func @transform_6(%arg0: i32) -> (i32, i32, i32) {
    %c0_i32 = arith.constant 0 : i32
    %c0_i32_0 = arith.constant 0 : i32
    %c0_i32_1 = arith.constant 0 : i32
    return %arg0, %c0_i32, %c0_i32_0 : i32, i32, i32
  }
}

</mosaic_0001>

<llo_original>
// kernel: masked_bottleneck_block.3
$region0: #{masked_bottleneck_block.3}
  #allocation0 [shape = 'u32[]', space=smem, size = 0x4, offset = 0x4, fixed_abs, tag = 'smem constant byte address 0x4 - core index']
  #allocation1 [shape = 'u32[72,128]{1,0:T(1,128)}', space=vmem, size = 0x9000, scoped, tag = 'internal scratch']
  %s0 = inlined_call_operand.vmem [shape: bf16[512,8], index: 0, kind: input, shape index: {}]
  %s1 = inlined_call_operand.vmem [shape: f32[1,8], index: 1, kind: input, shape index: {}]
  %s2 = inlined_call_operand.vmem [shape: f32[1,2,8], index: 2, kind: output, shape index: {}]
  %s3 = sld [smem:[#allocation0]]
  $region18: #{masked_bottleneck_block.3} parent=0
    _
  %s5 = ssub.s32 1, %s3
  %s6 = scalar_select 0, %s5, %s3
  // Predicated region
  $region2: #{masked_bottleneck_block.3} parent=0 // pred_check
    _
  $region3: #{masked_bottleneck_block.3} parent=0 // pred_check_branch
    %8 = sbr.rel (0) target = $region5
  $region4: #{masked_bottleneck_block.3} parent=0 // pred_region
    _
  $region5: #{masked_bottleneck_block.3} parent=0 // pred_fallthru
    _
  // Predicated region
  $region6: #{masked_bottleneck_block.3} parent=0 // pred_check
    _
  $region7: #{masked_bottleneck_block.3} parent=0 // pred_check_branch
    %10 = sbr.rel (0) target = $region9
  $region8: #{masked_bottleneck_block.3} parent=0 // pred_region
    _
  $region9: #{masked_bottleneck_block.3} parent=0 // pred_fallthru
    _
  %v11 = vld [vmem:[%s0] sm:$0xf]
  %v12 = vld [vmem:[%s0 + $0x4] sm:$0xf]
  %v13 = vld [vmem:[%s0 + $0x8] sm:$0xf]
  %v14 = vld [vmem:[%s0 + $0xc] sm:$0xf]
  %v15 = vld [vmem:[%s0 + $0x10] sm:$0xf]
  %v16 = vld [vmem:[%s0 + $0x14] sm:$0xf]
  %v17 = vld [vmem:[%s0 + $0x18] sm:$0xf]
  %v18 = vld [vmem:[%s0 + $0x1c] sm:$0xf]
  %v19 = vld [vmem:[%s0 + $0x20] sm:$0xf]
  %v20 = vld [vmem:[%s0 + $0x24] sm:$0xf]
  %v21 = vld [vmem:[%s0 + $0x28] sm:$0xf]
  %v22 = vld [vmem:[%s0 + $0x2c] sm:$0xf]
  %v23 = vld [vmem:[%s0 + $0x30] sm:$0xf]
  %v24 = vld [vmem:[%s0 + $0x34] sm:$0xf]
  %v25 = vld [vmem:[%s0 + $0x38] sm:$0xf]
  %v26 = vld [vmem:[%s0 + $0x3c] sm:$0xf]
  %v27 = vld [vmem:[%s0 + $0x40] sm:$0xf]
  %v28 = vld [vmem:[%s0 + $0x44] sm:$0xf]
  %v29 = vld [vmem:[%s0 + $0x48] sm:$0xf]
  %v30 = vld [vmem:[%s0 + $0x4c] sm:$0xf]
  %v31 = vld [vmem:[%s0 + $0x50] sm:$0xf]
  %v32 = vld [vmem:[%s0 + $0x54] sm:$0xf]
  %v33 = vld [vmem:[%s0 + $0x58] sm:$0xf]
  %v34 = vld [vmem:[%s0 + $0x5c] sm:$0xf]
  %v35 = vld [vmem:[%s0 + $0x60] sm:$0xf]
  %v36 = vld [vmem:[%s0 + $0x64] sm:$0xf]
  %v37 = vld [vmem:[%s0 + $0x68] sm:$0xf]
  %v38 = vld [vmem:[%s0 + $0x6c] sm:$0xf]
  %v39 = vld [vmem:[%s0 + $0x70] sm:$0xf]
  %v40 = vld [vmem:[%s0 + $0x74] sm:$0xf]
  %v41 = vld [vmem:[%s0 + $0x78] sm:$0xf]
  %v42 = vld [vmem:[%s0 + $0x7c] sm:$0xf]
  %v43 = vld [vmem:[%s0 + $0x80] sm:$0xf]
  %v44 = vld [vmem:[%s0 + $0x84] sm:$0xf]
  %v45 = vld [vmem:[%s0 + $0x88] sm:$0xf]
  %v46 = vld [vmem:[%s0 + $0x8c] sm:$0xf]
  %v47 = vld [vmem:[%s0 + $0x90] sm:$0xf]
  %v48 = vld [vmem:[%s0 + $0x94] sm:$0xf]
  %v49 = vld [vmem:[%s0 + $0x98] sm:$0xf]
  %v50 = vld [vmem:[%s0 + $0x9c] sm:$0xf]
  %v51 = vld [vmem:[%s0 + $0xa0] sm:$0xf]
  %v52 = vld [vmem:[%s0 + $0xa4] sm:$0xf]
  %v53 = vld [vmem:[%s0 + $0xa8] sm:$0xf]
  %v54 = vld [vmem:[%s0 + $0xac] sm:$0xf]
  %v55 = vld [vmem:[%s0 + $0xb0] sm:$0xf]
  %v56 = vld [vmem:[%s0 + $0xb4] sm:$0xf]
  %v57 = vld [vmem:[%s0 + $0xb8] sm:$0xf]
  %v58 = vld [vmem:[%s0 + $0xbc] sm:$0xf]
  %v59 = vld [vmem:[%s0 + $0xc0] sm:$0xf]
  %v60 = vld [vmem:[%s0 + $0xc4] sm:$0xf]
  %v61 = vld [vmem:[%s0 + $0xc8] sm:$0xf]
  %v62 = vld [vmem:[%s0 + $0xcc] sm:$0xf]
  %v63 = vld [vmem:[%s0 + $0xd0] sm:$0xf]
  %v64 = vld [vmem:[%s0 + $0xd4] sm:$0xf]
  %v65 = vld [vmem:[%s0 + $0xd8] sm:$0xf]
  %v66 = vld [vmem:[%s0 + $0xdc] sm:$0xf]
  %v67 = vld [vmem:[%s0 + $0xe0] sm:$0xf]
  %v68 = vld [vmem:[%s0 + $0xe4] sm:$0xf]
  %v69 = vld [vmem:[%s0 + $0xe8] sm:$0xf]
  %v70 = vld [vmem:[%s0 + $0xec] sm:$0xf]
  %v71 = vld [vmem:[%s0 + $0xf0] sm:$0xf]
  %v72 = vld [vmem:[%s0 + $0xf4] sm:$0xf]
  %v73 = vld [vmem:[%s0 + $0xf8] sm:$0xf]
  %v74 = vld [vmem:[%s0 + $0xfc] sm:$0xf]
  %v75 = vunpack.c.l.bf16 %v11
  %v76 = vunpack.c.l.bf16 %v12
  %v77 = vunpack.c.l.bf16 %v13
  %v78 = vunpack.c.l.bf16 %v14
  %v79 = vunpack.c.l.bf16 %v15
  %v80 = vunpack.c.l.bf16 %v16
  %v81 = vunpack.c.l.bf16 %v17
  %v82 = vunpack.c.l.bf16 %v18
  %v83 = vunpack.c.l.bf16 %v19
  %v84 = vunpack.c.l.bf16 %v20
  %v85 = vunpack.c.l.bf16 %v21
  %v86 = vunpack.c.l.bf16 %v22
  %v87 = vunpack.c.l.bf16 %v23
  %v88 = vunpack.c.l.bf16 %v24
  %v89 = vunpack.c.l.bf16 %v25
  %v90 = vunpack.c.l.bf16 %v26
  %v91 = vunpack.c.l.bf16 %v27
  %v92 = vunpack.c.l.bf16 %v28
  %v93 = vunpack.c.l.bf16 %v29
  %v94 = vunpack.c.l.bf16 %v30
  %v95 = vunpack.c.l.bf16 %v31
  %v96 = vunpack.c.l.bf16 %v32
  %v97 = vunpack.c.l.bf16 %v33
  %v98 = vunpack.c.l.bf16 %v34
  %v99 = vunpack.c.l.bf16 %v35
  %v100 = vunpack.c.l.bf16 %v36
  %v101 = vunpack.c.l.bf16 %v37
  %v102 = vunpack.c.l.bf16 %v38
  %v103 = vunpack.c.l.bf16 %v39
  %v104 = vunpack.c.l.bf16 %v40
  %v105 = vunpack.c.l.bf16 %v41
  %v106 = vunpack.c.l.bf16 %v42
  %v107 = vunpack.c.l.bf16 %v43
  %v108 = vunpack.c.l.bf16 %v44
  %v109 = vunpack.c.l.bf16 %v45
  %v110 = vunpack.c.l.bf16 %v46
  %v111 = vunpack.c.l.bf16 %v47
  %v112 = vunpack.c.l.bf16 %v48
  %v113 = vunpack.c.l.bf16 %v49
  %v114 = vunpack.c.l.bf16 %v50
  %v115 = vunpack.c.l.bf16 %v51
  %v116 = vunpack.c.l.bf16 %v52
  %v117 = vunpack.c.l.bf16 %v53
  %v118 = vunpack.c.l.bf16 %v54
  %v119 = vunpack.c.l.bf16 %v55
  %v120 = vunpack.c.l.bf16 %v56
  %v121 = vunpack.c.l.bf16 %v57
  %v122 = vunpack.c.l.bf16 %v58
  %v123 = vunpack.c.l.bf16 %v59
  %v124 = vunpack.c.l.bf16 %v60
  %v125 = vunpack.c.l.bf16 %v61
  %v126 = vunpack.c.l.bf16 %v62
  %v127 = vunpack.c.l.bf16 %v63
  %v128 = vunpack.c.l.bf16 %v64
  %v129 = vunpack.c.l.bf16 %v65
  %v130 = vunpack.c.l.bf16 %v66
  %v131 = vunpack.c.l.bf16 %v67
  %v132 = vunpack.c.l.bf16 %v68
  %v133 = vunpack.c.l.bf16 %v69
  %v134 = vunpack.c.l.bf16 %v70
  %v135 = vunpack.c.l.bf16 %v71
  %v136 = vunpack.c.l.bf16 %v72
  %v137 = vunpack.c.l.bf16 %v73
  %v138 = vunpack.c.l.bf16 %v74
  %v139 = vld [vmem:[%s1] sm:$0x1]
  %v141 = vperm.slane %v139, 0
  %v143 = vmul.f32 %v75, %v141
  %v144 = vmul.f32 %v76, %v141
  %v145 = vmul.f32 %v77, %v141
  %v146 = vmul.f32 %v78, %v141
  %v147 = vmul.f32 %v79, %v141
  %v148 = vmul.f32 %v80, %v141
  %v149 = vmul.f32 %v81, %v141
  %v150 = vmul.f32 %v82, %v141
  %v151 = vmul.f32 %v83, %v141
  %v152 = vmul.f32 %v84, %v141
  %v153 = vmul.f32 %v85, %v141
  %v154 = vmul.f32 %v86, %v141
  %v155 = vmul.f32 %v87, %v141
  %v156 = vmul.f32 %v88, %v141
  %v157 = vmul.f32 %v89, %v141
  %v158 = vmul.f32 %v90, %v141
  %v159 = vmul.f32 %v91, %v141
  %v160 = vmul.f32 %v92, %v141
  %v161 = vmul.f32 %v93, %v141
  %v162 = vmul.f32 %v94, %v141
  %v163 = vmul.f32 %v95, %v141
  %v164 = vmul.f32 %v96, %v141
  %v165 = vmul.f32 %v97, %v141
  %v166 = vmul.f32 %v98, %v141
  %v167 = vmul.f32 %v99, %v141
  %v168 = vmul.f32 %v100, %v141
  %v169 = vmul.f32 %v101, %v141
  %v170 = vmul.f32 %v102, %v141
  %v171 = vmul.f32 %v103, %v141
  %v172 = vmul.f32 %v104, %v141
  %v173 = vmul.f32 %v105, %v141
  %v174 = vmul.f32 %v106, %v141
  %v175 = vmul.f32 %v107, %v141
  %v176 = vmul.f32 %v108, %v141
  %v177 = vmul.f32 %v109, %v141
  %v178 = vmul.f32 %v110, %v141
  %v179 = vmul.f32 %v111, %v141
  %v180 = vmul.f32 %v112, %v141
  %v181 = vmul.f32 %v113, %v141
  %v182 = vmul.f32 %v114, %v141
  %v183 = vmul.f32 %v115, %v141
  %v184 = vmul.f32 %v116, %v141
  %v185 = vmul.f32 %v117, %v141
  %v186 = vmul.f32 %v118, %v141
  %v187 = vmul.f32 %v119, %v141
  %v188 = vmul.f32 %v120, %v141
  %v189 = vmul.f32 %v121, %v141
  %v190 = vmul.f32 %v122, %v141
  %v191 = vmul.f32 %v123, %v141
  %v192 = vmul.f32 %v124, %v141
  %v193 = vmul.f32 %v125, %v141
  %v194 = vmul.f32 %v126, %v141
  %v195 = vmul.f32 %v127, %v141
  %v196 = vmul.f32 %v128, %v141
  %v197 = vmul.f32 %v129, %v141
  %v198 = vmul.f32 %v130, %v141
  %v199 = vmul.f32 %v131, %v141
  %v200 = vmul.f32 %v132, %v141
  %v201 = vmul.f32 %v133, %v141
  %v202 = vmul.f32 %v134, %v141
  %v203 = vmul.f32 %v135, %v141
  %v204 = vmul.f32 %v136, %v141
  %v205 = vmul.f32 %v137, %v141
  %v206 = vmul.f32 %v138, %v141
  %vm207 = vcmask 64512
  %v208 = vsel %vm207, %v143, 0.0
  %v209 = vsel %vm207, %v144, 0.0
  %v210 = vadd.f32 %v208, %v209
  %v211 = vsel %vm207, %v145, 0.0
  %v212 = vadd.f32 %v210, %v211
  %v213 = vsel %vm207, %v146, 0.0
  %v214 = vadd.f32 %v212, %v213
  %v215 = vsel %vm207, %v147, 0.0
  %v216 = vadd.f32 %v214, %v215
  %v217 = vsel %vm207, %v148, 0.0
  %v218 = vadd.f32 %v216, %v217
  %v219 = vsel %vm207, %v149, 0.0
  %v220 = vadd.f32 %v218, %v219
  %v221 = vsel %vm207, %v150, 0.0
  %v222 = vadd.f32 %v220, %v221
  %v223 = vsel %vm207, %v151, 0.0
  %v224 = vadd.f32 %v222, %v223
  %v225 = vsel %vm207, %v152, 0.0
  %v226 = vadd.f32 %v224, %v225
  %v227 = vsel %vm207, %v153, 0.0
  %v228 = vadd.f32 %v226, %v227
  %v229 = vsel %vm207, %v154, 0.0
  %v230 = vadd.f32 %v228, %v229
  %v231 = vsel %vm207, %v155, 0.0
  %v232 = vadd.f32 %v230, %v231
  %v233 = vsel %vm207, %v156, 0.0
  %v234 = vadd.f32 %v232, %v233
  %v235 = vsel %vm207, %v157, 0.0
  %v236 = vadd.f32 %v234, %v235
  %v237 = vsel %vm207, %v158, 0.0
  %v238 = vadd.f32 %v236, %v237
  %v239 = vsel %vm207, %v159, 0.0
  %v240 = vadd.f32 %v238, %v239
  %v241 = vsel %vm207, %v160, 0.0
  %v242 = vadd.f32 %v240, %v241
  %v243 = vsel %vm207, %v161, 0.0
  %v244 = vadd.f32 %v242, %v243
  %v245 = vsel %vm207, %v162, 0.0
  %v246 = vadd.f32 %v244, %v245
  %v247 = vsel %vm207, %v163, 0.0
  %v248 = vadd.f32 %v246, %v247
  %v249 = vsel %vm207, %v164, 0.0
  %v250 = vadd.f32 %v248, %v249
  %v251 = vsel %vm207, %v165, 0.0
  %v252 = vadd.f32 %v250, %v251
  %v253 = vsel %vm207, %v166, 0.0
  %v254 = vadd.f32 %v252, %v253
  %v255 = vsel %vm207, %v167, 0.0
  %v256 = vadd.f32 %v254, %v255
  %v257 = vsel %vm207, %v168, 0.0
  %v258 = vadd.f32 %v256, %v257
  %v259 = vsel %vm207, %v169, 0.0
  %v260 = vadd.f32 %v258, %v259
  %v261 = vsel %vm207, %v170, 0.0
  %v262 = vadd.f32 %v260, %v261
  %v263 = vsel %vm207, %v171, 0.0
  %v264 = vadd.f32 %v262, %v263
  %v265 = vsel %vm207, %v172, 0.0
  %v266 = vadd.f32 %v264, %v265
  %v267 = vsel %vm207, %v173, 0.0
  %v268 = vadd.f32 %v266, %v267
  %v269 = vsel %vm207, %v174, 0.0
  %v270 = vadd.f32 %v268, %v269
  %v271 = vsel %vm207, %v175, 0.0
  %v272 = vadd.f32 %v270, %v271
  %v273 = vsel %vm207, %v176, 0.0
  %v274 = vadd.f32 %v272, %v273
  %v275 = vsel %vm207, %v177, 0.0
  %v276 = vadd.f32 %v274, %v275
  %v277 = vsel %vm207, %v178, 0.0
  %v278 = vadd.f32 %v276, %v277
  %v279 = vsel %vm207, %v179, 0.0
  %v280 = vadd.f32 %v278, %v279
  %v281 = vsel %vm207, %v180, 0.0
  %v282 = vadd.f32 %v280, %v281
  %v283 = vsel %vm207, %v181, 0.0
  %v284 = vadd.f32 %v282, %v283
  %v285 = vsel %vm207, %v182, 0.0
  %v286 = vadd.f32 %v284, %v285
  %v287 = vsel %vm207, %v183, 0.0
  %v288 = vadd.f32 %v286, %v287
  %v289 = vsel %vm207, %v184, 0.0
  %v290 = vadd.f32 %v288, %v289
  %v291 = vsel %vm207, %v185, 0.0
  %v292 = vadd.f32 %v290, %v291
  %v293 = vsel %vm207, %v186, 0.0
  %v294 = vadd.f32 %v292, %v293
  %v295 = vsel %vm207, %v187, 0.0
  %v296 = vadd.f32 %v294, %v295
  %v297 = vsel %vm207, %v188, 0.0
  %v298 = vadd.f32 %v296, %v297
  %v299 = vsel %vm207, %v189, 0.0
  %v300 = vadd.f32 %v298, %v299
  %v301 = vsel %vm207, %v190, 0.0
  %v302 = vadd.f32 %v300, %v301
  %v303 = vsel %vm207, %v191, 0.0
  %v304 = vadd.f32 %v302, %v303
  %v305 = vsel %vm207, %v192, 0.0
  %v306 = vadd.f32 %v304, %v305
  %v307 = vsel %vm207, %v193, 0.0
  %v308 = vadd.f32 %v306, %v307
  %v309 = vsel %vm207, %v194, 0.0
  %v310 = vadd.f32 %v308, %v309
  %v311 = vsel %vm207, %v195, 0.0
  %v312 = vadd.f32 %v310, %v311
  %v313 = vsel %vm207, %v196, 0.0
  %v314 = vadd.f32 %v312, %v313
  %v315 = vsel %vm207, %v197, 0.0
  %v316 = vadd.f32 %v314, %v315
  %v317 = vsel %vm207, %v198, 0.0
  %v318 = vadd.f32 %v316, %v317
  %v319 = vsel %vm207, %v199, 0.0
  %v320 = vadd.f32 %v318, %v319
  %v321 = vsel %vm207, %v200, 0.0
  %v322 = vadd.f32 %v320, %v321
  %v323 = vsel %vm207, %v201, 0.0
  %v324 = vadd.f32 %v322, %v323
  %v325 = vsel %vm207, %v202, 0.0
  %v326 = vadd.f32 %v324, %v325
  %v327 = vsel %vm207, %v203, 0.0
  %v328 = vadd.f32 %v326, %v327
  %v329 = vsel %vm207, %v204, 0.0
  %v330 = vadd.f32 %v328, %v329
  %v331 = vsel %vm207, %v205, 0.0
  %v332 = vadd.f32 %v330, %v331
  %v333 = vsel %vm207, %v206, 0.0
  %v334 = vadd.f32 %v332, %v333
  %v335 = vrot.slane %v334, 4
  %v336 = vadd.f32 %v334, %v335
  %v337 = vrot.slane %v336, 2
  %v338 = vadd.f32 %v336, %v337
  %v339 = vrot.slane %v338, 1
  %v340 = vadd.f32 %v338, %v339
  %vm341 = vcmask 57344
  %342 = vst.msk [vmem:[%s2] sm:$0x1] %vm341, %v340
  %v343 = vmul.f32 %v143, %v143
  %v344 = vmul.f32 %v144, %v144
  %v345 = vmul.f32 %v145, %v145
  %v346 = vmul.f32 %v146, %v146
  %v347 = vmul.f32 %v147, %v147
  %v348 = vmul.f32 %v148, %v148
  %v349 = vmul.f32 %v149, %v149
  %v350 = vmul.f32 %v150, %v150
  %v351 = vmul.f32 %v151, %v151
  %v352 = vmul.f32 %v152, %v152
  %v353 = vmul.f32 %v153, %v153
  %v354 = vmul.f32 %v154, %v154
  %v355 = vmul.f32 %v155, %v155
  %v356 = vmul.f32 %v156, %v156
  %v357 = vmul.f32 %v157, %v157
  %v358 = vmul.f32 %v158, %v158
  %v359 = vmul.f32 %v159, %v159
  %v360 = vmul.f32 %v160, %v160
  %v361 = vmul.f32 %v161, %v161
  %v362 = vmul.f32 %v162, %v162
  %v363 = vmul.f32 %v163, %v163
  %v364 = vmul.f32 %v164, %v164
  %v365 = vmul.f32 %v165, %v165
  %v366 = vmul.f32 %v166, %v166
  %v367 = vmul.f32 %v167, %v167
  %v368 = vmul.f32 %v168, %v168
  %v369 = vmul.f32 %v169, %v169
  %v370 = vmul.f32 %v170, %v170
  %v371 = vmul.f32 %v171, %v171
  %v372 = vmul.f32 %v172, %v172
  %v373 = vmul.f32 %v173, %v173
  %v374 = vmul.f32 %v174, %v174
  %v375 = vmul.f32 %v175, %v175
  %v376 = vmul.f32 %v176, %v176
  %v377 = vmul.f32 %v177, %v177
  %v378 = vmul.f32 %v178, %v178
  %v379 = vmul.f32 %v179, %v179
  %v380 = vmul.f32 %v180, %v180
  %v381 = vmul.f32 %v181, %v181
  %v382 = vmul.f32 %v182, %v182
  %v383 = vmul.f32 %v183, %v183
  %v384 = vmul.f32 %v184, %v184
  %v385 = vmul.f32 %v185, %v185
  %v386 = vmul.f32 %v186, %v186
  %v387 = vmul.f32 %v187, %v187
  %v388 = vmul.f32 %v188, %v188
  %v389 = vmul.f32 %v189, %v189
  %v390 = vmul.f32 %v190, %v190
  %v391 = vmul.f32 %v191, %v191
  %v392 = vmul.f32 %v192, %v192
  %v393 = vmul.f32 %v193, %v193
  %v394 = vmul.f32 %v194, %v194
  %v395 = vmul.f32 %v195, %v195
  %v396 = vmul.f32 %v196, %v196
  %v397 = vmul.f32 %v197, %v197
  %v398 = vmul.f32 %v198, %v198
  %v399 = vmul.f32 %v199, %v199
  %v400 = vmul.f32 %v200, %v200
  %v401 = vmul.f32 %v201, %v201
  %v402 = vmul.f32 %v202, %v202
  %v403 = vmul.f32 %v203, %v203
  %v404 = vmul.f32 %v204, %v204
  %v405 = vmul.f32 %v205, %v205
  %v406 = vmul.f32 %v206, %v206
  %v407 = vsel %vm207, %v343, 0.0
  %v408 = vsel %vm207, %v344, 0.0
  %v409 = vadd.f32 %v407, %v408
  %v410 = vsel %vm207, %v345, 0.0
  %v411 = vadd.f32 %v409, %v410
  %v412 = vsel %vm207, %v346, 0.0
  %v413 = vadd.f32 %v411, %v412
  %v414 = vsel %vm207, %v347, 0.0
  %v415 = vadd.f32 %v413, %v414
  %v416 = vsel %vm207, %v348, 0.0
  %v417 = vadd.f32 %v415, %v416
  %v418 = vsel %vm207, %v349, 0.0
  %v419 = vadd.f32 %v417, %v418
  %v420 = vsel %vm207, %v350, 0.0
  %v421 = vadd.f32 %v419, %v420
  %v422 = vsel %vm207, %v351, 0.0
  %v423 = vadd.f32 %v421, %v422
  %v424 = vsel %vm207, %v352, 0.0
  %v425 = vadd.f32 %v423, %v424
  %v426 = vsel %vm207, %v353, 0.0
  %v427 = vadd.f32 %v425, %v426
  %v428 = vsel %vm207, %v354, 0.0
  %v429 = vadd.f32 %v427, %v428
  %v430 = vsel %vm207, %v355, 0.0
  %v431 = vadd.f32 %v429, %v430
  %v432 = vsel %vm207, %v356, 0.0
  %v433 = vadd.f32 %v431, %v432
  %v434 = vsel %vm207, %v357, 0.0
  %v435 = vadd.f32 %v433, %v434
  %v436 = vsel %vm207, %v358, 0.0
  %v437 = vadd.f32 %v435, %v436
  %v438 = vsel %vm207, %v359, 0.0
  %v439 = vadd.f32 %v437, %v438
  %v440 = vsel %vm207, %v360, 0.0
  %v441 = vadd.f32 %v439, %v440
  %v442 = vsel %vm207, %v361, 0.0
  %v443 = vadd.f32 %v441, %v442
  %v444 = vsel %vm207, %v362, 0.0
  %v445 = vadd.f32 %v443, %v444
  %v446 = vsel %vm207, %v363, 0.0
  %v447 = vadd.f32 %v445, %v446
  %v448 = vsel %vm207, %v364, 0.0
  %v449 = vadd.f32 %v447, %v448
  %v450 = vsel %vm207, %v365, 0.0
  %v451 = vadd.f32 %v449, %v450
  %v452 = vsel %vm207, %v366, 0.0
  %v453 = vadd.f32 %v451, %v452
  %v454 = vsel %vm207, %v367, 0.0
  %v455 = vadd.f32 %v453, %v454
  %v456 = vsel %vm207, %v368, 0.0
  %v457 = vadd.f32 %v455, %v456
  %v458 = vsel %vm207, %v369, 0.0
  %v459 = vadd.f32 %v457, %v458
  %v460 = vsel %vm207, %v370, 0.0
  %v461 = vadd.f32 %v459, %v460
  %v462 = vsel %vm207, %v371, 0.0
  %v463 = vadd.f32 %v461, %v462
  %v464 = vsel %vm207, %v372, 0.0
  %v465 = vadd.f32 %v463, %v464
  %v466 = vsel %vm207, %v373, 0.0
  %v467 = vadd.f32 %v465, %v466
  %v468 = vsel %vm207, %v374, 0.0
  %v469 = vadd.f32 %v467, %v468
  %v470 = vsel %vm207, %v375, 0.0
  %v471 = vadd.f32 %v469, %v470
  %v472 = vsel %vm207, %v376, 0.0
  %v473 = vadd.f32 %v471, %v472
  %v474 = vsel %vm207, %v377, 0.0
  %v475 = vadd.f32 %v473, %v474
  %v476 = vsel %vm207, %v378, 0.0
  %v477 = vadd.f32 %v475, %v476
  %v478 = vsel %vm207, %v379, 0.0
  %v479 = vadd.f32 %v477, %v478
  %v480 = vsel %vm207, %v380, 0.0
  %v481 = vadd.f32 %v479, %v480
  %v482 = vsel %vm207, %v381, 0.0
  %v483 = vadd.f32 %v481, %v482
  %v484 = vsel %vm207, %v382, 0.0
  %v485 = vadd.f32 %v483, %v484
  %v486 = vsel %vm207, %v383, 0.0
  %v487 = vadd.f32 %v485, %v486
  %v488 = vsel %vm207, %v384, 0.0
  %v489 = vadd.f32 %v487, %v488
  %v490 = vsel %vm207, %v385, 0.0
  %v491 = vadd.f32 %v489, %v490
  %v492 = vsel %vm207, %v386, 0.0
  %v493 = vadd.f32 %v491, %v492
  %v494 = vsel %vm207, %v387, 0.0
  %v495 = vadd.f32 %v493, %v494
  %v496 = vsel %vm207, %v388, 0.0
  %v497 = vadd.f32 %v495, %v496
  %v498 = vsel %vm207, %v389, 0.0
  %v499 = vadd.f32 %v497, %v498
  %v500 = vsel %vm207, %v390, 0.0
  %v501 = vadd.f32 %v499, %v500
  %v502 = vsel %vm207, %v391, 0.0
  %v503 = vadd.f32 %v501, %v502
  %v504 = vsel %vm207, %v392, 0.0
  %v505 = vadd.f32 %v503, %v504
  %v506 = vsel %vm207, %v393, 0.0
  %v507 = vadd.f32 %v505, %v506
  %v508 = vsel %vm207, %v394, 0.0
  %v509 = vadd.f32 %v507, %v508
  %v510 = vsel %vm207, %v395, 0.0
  %v511 = vadd.f32 %v509, %v510
  %v512 = vsel %vm207, %v396, 0.0
  %v513 = vadd.f32 %v511, %v512
  %v514 = vsel %vm207, %v397, 0.0
  %v515 = vadd.f32 %v513, %v514
  %v516 = vsel %vm207, %v398, 0.0
  %v517 = vadd.f32 %v515, %v516
  %v518 = vsel %vm207, %v399, 0.0
  %v519 = vadd.f32 %v517, %v518
  %v520 = vsel %vm207, %v400, 0.0
  %v521 = vadd.f32 %v519, %v520
  %v522 = vsel %vm207, %v401, 0.0
  %v523 = vadd.f32 %v521, %v522
  %v524 = vsel %vm207, %v402, 0.0
  %v525 = vadd.f32 %v523, %v524
  %v526 = vsel %vm207, %v403, 0.0
  %v527 = vadd.f32 %v525, %v526
  %v528 = vsel %vm207, %v404, 0.0
  %v529 = vadd.f32 %v527, %v528
  %v530 = vsel %vm207, %v405, 0.0
  %v531 = vadd.f32 %v529, %v530
  %v532 = vsel %vm207, %v406, 0.0
  %v533 = vadd.f32 %v531, %v532
  %v534 = vrot.slane %v533, 4
  %v535 = vadd.f32 %v533, %v534
  %v536 = vrot.slane %v535, 2
  %v537 = vadd.f32 %v535, %v536
  %v538 = vrot.slane %v537, 1
  %v539 = vadd.f32 %v537, %v538
  %540 = vst.msk [vmem:[%s2 + $0x1] sm:$0x1] %vm341, %v539
  // Predicated region
  $region10: #{masked_bottleneck_block.3} parent=0 // pred_check
    _
  $region11: #{masked_bottleneck_block.3} parent=0 // pred_check_branch
    %542 = sbr.rel (0) target = $region13
  $region12: #{masked_bottleneck_block.3} parent=0 // pred_region
    _
  $region13: #{masked_bottleneck_block.3} parent=0 // pred_fallthru
    _
  // Predicated region
  $region14: #{masked_bottleneck_block.3} parent=0 // pred_check
    _
  $region15: #{masked_bottleneck_block.3} parent=0 // pred_check_branch
    %544 = sbr.rel (0) target = $region17
  $region16: #{masked_bottleneck_block.3} parent=0 // pred_region
    _
  $region17: #{masked_bottleneck_block.3} parent=0 // pred_fallthru
    _

// kernel: masked_bottleneck_block.4
$region0: #{masked_bottleneck_block.4}
  #allocation0 [shape = 'u32[]', space=smem, size = 0x4, offset = 0x4, fixed_abs, tag = 'smem constant byte address 0x4 - core index']
  #allocation1 [shape = 'u32[72,128]{1,0:T(1,128)}', space=vmem, size = 0x9000, scoped, tag = 'internal scratch']
  %s0 = inlined_call_operand.vmem [shape: bf16[512,8], index: 0, kind: input, shape index: {}]
  %s1 = inlined_call_operand.vmem [shape: f32[1,8], index: 1, kind: input, shape index: {}]
  %s2 = inlined_call_operand.vmem [shape: f32[1,8], index: 2, kind: input, shape index: {}]
  %s3 = inlined_call_operand.vmem [shape: bf16[8,32], index: 3, kind: input, shape index: {}]
  %s4 = inlined_call_operand.vmem [shape: f32[1,32], index: 4, kind: input, shape index: {}]
  %s5 = inlined_call_operand.vmem [shape: bf16[512,32], index: 5, kind: output, shape index: {0}]
  %s6 = inlined_call_operand.vmem [shape: f32[1,2,32], index: 6, kind: output, shape index: {1}]
  %7 = xla_tuple %s5, %s6
  %s8 = sld [smem:[#allocation0]]
  $region38: #{masked_bottleneck_block.4} parent=0
    _
  %s10 = ssub.s32 1, %s8
  %s11 = scalar_select 0, %s10, %s8
  // Predicated region
  $region2: #{masked_bottleneck_block.4} parent=0 // pred_check
    _
  $region3: #{masked_bottleneck_block.4} parent=0 // pred_check_branch
    %13 = sbr.rel (0) target = $region5
  $region4: #{masked_bottleneck_block.4} parent=0 // pred_region
    _
  $region5: #{masked_bottleneck_block.4} parent=0 // pred_fallthru
    _
  // Predicated region
  $region6: #{masked_bottleneck_block.4} parent=0 // pred_check
    _
  $region7: #{masked_bottleneck_block.4} parent=0 // pred_check_branch
    %15 = sbr.rel (0) target = $region9
  $region8: #{masked_bottleneck_block.4} parent=0 // pred_region
    _
  $region9: #{masked_bottleneck_block.4} parent=0 // pred_fallthru
    _
  // Predicated region
  $region10: #{masked_bottleneck_block.4} parent=0 // pred_check
    _
  $region11: #{masked_bottleneck_block.4} parent=0 // pred_check_branch
    %17 = sbr.rel (0) target = $region13
  $region12: #{masked_bottleneck_block.4} parent=0 // pred_region
    _
  $region13: #{masked_bottleneck_block.4} parent=0 // pred_fallthru
    _
  // Predicated region
  $region14: #{masked_bottleneck_block.4} parent=0 // pred_check
    _
  $region15: #{masked_bottleneck_block.4} parent=0 // pred_check_branch
    %19 = sbr.rel (0) target = $region17
  $region16: #{masked_bottleneck_block.4} parent=0 // pred_region
    _
  $region17: #{masked_bottleneck_block.4} parent=0 // pred_fallthru
    _
  // Predicated region
  $region18: #{masked_bottleneck_block.4} parent=0 // pred_check
    _
  $region19: #{masked_bottleneck_block.4} parent=0 // pred_check_branch
    %21 = sbr.rel (0) target = $region21
  $region20: #{masked_bottleneck_block.4} parent=0 // pred_region
    _
  $region21: #{masked_bottleneck_block.4} parent=0 // pred_fallthru
    _
  %v23 = vld [vmem:[%s0] sm:$0xf]
  %v24 = vld [vmem:[%s0 + $0x4] sm:$0xf]
  %v25 = vld [vmem:[%s0 + $0x8] sm:$0xf]
  %v26 = vld [vmem:[%s0 + $0xc] sm:$0xf]
  %v27 = vld [vmem:[%s0 + $0x10] sm:$0xf]
  %v28 = vld [vmem:[%s0 + $0x14] sm:$0xf]
  %v29 = vld [vmem:[%s0 + $0x18] sm:$0xf]
  %v30 = vld [vmem:[%s0 + $0x1c] sm:$0xf]
  %v31 = vld [vmem:[%s0 + $0x20] sm:$0xf]
  %v32 = vld [vmem:[%s0 + $0x24] sm:$0xf]
  %v33 = vld [vmem:[%s0 + $0x28] sm:$0xf]
  %v34 = vld [vmem:[%s0 + $0x2c] sm:$0xf]
  %v35 = vld [vmem:[%s0 + $0x30] sm:$0xf]
  %v36 = vld [vmem:[%s0 + $0x34] sm:$0xf]
  %v37 = vld [vmem:[%s0 + $0x38] sm:$0xf]
  %v38 = vld [vmem:[%s0 + $0x3c] sm:$0xf]
  %v39 = vld [vmem:[%s0 + $0x40] sm:$0xf]
  %v40 = vld [vmem:[%s0 + $0x44] sm:$0xf]
  %v41 = vld [vmem:[%s0 + $0x48] sm:$0xf]
  %v42 = vld [vmem:[%s0 + $0x4c] sm:$0xf]
  %v43 = vld [vmem:[%s0 + $0x50] sm:$0xf]
  %v44 = vld [vmem:[%s0 + $0x54] sm:$0xf]
  %v45 = vld [vmem:[%s0 + $0x58] sm:$0xf]
  %v46 = vld [vmem:[%s0 + $0x5c] sm:$0xf]
  %v47 = vld [vmem:[%s0 + $0x60] sm:$0xf]
  %v48 = vld [vmem:[%s0 + $0x64] sm:$0xf]
  %v49 = vld [vmem:[%s0 + $0x68] sm:$0xf]
  %v50 = vld [vmem:[%s0 + $0x6c] sm:$0xf]
  %v51 = vld [vmem:[%s0 + $0x70] sm:$0xf]
  %v52 = vld [vmem:[%s0 + $0x74] sm:$0xf]
  %v53 = vld [vmem:[%s0 + $0x78] sm:$0xf]
  %v54 = vld [vmem:[%s0 + $0x7c] sm:$0xf]
  %v55 = vld [vmem:[%s0 + $0x80] sm:$0xf]
  %v56 = vld [vmem:[%s0 + $0x84] sm:$0xf]
  %v57 = vld [vmem:[%s0 + $0x88] sm:$0xf]
  %v58 = vld [vmem:[%s0 + $0x8c] sm:$0xf]
  %v59 = vld [vmem:[%s0 + $0x90] sm:$0xf]
  %v60 = vld [vmem:[%s0 + $0x94] sm:$0xf]
  %v61 = vld [vmem:[%s0 + $0x98] sm:$0xf]
  %v62 = vld [vmem:[%s0 + $0x9c] sm:$0xf]
  %v63 = vld [vmem:[%s0 + $0xa0] sm:$0xf]
  %v64 = vld [vmem:[%s0 + $0xa4] sm:$0xf]
  %v65 = vld [vmem:[%s0 + $0xa8] sm:$0xf]
  %v66 = vld [vmem:[%s0 + $0xac] sm:$0xf]
  %v67 = vld [vmem:[%s0 + $0xb0] sm:$0xf]
  %v68 = vld [vmem:[%s0 + $0xb4] sm:$0xf]
  %v69 = vld [vmem:[%s0 + $0xb8] sm:$0xf]
  %v70 = vld [vmem:[%s0 + $0xbc] sm:$0xf]
  %v71 = vld [vmem:[%s0 + $0xc0] sm:$0xf]
  %v72 = vld [vmem:[%s0 + $0xc4] sm:$0xf]
  %v73 = vld [vmem:[%s0 + $0xc8] sm:$0xf]
  %v74 = vld [vmem:[%s0 + $0xcc] sm:$0xf]
  %v75 = vld [vmem:[%s0 + $0xd0] sm:$0xf]
  %v76 = vld [vmem:[%s0 + $0xd4] sm:$0xf]
  %v77 = vld [vmem:[%s0 + $0xd8] sm:$0xf]
  %v78 = vld [vmem:[%s0 + $0xdc] sm:$0xf]
  %v79 = vld [vmem:[%s0 + $0xe0] sm:$0xf]
  %v80 = vld [vmem:[%s0 + $0xe4] sm:$0xf]
  %v81 = vld [vmem:[%s0 + $0xe8] sm:$0xf]
  %v82 = vld [vmem:[%s0 + $0xec] sm:$0xf]
  %v83 = vld [vmem:[%s0 + $0xf0] sm:$0xf]
  %v84 = vld [vmem:[%s0 + $0xf4] sm:$0xf]
  %v85 = vld [vmem:[%s0 + $0xf8] sm:$0xf]
  %v86 = vld [vmem:[%s0 + $0xfc] sm:$0xf]
  %v87 = vunpack.c.l.bf16 %v23
  %v88 = vunpack.c.l.bf16 %v24
  %v89 = vunpack.c.l.bf16 %v25
  %v90 = vunpack.c.l.bf16 %v26
  %v91 = vunpack.c.l.bf16 %v27
  %v92 = vunpack.c.l.bf16 %v28
  %v93 = vunpack.c.l.bf16 %v29
  %v94 = vunpack.c.l.bf16 %v30
  %v95 = vunpack.c.l.bf16 %v31
  %v96 = vunpack.c.l.bf16 %v32
  %v97 = vunpack.c.l.bf16 %v33
  %v98 = vunpack.c.l.bf16 %v34
  %v99 = vunpack.c.l.bf16 %v35
  %v100 = vunpack.c.l.bf16 %v36
  %v101 = vunpack.c.l.bf16 %v37
  %v102 = vunpack.c.l.bf16 %v38
  %v103 = vunpack.c.l.bf16 %v39
  %v104 = vunpack.c.l.bf16 %v40
  %v105 = vunpack.c.l.bf16 %v41
  %v106 = vunpack.c.l.bf16 %v42
  %v107 = vunpack.c.l.bf16 %v43
  %v108 = vunpack.c.l.bf16 %v44
  %v109 = vunpack.c.l.bf16 %v45
  %v110 = vunpack.c.l.bf16 %v46
  %v111 = vunpack.c.l.bf16 %v47
  %v112 = vunpack.c.l.bf16 %v48
  %v113 = vunpack.c.l.bf16 %v49
  %v114 = vunpack.c.l.bf16 %v50
  %v115 = vunpack.c.l.bf16 %v51
  %v116 = vunpack.c.l.bf16 %v52
  %v117 = vunpack.c.l.bf16 %v53
  %v118 = vunpack.c.l.bf16 %v54
  %v119 = vunpack.c.l.bf16 %v55
  %v120 = vunpack.c.l.bf16 %v56
  %v121 = vunpack.c.l.bf16 %v57
  %v122 = vunpack.c.l.bf16 %v58
  %v123 = vunpack.c.l.bf16 %v59
  %v124 = vunpack.c.l.bf16 %v60
  %v125 = vunpack.c.l.bf16 %v61
  %v126 = vunpack.c.l.bf16 %v62
  %v127 = vunpack.c.l.bf16 %v63
  %v128 = vunpack.c.l.bf16 %v64
  %v129 = vunpack.c.l.bf16 %v65
  %v130 = vunpack.c.l.bf16 %v66
  %v131 = vunpack.c.l.bf16 %v67
  %v132 = vunpack.c.l.bf16 %v68
  %v133 = vunpack.c.l.bf16 %v69
  %v134 = vunpack.c.l.bf16 %v70
  %v135 = vunpack.c.l.bf16 %v71
  %v136 = vunpack.c.l.bf16 %v72
  %v137 = vunpack.c.l.bf16 %v73
  %v138 = vunpack.c.l.bf16 %v74
  %v139 = vunpack.c.l.bf16 %v75
  %v140 = vunpack.c.l.bf16 %v76
  %v141 = vunpack.c.l.bf16 %v77
  %v142 = vunpack.c.l.bf16 %v78
  %v143 = vunpack.c.l.bf16 %v79
  %v144 = vunpack.c.l.bf16 %v80
  %v145 = vunpack.c.l.bf16 %v81
  %v146 = vunpack.c.l.bf16 %v82
  %v147 = vunpack.c.l.bf16 %v83
  %v148 = vunpack.c.l.bf16 %v84
  %v149 = vunpack.c.l.bf16 %v85
  %v150 = vunpack.c.l.bf16 %v86
  %v151 = vld [vmem:[%s1] sm:$0x1]
  %v153 = vperm.slane %v151, 0
  %v155 = vmul.f32 %v87, %v153
  %v156 = vmul.f32 %v88, %v153
  %v157 = vmul.f32 %v89, %v153
  %v158 = vmul.f32 %v90, %v153
  %v159 = vmul.f32 %v91, %v153
  %v160 = vmul.f32 %v92, %v153
  %v161 = vmul.f32 %v93, %v153
  %v162 = vmul.f32 %v94, %v153
  %v163 = vmul.f32 %v95, %v153
  %v164 = vmul.f32 %v96, %v153
  %v165 = vmul.f32 %v97, %v153
  %v166 = vmul.f32 %v98, %v153
  %v167 = vmul.f32 %v99, %v153
  %v168 = vmul.f32 %v100, %v153
  %v169 = vmul.f32 %v101, %v153
  %v170 = vmul.f32 %v102, %v153
  %v171 = vmul.f32 %v103, %v153
  %v172 = vmul.f32 %v104, %v153
  %v173 = vmul.f32 %v105, %v153
  %v174 = vmul.f32 %v106, %v153
  %v175 = vmul.f32 %v107, %v153
  %v176 = vmul.f32 %v108, %v153
  %v177 = vmul.f32 %v109, %v153
  %v178 = vmul.f32 %v110, %v153
  %v179 = vmul.f32 %v111, %v153
  %v180 = vmul.f32 %v112, %v153
  %v181 = vmul.f32 %v113, %v153
  %v182 = vmul.f32 %v114, %v153
  %v183 = vmul.f32 %v115, %v153
  %v184 = vmul.f32 %v116, %v153
  %v185 = vmul.f32 %v117, %v153
  %v186 = vmul.f32 %v118, %v153
  %v187 = vmul.f32 %v119, %v153
  %v188 = vmul.f32 %v120, %v153
  %v189 = vmul.f32 %v121, %v153
  %v190 = vmul.f32 %v122, %v153
  %v191 = vmul.f32 %v123, %v153
  %v192 = vmul.f32 %v124, %v153
  %v193 = vmul.f32 %v125, %v153
  %v194 = vmul.f32 %v126, %v153
  %v195 = vmul.f32 %v127, %v153
  %v196 = vmul.f32 %v128, %v153
  %v197 = vmul.f32 %v129, %v153
  %v198 = vmul.f32 %v130, %v153
  %v199 = vmul.f32 %v131, %v153
  %v200 = vmul.f32 %v132, %v153
  %v201 = vmul.f32 %v133, %v153
  %v202 = vmul.f32 %v134, %v153
  %v203 = vmul.f32 %v135, %v153
  %v204 = vmul.f32 %v136, %v153
  %v205 = vmul.f32 %v137, %v153
  %v206 = vmul.f32 %v138, %v153
  %v207 = vmul.f32 %v139, %v153
  %v208 = vmul.f32 %v140, %v153
  %v209 = vmul.f32 %v141, %v153
  %v210 = vmul.f32 %v142, %v153
  %v211 = vmul.f32 %v143, %v153
  %v212 = vmul.f32 %v144, %v153
  %v213 = vmul.f32 %v145, %v153
  %v214 = vmul.f32 %v146, %v153
  %v215 = vmul.f32 %v147, %v153
  %v216 = vmul.f32 %v148, %v153
  %v217 = vmul.f32 %v149, %v153
  %v218 = vmul.f32 %v150, %v153
  %v219 = vld [vmem:[%s2] sm:$0x1]
  %v221 = vperm.slane %v219, 0
  %v223 = vadd.f32 %v155, %v221
  %v224 = vadd.f32 %v156, %v221
  %v225 = vadd.f32 %v157, %v221
  %v226 = vadd.f32 %v158, %v221
  %v227 = vadd.f32 %v159, %v221
  %v228 = vadd.f32 %v160, %v221
  %v229 = vadd.f32 %v161, %v221
  %v230 = vadd.f32 %v162, %v221
  %v231 = vadd.f32 %v163, %v221
  %v232 = vadd.f32 %v164, %v221
  %v233 = vadd.f32 %v165, %v221
  %v234 = vadd.f32 %v166, %v221
  %v235 = vadd.f32 %v167, %v221
  %v236 = vadd.f32 %v168, %v221
  %v237 = vadd.f32 %v169, %v221
  %v238 = vadd.f32 %v170, %v221
  %v239 = vadd.f32 %v171, %v221
  %v240 = vadd.f32 %v172, %v221
  %v241 = vadd.f32 %v173, %v221
  %v242 = vadd.f32 %v174, %v221
  %v243 = vadd.f32 %v175, %v221
  %v244 = vadd.f32 %v176, %v221
  %v245 = vadd.f32 %v177, %v221
  %v246 = vadd.f32 %v178, %v221
  %v247 = vadd.f32 %v179, %v221
  %v248 = vadd.f32 %v180, %v221
  %v249 = vadd.f32 %v181, %v221
  %v250 = vadd.f32 %v182, %v221
  %v251 = vadd.f32 %v183, %v221
  %v252 = vadd.f32 %v184, %v221
  %v253 = vadd.f32 %v185, %v221
  %v254 = vadd.f32 %v186, %v221
  %v255 = vadd.f32 %v187, %v221
  %v256 = vadd.f32 %v188, %v221
  %v257 = vadd.f32 %v189, %v221
  %v258 = vadd.f32 %v190, %v221
  %v259 = vadd.f32 %v191, %v221
  %v260 = vadd.f32 %v192, %v221
  %v261 = vadd.f32 %v193, %v221
  %v262 = vadd.f32 %v194, %v221
  %v263 = vadd.f32 %v195, %v221
  %v264 = vadd.f32 %v196, %v221
  %v265 = vadd.f32 %v197, %v221
  %v266 = vadd.f32 %v198, %v221
  %v267 = vadd.f32 %v199, %v221
  %v268 = vadd.f32 %v200, %v221
  %v269 = vadd.f32 %v201, %v221
  %v270 = vadd.f32 %v202, %v221
  %v271 = vadd.f32 %v203, %v221
  %v272 = vadd.f32 %v204, %v221
  %v273 = vadd.f32 %v205, %v221
  %v274 = vadd.f32 %v206, %v221
  %v275 = vadd.f32 %v207, %v221
  %v276 = vadd.f32 %v208, %v221
  %v277 = vadd.f32 %v209, %v221
  %v278 = vadd.f32 %v210, %v221
  %v279 = vadd.f32 %v211, %v221
  %v280 = vadd.f32 %v212, %v221
  %v281 = vadd.f32 %v213, %v221
  %v282 = vadd.f32 %v214, %v221
  %v283 = vadd.f32 %v215, %v221
  %v284 = vadd.f32 %v216, %v221
  %v285 = vadd.f32 %v217, %v221
  %v286 = vadd.f32 %v218, %v221
  %v287 = vmax.f32 %v223, 0.0
  %v288 = vmax.f32 %v224, 0.0
  %v289 = vmax.f32 %v225, 0.0
  %v290 = vmax.f32 %v226, 0.0
  %v291 = vmax.f32 %v227, 0.0
  %v292 = vmax.f32 %v228, 0.0
  %v293 = vmax.f32 %v229, 0.0
  %v294 = vmax.f32 %v230, 0.0
  %v295 = vmax.f32 %v231, 0.0
  %v296 = vmax.f32 %v232, 0.0
  %v297 = vmax.f32 %v233, 0.0
  %v298 = vmax.f32 %v234, 0.0
  %v299 = vmax.f32 %v235, 0.0
  %v300 = vmax.f32 %v236, 0.0
  %v301 = vmax.f32 %v237, 0.0
  %v302 = vmax.f32 %v238, 0.0
  %v303 = vmax.f32 %v239, 0.0
  %v304 = vmax.f32 %v240, 0.0
  %v305 = vmax.f32 %v241, 0.0
  %v306 = vmax.f32 %v242, 0.0
  %v307 = vmax.f32 %v243, 0.0
  %v308 = vmax.f32 %v244, 0.0
  %v309 = vmax.f32 %v245, 0.0
  %v310 = vmax.f32 %v246, 0.0
  %v311 = vmax.f32 %v247, 0.0
  %v312 = vmax.f32 %v248, 0.0
  %v313 = vmax.f32 %v249, 0.0
  %v314 = vmax.f32 %v250, 0.0
  %v315 = vmax.f32 %v251, 0.0
  %v316 = vmax.f32 %v252, 0.0
  %v317 = vmax.f32 %v253, 0.0
  %v318 = vmax.f32 %v254, 0.0
  %v319 = vmax.f32 %v255, 0.0
  %v320 = vmax.f32 %v256, 0.0
  %v321 = vmax.f32 %v257, 0.0
  %v322 = vmax.f32 %v258, 0.0
  %v323 = vmax.f32 %v259, 0.0
  %v324 = vmax.f32 %v260, 0.0
  %v325 = vmax.f32 %v261, 0.0
  %v326 = vmax.f32 %v262, 0.0
  %v327 = vmax.f32 %v263, 0.0
  %v328 = vmax.f32 %v264, 0.0
  %v329 = vmax.f32 %v265, 0.0
  %v330 = vmax.f32 %v266, 0.0
  %v331 = vmax.f32 %v267, 0.0
  %v332 = vmax.f32 %v268, 0.0
  %v333 = vmax.f32 %v269, 0.0
  %v334 = vmax.f32 %v270, 0.0
  %v335 = vmax.f32 %v271, 0.0
  %v336 = vmax.f32 %v272, 0.0
  %v337 = vmax.f32 %v273, 0.0
  %v338 = vmax.f32 %v274, 0.0
  %v339 = vmax.f32 %v275, 0.0
  %v340 = vmax.f32 %v276, 0.0
  %v341 = vmax.f32 %v277, 0.0
  %v342 = vmax.f32 %v278, 0.0
  %v343 = vmax.f32 %v279, 0.0
  %v344 = vmax.f32 %v280, 0.0
  %v345 = vmax.f32 %v281, 0.0
  %v346 = vmax.f32 %v282, 0.0
  %v347 = vmax.f32 %v283, 0.0
  %v348 = vmax.f32 %v284, 0.0
  %v349 = vmax.f32 %v285, 0.0
  %v350 = vmax.f32 %v286, 0.0
  %v351 = vpack.c.bf16 %v288, %v287
  %v352 = vpack.c.bf16 %v290, %v289
  %v353 = vpack.c.bf16 %v292, %v291
  %v354 = vpack.c.bf16 %v294, %v293
  %v355 = vpack.c.bf16 %v296, %v295
  %v356 = vpack.c.bf16 %v298, %v297
  %v357 = vpack.c.bf16 %v300, %v299
  %v358 = vpack.c.bf16 %v302, %v301
  %v359 = vpack.c.bf16 %v304, %v303
  %v360 = vpack.c.bf16 %v306, %v305
  %v361 = vpack.c.bf16 %v308, %v307
  %v362 = vpack.c.bf16 %v310, %v309
  %v363 = vpack.c.bf16 %v312, %v311
  %v364 = vpack.c.bf16 %v314, %v313
  %v365 = vpack.c.bf16 %v316, %v315
  %v366 = vpack.c.bf16 %v318, %v317
  %v367 = vpack.c.bf16 %v320, %v319
  %v368 = vpack.c.bf16 %v322, %v321
  %v369 = vpack.c.bf16 %v324, %v323
  %v370 = vpack.c.bf16 %v326, %v325
  %v371 = vpack.c.bf16 %v328, %v327
  %v372 = vpack.c.bf16 %v330, %v329
  %v373 = vpack.c.bf16 %v332, %v331
  %v374 = vpack.c.bf16 %v334, %v333
  %v375 = vpack.c.bf16 %v336, %v335
  %v376 = vpack.c.bf16 %v338, %v337
  %v377 = vpack.c.bf16 %v340, %v339
  %v378 = vpack.c.bf16 %v342, %v341
  %v379 = vpack.c.bf16 %v344, %v343
  %v380 = vpack.c.bf16 %v346, %v345
  %v381 = vpack.c.bf16 %v348, %v347
  %v382 = vpack.c.bf16 %v350, %v349
  %v383 = vld [vmem:[%s3] sm:$0xf]
  %v384 = vld [vmem:[%s4] sm:$0x1]
  %v386 = vperm.slane %v384, 0
  %vm388 = vcmask 64512
  %v390 = vsel %vm388, %v351, 0
  %v393 = vsel %vm388, %v352, 0
  %v396 = vsel %vm388, %v353, 0
  %v399 = vsel %vm388, %v354, 0
  %v402 = vsel %vm388, %v355, 0
  %v405 = vsel %vm388, %v356, 0
  %v408 = vsel %vm388, %v357, 0
  %v411 = vsel %vm388, %v358, 0
  %v414 = vsel %vm388, %v359, 0
  %v417 = vsel %vm388, %v360, 0
  %v420 = vsel %vm388, %v361, 0
  %v423 = vsel %vm388, %v362, 0
  %v426 = vsel %vm388, %v363, 0
  %v429 = vsel %vm388, %v364, 0
  %v432 = vsel %vm388, %v365, 0
  %v435 = vsel %vm388, %v366, 0
  %v438 = vsel %vm388, %v367, 0
  %v441 = vsel %vm388, %v368, 0
  %v444 = vsel %vm388, %v369, 0
  %v447 = vsel %vm388, %v370, 0
  %v450 = vsel %vm388, %v371, 0
  %v453 = vsel %vm388, %v372, 0
  %v456 = vsel %vm388, %v373, 0
  %v459 = vsel %vm388, %v374, 0
  %v462 = vsel %vm388, %v375, 0
  %v465 = vsel %vm388, %v376, 0
  %v468 = vsel %vm388, %v377, 0
  %v471 = vsel %vm388, %v378, 0
  %v474 = vsel %vm388, %v379, 0
  %v477 = vsel %vm388, %v380, 0
  %v480 = vsel %vm388, %v381, 0
  %v483 = vsel %vm388, %v382, 0
  %vm485 = vcmask 1043456
  %v487 = vsel %vm485, %v383, 0
  %489 = vmatpush.bf16.msra.mxu0 0
  %490 = vmatpush.bf16.msra.mxu0 0
  %491 = vmatpush.bf16.msra.mxu0 0
  %492 = vmatpush.bf16.msra.mxu0 0
  %493 = vmatpush.bf16.msra.mxu0 0
  %494 = vmatpush.bf16.msra.mxu0 0
  %495 = vmatpush.bf16.msra.mxu0 0
  %496 = vmatpush.bf16.msra.mxu0 %v487
  %497 = vmatmul.bf16.gmra.mxu0 %v390
  %v498 = vpop.f32.mrf.mxu0
  %v499 = vadd.f32 %v386, %v498
  %v500 = vpop.f32.mrf.mxu0
  %v501 = vadd.f32 %v386, %v500
  %502 = vmatmul.bf16.gmra.mxu0 %v393
  %v503 = vpop.f32.mrf.mxu0
  %v504 = vadd.f32 %v386, %v503
  %v505 = vpop.f32.mrf.mxu0
  %v506 = vadd.f32 %v386, %v505
  %507 = vmatmul.bf16.gmra.mxu0 %v396
  %v508 = vpop.f32.mrf.mxu0
  %v509 = vadd.f32 %v386, %v508
  %v510 = vpop.f32.mrf.mxu0
  %v511 = vadd.f32 %v386, %v510
  %512 = vmatmul.bf16.gmra.mxu0 %v399
  %v513 = vpop.f32.mrf.mxu0
  %v514 = vadd.f32 %v386, %v513
  %v515 = vpop.f32.mrf.mxu0
  %v516 = vadd.f32 %v386, %v515
  %517 = vmatmul.bf16.gmra.mxu0 %v402
  %v518 = vpop.f32.mrf.mxu0
  %v519 = vadd.f32 %v386, %v518
  %v520 = vpop.f32.mrf.mxu0
  %v521 = vadd.f32 %v386, %v520
  %522 = vmatmul.bf16.gmra.mxu0 %v405
  %v523 = vpop.f32.mrf.mxu0
  %v524 = vadd.f32 %v386, %v523
  %v525 = vpop.f32.mrf.mxu0
  %v526 = vadd.f32 %v386, %v525
  %527 = vmatmul.bf16.gmra.mxu0 %v408
  %v528 = vpop.f32.mrf.mxu0
  %v529 = vadd.f32 %v386, %v528
  %v530 = vpop.f32.mrf.mxu0
  %v531 = vadd.f32 %v386, %v530
  %532 = vmatmul.bf16.gmra.mxu0 %v411
  %v533 = vpop.f32.mrf.mxu0
  %v534 = vadd.f32 %v386, %v533
  %v535 = vpop.f32.mrf.mxu0
  %v536 = vadd.f32 %v386, %v535
  %537 = vmatmul.bf16.gmra.mxu0 %v414
  %v538 = vpop.f32.mrf.mxu0
  %v539 = vadd.f32 %v386, %v538
  %v540 = vpop.f32.mrf.mxu0
  %v541 = vadd.f32 %v386, %v540
  %542 = vmatmul.bf16.gmra.mxu0 %v417
  %v543 = vpop.f32.mrf.mxu0
  %v544 = vadd.f32 %v386, %v543
  %v545 = vpop.f32.mrf.mxu0
  %v546 = vadd.f32 %v386, %v545
  %547 = vmatmul.bf16.gmra.mxu0 %v420
  %v548 = vpop.f32.mrf.mxu0
  %v549 = vadd.f32 %v386, %v548
  %v550 = vpop.f32.mrf.mxu0
  %v551 = vadd.f32 %v386, %v550
  %552 = vmatmul.bf16.gmra.mxu0 %v423
  %v553 = vpop.f32.mrf.mxu0
  %v554 = vadd.f32 %v386, %v553
  %v555 = vpop.f32.mrf.mxu0
  %v556 = vadd.f32 %v386, %v555
  %557 = vmatmul.bf16.gmra.mxu0 %v426
  %v558 = vpop.f32.mrf.mxu0
  %v559 = vadd.f32 %v386, %v558
  %v560 = vpop.f32.mrf.mxu0
  %v561 = vadd.f32 %v386, %v560
  %562 = vmatmul.bf16.gmra.mxu0 %v429
  %v563 = vpop.f32.mrf.mxu0
  %v564 = vadd.f32 %v386, %v563
  %v565 = vpop.f32.mrf.mxu0
  %v566 = vadd.f32 %v386, %v565
  %567 = vmatmul.bf16.gmra.mxu0 %v432
  %v568 = vpop.f32.mrf.mxu0
  %v569 = vadd.f32 %v386, %v568
  %v570 = vpop.f32.mrf.mxu0
  %v571 = vadd.f32 %v386, %v570
  %572 = vmatmul.bf16.gmra.mxu0 %v435
  %v573 = vpop.f32.mrf.mxu0
  %v574 = vadd.f32 %v386, %v573
  %v575 = vpop.f32.mrf.mxu0
  %v576 = vadd.f32 %v386, %v575
  %577 = vmatmul.bf16.gmra.mxu0 %v438
  %v578 = vpop.f32.mrf.mxu0
  %v579 = vadd.f32 %v386, %v578
  %v580 = vpop.f32.mrf.mxu0
  %v581 = vadd.f32 %v386, %v580
  %582 = vmatmul.bf16.gmra.mxu0 %v441
  %v583 = vpop.f32.mrf.mxu0
  %v584 = vadd.f32 %v386, %v583
  %v585 = vpop.f32.mrf.mxu0
  %v586 = vadd.f32 %v386, %v585
  %587 = vmatmul.bf16.gmra.mxu0 %v444
  %v588 = vpop.f32.mrf.mxu0
  %v589 = vadd.f32 %v386, %v588
  %v590 = vpop.f32.mrf.mxu0
  %v591 = vadd.f32 %v386, %v590
  %592 = vmatmul.bf16.gmra.mxu0 %v447
  %v593 = vpop.f32.mrf.mxu0
  %v594 = vadd.f32 %v386, %v593
  %v595 = vpop.f32.mrf.mxu0
  %v596 = vadd.f32 %v386, %v595
  %597 = vmatmul.bf16.gmra.mxu0 %v450
  %v598 = vpop.f32.mrf.mxu0
  %v599 = vadd.f32 %v386, %v598
  %v600 = vpop.f32.mrf.mxu0
  %v601 = vadd.f32 %v386, %v600
  %602 = vmatmul.bf16.gmra.mxu0 %v453
  %v603 = vpop.f32.mrf.mxu0
  %v604 = vadd.f32 %v386, %v603
  %v605 = vpop.f32.mrf.mxu0
  %v606 = vadd.f32 %v386, %v605
  %607 = vmatmul.bf16.gmra.mxu0 %v456
  %v608 = vpop.f32.mrf.mxu0
  %v609 = vadd.f32 %v386, %v608
  %v610 = vpop.f32.mrf.mxu0
  %v611 = vadd.f32 %v386, %v610
  %612 = vmatmul.bf16.gmra.mxu0 %v459
  %v613 = vpop.f32.mrf.mxu0
  %v614 = vadd.f32 %v386, %v613
  %v615 = vpop.f32.mrf.mxu0
  %v616 = vadd.f32 %v386, %v615
  %617 = vmatmul.bf16.gmra.mxu0 %v462
  %v618 = vpop.f32.mrf.mxu0
  %v619 = vadd.f32 %v386, %v618
  %v620 = vpop.f32.mrf.mxu0
  %v621 = vadd.f32 %v386, %v620
  %622 = vmatmul.bf16.gmra.mxu0 %v465
  %v623 = vpop.f32.mrf.mxu0
  %v624 = vadd.f32 %v386, %v623
  %v625 = vpop.f32.mrf.mxu0
  %v626 = vadd.f32 %v386, %v625
  %627 = vmatmul.bf16.gmra.mxu0 %v468
  %v628 = vpop.f32.mrf.mxu0
  %v629 = vadd.f32 %v386, %v628
  %v630 = vpop.f32.mrf.mxu0
  %v631 = vadd.f32 %v386, %v630
  %632 = vmatmul.bf16.gmra.mxu0 %v471
  %v633 = vpop.f32.mrf.mxu0
  %v634 = vadd.f32 %v386, %v633
  %v635 = vpop.f32.mrf.mxu0
  %v636 = vadd.f32 %v386, %v635
  %637 = vmatmul.bf16.gmra.mxu0 %v474
  %v638 = vpop.f32.mrf.mxu0
  %v639 = vadd.f32 %v386, %v638
  %v640 = vpop.f32.mrf.mxu0
  %v641 = vadd.f32 %v386, %v640
  %642 = vmatmul.bf16.gmra.mxu0 %v477
  %v643 = vpop.f32.mrf.mxu0
  %v644 = vadd.f32 %v386, %v643
  %v645 = vpop.f32.mrf.mxu0
  %v646 = vadd.f32 %v386, %v645
  %647 = vmatmul.bf16.gmra.mxu0 %v480
  %v648 = vpop.f32.mrf.mxu0
  %v649 = vadd.f32 %v386, %v648
  %v650 = vpop.f32.mrf.mxu0
  %v651 = vadd.f32 %v386, %v650
  %652 = vmatmul.bf16.gmra.mxu0 %v483
  %v653 = vpop.f32.mrf.mxu0
  %v654 = vadd.f32 %v386, %v653
  %v655 = vpop.f32.mrf.mxu0
  %v656 = vadd.f32 %v386, %v655
  %657 = vdwg.mxu0
  %v658 = vpack.c.bf16 %v499, %v499
  %v659 = vpack.c.bf16 %v501, %v501
  %v660 = vpack.c.bf16 %v504, %v504
  %v661 = vpack.c.bf16 %v506, %v506
  %v662 = vpack.c.bf16 %v509, %v509
  %v663 = vpack.c.bf16 %v511, %v511
  %v664 = vpack.c.bf16 %v514, %v514
  %v665 = vpack.c.bf16 %v516, %v516
  %v666 = vpack.c.bf16 %v519, %v519
  %v667 = vpack.c.bf16 %v521, %v521
  %v668 = vpack.c.bf16 %v524, %v524
  %v669 = vpack.c.bf16 %v526, %v526
  %v670 = vpack.c.bf16 %v529, %v529
  %v671 = vpack.c.bf16 %v531, %v531
  %v672 = vpack.c.bf16 %v534, %v534
  %v673 = vpack.c.bf16 %v536, %v536
  %v674 = vpack.c.bf16 %v539, %v539
  %v675 = vpack.c.bf16 %v541, %v541
  %v676 = vpack.c.bf16 %v544, %v544
  %v677 = vpack.c.bf16 %v546, %v546
  %v678 = vpack.c.bf16 %v549, %v549
  %v679 = vpack.c.bf16 %v551, %v551
  %v680 = vpack.c.bf16 %v554, %v554
  %v681 = vpack.c.bf16 %v556, %v556
  %v682 = vpack.c.bf16 %v559, %v559
  %v683 = vpack.c.bf16 %v561, %v561
  %v684 = vpack.c.bf16 %v564, %v564
  %v685 = vpack.c.bf16 %v566, %v566
  %v686 = vpack.c.bf16 %v569, %v569
  %v687 = vpack.c.bf16 %v571, %v571
  %v688 = vpack.c.bf16 %v574, %v574
  %v689 = vpack.c.bf16 %v576, %v576
  %v690 = vpack.c.bf16 %v579, %v579
  %v691 = vpack.c.bf16 %v581, %v581
  %v692 = vpack.c.bf16 %v584, %v584
  %v693 = vpack.c.bf16 %v586, %v586
  %v694 = vpack.c.bf16 %v589, %v589
  %v695 = vpack.c.bf16 %v591, %v591
  %v696 = vpack.c.bf16 %v594, %v594
  %v697 = vpack.c.bf16 %v596, %v596
  %v698 = vpack.c.bf16 %v599, %v599
  %v699 = vpack.c.bf16 %v601, %v601
  %v700 = vpack.c.bf16 %v604, %v604
  %v701 = vpack.c.bf16 %v606, %v606
  %v702 = vpack.c.bf16 %v609, %v609
  %v703 = vpack.c.bf16 %v611, %v611
  %v704 = vpack.c.bf16 %v614, %v614
  %v705 = vpack.c.bf16 %v616, %v616
  %v706 = vpack.c.bf16 %v619, %v619
  %v707 = vpack.c.bf16 %v621, %v621
  %v708 = vpack.c.bf16 %v624, %v624
  %v709 = vpack.c.bf16 %v626, %v626
  %v710 = vpack.c.bf16 %v629, %v629
  %v711 = vpack.c.bf16 %v631, %v631
  %v712 = vpack.c.bf16 %v634, %v634
  %v713 = vpack.c.bf16 %v636, %v636
  %v714 = vpack.c.bf16 %v639, %v639
  %v715 = vpack.c.bf16 %v641, %v641
  %v716 = vpack.c.bf16 %v644, %v644
  %v717 = vpack.c.bf16 %v646, %v646
  %v718 = vpack.c.bf16 %v649, %v649
  %v719 = vpack.c.bf16 %v651, %v651
  %v720 = vpack.c.bf16 %v654, %v654
  %v721 = vpack.c.bf16 %v656, %v656
  %vm722 = vcmask 257024
  %723 = vst.msk [vmem:[%s5] sm:$0xf] %vm722, %v658
  %724 = vst.msk [vmem:[%s5 + $0x4] sm:$0xf] %vm722, %v659
  %725 = vst.msk [vmem:[%s5 + $0x8] sm:$0xf] %vm722, %v660
  %726 = vst.msk [vmem:[%s5 + $0xc] sm:$0xf] %vm722, %v661
  %727 = vst.msk [vmem:[%s5 + $0x10] sm:$0xf] %vm722, %v662
  %728 = vst.msk [vmem:[%s5 + $0x14] sm:$0xf] %vm722, %v663
  %729 = vst.msk [vmem:[%s5 + $0x18] sm:$0xf] %vm722, %v664
  %730 = vst.msk [vmem:[%s5 + $0x1c] sm:$0xf] %vm722, %v665
  %731 = vst.msk [vmem:[%s5 + $0x20] sm:$0xf] %vm722, %v666
  %732 = vst.msk [vmem:[%s5 + $0x24] sm:$0xf] %vm722, %v667
  %733 = vst.msk [vmem:[%s5 + $0x28] sm:$0xf] %vm722, %v668
  %734 = vst.msk [vmem:[%s5 + $0x2c] sm:$0xf] %vm722, %v669
  %735 = vst.msk [vmem:[%s5 + $0x30] sm:$0xf] %vm722, %v670
  %736 = vst.msk [vmem:[%s5 + $0x34] sm:$0xf] %vm722, %v671
  %737 = vst.msk [vmem:[%s5 + $0x38] sm:$0xf] %vm722, %v672
  %738 = vst.msk [vmem:[%s5 + $0x3c] sm:$0xf] %vm722, %v673
  %739 = vst.msk [vmem:[%s5 + $0x40] sm:$0xf] %vm722, %v674
  %740 = vst.msk [vmem:[%s5 + $0x44] sm:$0xf] %vm722, %v675
  %741 = vst.msk [vmem:[%s5 + $0x48] sm:$0xf] %vm722, %v676
  %742 = vst.msk [vmem:[%s5 + $0x4c] sm:$0xf] %vm722, %v677
  %743 = vst.msk [vmem:[%s5 + $0x50] sm:$0xf] %vm722, %v678
  %744 = vst.msk [vmem:[%s5 + $0x54] sm:$0xf] %vm722, %v679
  %745 = vst.msk [vmem:[%s5 + $0x58] sm:$0xf] %vm722, %v680
  %746 = vst.msk [vmem:[%s5 + $0x5c] sm:$0xf] %vm722, %v681
  %747 = vst.msk [vmem:[%s5 + $0x60] sm:$0xf] %vm722, %v682
  %748 = vst.msk [vmem:[%s5 + $0x64] sm:$0xf] %vm722, %v683
  %749 = vst.msk [vmem:[%s5 + $0x68] sm:$0xf] %vm722, %v684
  %750 = vst.msk [vmem:[%s5 + $0x6c] sm:$0xf] %vm722, %v685
  %751 = vst.msk [vmem:[%s5 + $0x70] sm:$0xf] %vm722, %v686
  %752 = vst.msk [vmem:[%s5 + $0x74] sm:$0xf] %vm722, %v687
  %753 = vst.msk [vmem:[%s5 + $0x78] sm:$0xf] %vm722, %v688
  %754 = vst.msk [vmem:[%s5 + $0x7c] sm:$0xf] %vm722, %v689
  %755 = vst.msk [vmem:[%s5 + $0x80] sm:$0xf] %vm722, %v690
  %756 = vst.msk [vmem:[%s5 + $0x84] sm:$0xf] %vm722, %v691
  %757 = vst.msk [vmem:[%s5 + $0x88] sm:$0xf] %vm722, %v692
  %758 = vst.msk [vmem:[%s5 + $0x8c] sm:$0xf] %vm722, %v693
  %759 = vst.msk [vmem:[%s5 + $0x90] sm:$0xf] %vm722, %v694
  %760 = vst.msk [vmem:[%s5 + $0x94] sm:$0xf] %vm722, %v695
  %761 = vst.msk [vmem:[%s5 + $0x98] sm:$0xf] %vm722, %v696
  %762 = vst.msk [vmem:[%s5 + $0x9c] sm:$0xf] %vm722, %v697
  %763 = vst.msk [vmem:[%s5 + $0xa0] sm:$0xf] %vm722, %v698
  %764 = vst.msk [vmem:[%s5 + $0xa4] sm:$0xf] %vm722, %v699
  %765 = vst.msk [vmem:[%s5 + $0xa8] sm:$0xf] %vm722, %v700
  %766 = vst.msk [vmem:[%s5 + $0xac] sm:$0xf] %vm722, %v701
  %767 = vst.msk [vmem:[%s5 + $0xb0] sm:$0xf] %vm722, %v702
  %768 = vst.msk [vmem:[%s5 + $0xb4] sm:$0xf] %vm722, %v703
  %769 = vst.msk [vmem:[%s5 + $0xb8] sm:$0xf] %vm722, %v704
  %770 = vst.msk [vmem:[%s5 + $0xbc] sm:$0xf] %vm722, %v705
  %771 = vst.msk [vmem:[%s5 + $0xc0] sm:$0xf] %vm722, %v706
  %772 = vst.msk [vmem:[%s5 + $0xc4] sm:$0xf] %vm722, %v707
  %773 = vst.msk [vmem:[%s5 + $0xc8] sm:$0xf] %vm722, %v708
  %774 = vst.msk [vmem:[%s5 + $0xcc] sm:$0xf] %vm722, %v709
  %775 = vst.msk [vmem:[%s5 + $0xd0] sm:$0xf] %vm722, %v710
  %776 = vst.msk [vmem:[%s5 + $0xd4] sm:$0xf] %vm722, %v711
  %777 = vst.msk [vmem:[%s5 + $0xd8] sm:$0xf] %vm722, %v712
  %778 = vst.msk [vmem:[%s5 + $0xdc] sm:$0xf] %vm722, %v713
  %779 = vst.msk [vmem:[%s5 + $0xe0] sm:$0xf] %vm722, %v714
  %780 = vst.msk [vmem:[%s5 + $0xe4] sm:$0xf] %vm722, %v715
  %781 = vst.msk [vmem:[%s5 + $0xe8] sm:$0xf] %vm722, %v716
  %782 = vst.msk [vmem:[%s5 + $0xec] sm:$0xf] %vm722, %v717
  %783 = vst.msk [vmem:[%s5 + $0xf0] sm:$0xf] %vm722, %v718
  %784 = vst.msk [vmem:[%s5 + $0xf4] sm:$0xf] %vm722, %v719
  %785 = vst.msk [vmem:[%s5 + $0xf8] sm:$0xf] %vm722, %v720
  %786 = vst.msk [vmem:[%s5 + $0xfc] sm:$0xf] %vm722, %v721
  %vm787 = vcmask 261120
  %v788 = vsel %vm787, %v499, 0.0
  %v789 = vsel %vm787, %v501, 0.0
  %v790 = vadd.f32 %v788, %v789
  %v791 = vsel %vm787, %v504, 0.0
  %v792 = vadd.f32 %v790, %v791
  %v793 = vsel %vm787, %v506, 0.0
  %v794 = vadd.f32 %v792, %v793
  %v795 = vsel %vm787, %v509, 0.0
  %v796 = vadd.f32 %v794, %v795
  %v797 = vsel %vm787, %v511, 0.0
  %v798 = vadd.f32 %v796, %v797
  %v799 = vsel %vm787, %v514, 0.0
  %v800 = vadd.f32 %v798, %v799
  %v801 = vsel %vm787, %v516, 0.0
  %v802 = vadd.f32 %v800, %v801
  %v803 = vsel %vm787, %v519, 0.0
  %v804 = vadd.f32 %v802, %v803
  %v805 = vsel %vm787, %v521, 0.0
  %v806 = vadd.f32 %v804, %v805
  %v807 = vsel %vm787, %v524, 0.0
  %v808 = vadd.f32 %v806, %v807
  %v809 = vsel %vm787, %v526, 0.0
  %v810 = vadd.f32 %v808, %v809
  %v811 = vsel %vm787, %v529, 0.0
  %v812 = vadd.f32 %v810, %v811
  %v813 = vsel %vm787, %v531, 0.0
  %v814 = vadd.f32 %v812, %v813
  %v815 = vsel %vm787, %v534, 0.0
  %v816 = vadd.f32 %v814, %v815
  %v817 = vsel %vm787, %v536, 0.0
  %v818 = vadd.f32 %v816, %v817
  %v819 = vsel %vm787, %v539, 0.0
  %v820 = vadd.f32 %v818, %v819
  %v821 = vsel %vm787, %v541, 0.0
  %v822 = vadd.f32 %v820, %v821
  %v823 = vsel %vm787, %v544, 0.0
  %v824 = vadd.f32 %v822, %v823
  %v825 = vsel %vm787, %v546, 0.0
  %v826 = vadd.f32 %v824, %v825
  %v827 = vsel %vm787, %v549, 0.0
  %v828 = vadd.f32 %v826, %v827
  %v829 = vsel %vm787, %v551, 0.0
  %v830 = vadd.f32 %v828, %v829
  %v831 = vsel %vm787, %v554, 0.0
  %v832 = vadd.f32 %v830, %v831
  %v833 = vsel %vm787, %v556, 0.0
  %v834 = vadd.f32 %v832, %v833
  %v835 = vsel %vm787, %v559, 0.0
  %v836 = vadd.f32 %v834, %v835
  %v837 = vsel %vm787, %v561, 0.0
  %v838 = vadd.f32 %v836, %v837
  %v839 = vsel %vm787, %v564, 0.0
  %v840 = vadd.f32 %v838, %v839
  %v841 = vsel %vm787, %v566, 0.0
  %v842 = vadd.f32 %v840, %v841
  %v843 = vsel %vm787, %v569, 0.0
  %v844 = vadd.f32 %v842, %v843
  %v845 = vsel %vm787, %v571, 0.0
  %v846 = vadd.f32 %v844, %v845
  %v847 = vsel %vm787, %v574, 0.0
  %v848 = vadd.f32 %v846, %v847
  %v849 = vsel %vm787, %v576, 0.0
  %v850 = vadd.f32 %v848, %v849
  %v851 = vsel %vm787, %v579, 0.0
  %v852 = vadd.f32 %v850, %v851
  %v853 = vsel %vm787, %v581, 0.0
  %v854 = vadd.f32 %v852, %v853
  %v855 = vsel %vm787, %v584, 0.0
  %v856 = vadd.f32 %v854, %v855
  %v857 = vsel %vm787, %v586, 0.0
  %v858 = vadd.f32 %v856, %v857
  %v859 = vsel %vm787, %v589, 0.0
  %v860 = vadd.f32 %v858, %v859
  %v861 = vsel %vm787, %v591, 0.0
  %v862 = vadd.f32 %v860, %v861
  %v863 = vsel %vm787, %v594, 0.0
  %v864 = vadd.f32 %v862, %v863
  %v865 = vsel %vm787, %v596, 0.0
  %v866 = vadd.f32 %v864, %v865
  %v867 = vsel %vm787, %v599, 0.0
  %v868 = vadd.f32 %v866, %v867
  %v869 = vsel %vm787, %v601, 0.0
  %v870 = vadd.f32 %v868, %v869
  %v871 = vsel %vm787, %v604, 0.0
  %v872 = vadd.f32 %v870, %v871
  %v873 = vsel %vm787, %v606, 0.0
  %v874 = vadd.f32 %v872, %v873
  %v875 = vsel %vm787, %v609, 0.0
  %v876 = vadd.f32 %v874, %v875
  %v877 = vsel %vm787, %v611, 0.0
  %v878 = vadd.f32 %v876, %v877
  %v879 = vsel %vm787, %v614, 0.0
  %v880 = vadd.f32 %v878, %v879
  %v881 = vsel %vm787, %v616, 0.0
  %v882 = vadd.f32 %v880, %v881
  %v883 = vsel %vm787, %v619, 0.0
  %v884 = vadd.f32 %v882, %v883
  %v885 = vsel %vm787, %v621, 0.0
  %v886 = vadd.f32 %v884, %v885
  %v887 = vsel %vm787, %v624, 0.0
  %v888 = vadd.f32 %v886, %v887
  %v889 = vsel %vm787, %v626, 0.0
  %v890 = vadd.f32 %v888, %v889
  %v891 = vsel %vm787, %v629, 0.0
  %v892 = vadd.f32 %v890, %v891
  %v893 = vsel %vm787, %v631, 0.0
  %v894 = vadd.f32 %v892, %v893
  %v895 = vsel %vm787, %v634, 0.0
  %v896 = vadd.f32 %v894, %v895
  %v897 = vsel %vm787, %v636, 0.0
  %v898 = vadd.f32 %v896, %v897
  %v899 = vsel %vm787, %v639, 0.0
  %v900 = vadd.f32 %v898, %v899
  %v901 = vsel %vm787, %v641, 0.0
  %v902 = vadd.f32 %v900, %v901
  %v903 = vsel %vm787, %v644, 0.0
  %v904 = vadd.f32 %v902, %v903
  %v905 = vsel %vm787, %v646, 0.0
  %v906 = vadd.f32 %v904, %v905
  %v907 = vsel %vm787, %v649, 0.0
  %v908 = vadd.f32 %v906, %v907
  %v909 = vsel %vm787, %v651, 0.0
  %v910 = vadd.f32 %v908, %v909
  %v911 = vsel %vm787, %v654, 0.0
  %v912 = vadd.f32 %v910, %v911
  %v913 = vsel %vm787, %v656, 0.0
  %v914 = vadd.f32 %v912, %v913
  %v915 = vrot.slane %v914, 4
  %v916 = vadd.f32 %v914, %v915
  %v917 = vrot.slane %v916, 2
  %v918 = vadd.f32 %v916, %v917
  %v919 = vrot.slane %v918, 1
  %v920 = vadd.f32 %v918, %v919
  %vm921 = vcmask 253952
  %922 = vst.msk [vmem:[%s6] sm:$0x1] %vm921, %v920
  %v923 = vmul.f32 %v499, %v499
  %v924 = vmul.f32 %v501, %v501
  %v925 = vmul.f32 %v504, %v504
  %v926 = vmul.f32 %v506, %v506
  %v927 = vmul.f32 %v509, %v509
  %v928 = vmul.f32 %v511, %v511
  %v929 = vmul.f32 %v514, %v514
  %v930 = vmul.f32 %v516, %v516
  %v931 = vmul.f32 %v519, %v519
  %v932 = vmul.f32 %v521, %v521
  %v933 = vmul.f32 %v524, %v524
  %v934 = vmul.f32 %v526, %v526
  %v935 = vmul.f32 %v529, %v529
  %v936 = vmul.f32 %v531, %v531
  %v937 = vmul.f32 %v534, %v534
  %v938 = vmul.f32 %v536, %v536
  %v939 = vmul.f32 %v539, %v539
  %v940 = vmul.f32 %v541, %v541
  %v941 = vmul.f32 %v544, %v544
  %v942 = vmul.f32 %v546, %v546
  %v943 = vmul.f32 %v549, %v549
  %v944 = vmul.f32 %v551, %v551
  %v945 = vmul.f32 %v554, %v554
  %v946 = vmul.f32 %v556, %v556
  %v947 = vmul.f32 %v559, %v559
  %v948 = vmul.f32 %v561, %v561
  %v949 = vmul.f32 %v564, %v564
  %v950 = vmul.f32 %v566, %v566
  %v951 = vmul.f32 %v569, %v569
  %v952 = vmul.f32 %v571, %v571
  %v953 = vmul.f32 %v574, %v574
  %v954 = vmul.f32 %v576, %v576
  %v955 = vmul.f32 %v579, %v579
  %v956 = vmul.f32 %v581, %v581
  %v957 = vmul.f32 %v584, %v584
  %v958 = vmul.f32 %v586, %v586
  %v959 = vmul.f32 %v589, %v589
  %v960 = vmul.f32 %v591, %v591
  %v961 = vmul.f32 %v594, %v594
  %v962 = vmul.f32 %v596, %v596
  %v963 = vmul.f32 %v599, %v599
  %v964 = vmul.f32 %v601, %v601
  %v965 = vmul.f32 %v604, %v604
  %v966 = vmul.f32 %v606, %v606
  %v967 = vmul.f32 %v609, %v609
  %v968 = vmul.f32 %v611, %v611
  %v969 = vmul.f32 %v614, %v614
  %v970 = vmul.f32 %v616, %v616
  %v971 = vmul.f32 %v619, %v619
  %v972 = vmul.f32 %v621, %v621
  %v973 = vmul.f32 %v624, %v624
  %v974 = vmul.f32 %v626, %v626
  %v975 = vmul.f32 %v629, %v629
  %v976 = vmul.f32 %v631, %v631
  %v977 = vmul.f32 %v634, %v634
  %v978 = vmul.f32 %v636, %v636
  %v979 = vmul.f32 %v639, %v639
  %v980 = vmul.f32 %v641, %v641
  %v981 = vmul.f32 %v644, %v644
  %v982 = vmul.f32 %v646, %v646
  %v983 = vmul.f32 %v649, %v649
  %v984 = vmul.f32 %v651, %v651
  %v985 = vmul.f32 %v654, %v654
  %v986 = vmul.f32 %v656, %v656
  %v987 = vsel %vm787, %v923, 0.0
  %v988 = vsel %vm787, %v924, 0.0
  %v989 = vadd.f32 %v987, %v988
  %v990 = vsel %vm787, %v925, 0.0
  %v991 = vadd.f32 %v989, %v990
  %v992 = vsel %vm787, %v926, 0.0
  %v993 = vadd.f32 %v991, %v992
  %v994 = vsel %vm787, %v927, 0.0
  %v995 = vadd.f32 %v993, %v994
  %v996 = vsel %vm787, %v928, 0.0
  %v997 = vadd.f32 %v995, %v996
  %v998 = vsel %vm787, %v929, 0.0
  %v999 = vadd.f32 %v997, %v998
  %v1000 = vsel %vm787, %v930, 0.0
  %v1001 = vadd.f32 %v999, %v1000
  %v1002 = vsel %vm787, %v931, 0.0
  %v1003 = vadd.f32 %v1001, %v1002
  %v1004 = vsel %vm787, %v932, 0.0
  %v1005 = vadd.f32 %v1003, %v1004
  %v1006 = vsel %vm787, %v933, 0.0
  %v1007 = vadd.f32 %v1005, %v1006
  %v1008 = vsel %vm787, %v934, 0.0
  %v1009 = vadd.f32 %v1007, %v1008
  %v1010 = vsel %vm787, %v935, 0.0
  %v1011 = vadd.f32 %v1009, %v1010
  %v1012 = vsel %vm787, %v936, 0.0
  %v1013 = vadd.f32 %v1011, %v1012
  %v1014 = vsel %vm787, %v937, 0.0
  %v1015 = vadd.f32 %v1013, %v1014
  %v1016 = vsel %vm787, %v938, 0.0
  %v1017 = vadd.f32 %v1015, %v1016
  %v1018 = vsel %vm787, %v939, 0.0
  %v1019 = vadd.f32 %v1017, %v1018
  %v1020 = vsel %vm787, %v940, 0.0
  %v1021 = vadd.f32 %v1019, %v1020
  %v1022 = vsel %vm787, %v941, 0.0
  %v1023 = vadd.f32 %v1021, %v1022
  %v1024 = vsel %vm787, %v942, 0.0
  %v1025 = vadd.f32 %v1023, %v1024
  %v1026 = vsel %vm787, %v943, 0.0
  %v1027 = vadd.f32 %v1025, %v1026
  %v1028 = vsel %vm787, %v944, 0.0
  %v1029 = vadd.f32 %v1027, %v1028
  %v1030 = vsel %vm787, %v945, 0.0
  %v1031 = vadd.f32 %v1029, %v1030
  %v1032 = vsel %vm787, %v946, 0.0
  %v1033 = vadd.f32 %v1031, %v1032
  %v1034 = vsel %vm787, %v947, 0.0
  %v1035 = vadd.f32 %v1033, %v1034
  %v1036 = vsel %vm787, %v948, 0.0
  %v1037 = vadd.f32 %v1035, %v1036
  %v1038 = vsel %vm787, %v949, 0.0
  %v1039 = vadd.f32 %v1037, %v1038
  %v1040 = vsel %vm787, %v950, 0.0
  %v1041 = vadd.f32 %v1039, %v1040
  %v1042 = vsel %vm787, %v951, 0.0
  %v1043 = vadd.f32 %v1041, %v1042
  %v1044 = vsel %vm787, %v952, 0.0
  %v1045 = vadd.f32 %v1043, %v1044
  %v1046 = vsel %vm787, %v953, 0.0
  %v1047 = vadd.f32 %v1045, %v1046
  %v1048 = vsel %vm787, %v954, 0.0
  %v1049 = vadd.f32 %v1047, %v1048
  %v1050 = vsel %vm787, %v955, 0.0
  %v1051 = vadd.f32 %v1049, %v1050
  %v1052 = vsel %vm787, %v956, 0.0
  %v1053 = vadd.f32 %v1051, %v1052
  %v1054 = vsel %vm787, %v957, 0.0
  %v1055 = vadd.f32 %v1053, %v1054
  %v1056 = vsel %vm787, %v958, 0.0
  %v1057 = vadd.f32 %v1055, %v1056
  %v1058 = vsel %vm787, %v959, 0.0
  %v1059 = vadd.f32 %v1057, %v1058
  %v1060 = vsel %vm787, %v960, 0.0
  %v1061 = vadd.f32 %v1059, %v1060
  %v1062 = vsel %vm787, %v961, 0.0
  %v1063 = vadd.f32 %v1061, %v1062
  %v1064 = vsel %vm787, %v962, 0.0
  %v1065 = vadd.f32 %v1063, %v1064
  %v1066 = vsel %vm787, %v963, 0.0
  %v1067 = vadd.f32 %v1065, %v1066
  %v1068 = vsel %vm787, %v964, 0.0
  %v1069 = vadd.f32 %v1067, %v1068
  %v1070 = vsel %vm787, %v965, 0.0
  %v1071 = vadd.f32 %v1069, %v1070
  %v1072 = vsel %vm787, %v966, 0.0
  %v1073 = vadd.f32 %v1071, %v1072
  %v1074 = vsel %vm787, %v967, 0.0
  %v1075 = vadd.f32 %v1073, %v1074
  %v1076 = vsel %vm787, %v968, 0.0
  %v1077 = vadd.f32 %v1075, %v1076
  %v1078 = vsel %vm787, %v969, 0.0
  %v1079 = vadd.f32 %v1077, %v1078
  %v1080 = vsel %vm787, %v970, 0.0
  %v1081 = vadd.f32 %v1079, %v1080
  %v1082 = vsel %vm787, %v971, 0.0
  %v1083 = vadd.f32 %v1081, %v1082
  %v1084 = vsel %vm787, %v972, 0.0
  %v1085 = vadd.f32 %v1083, %v1084
  %v1086 = vsel %vm787, %v973, 0.0
  %v1087 = vadd.f32 %v1085, %v1086
  %v1088 = vsel %vm787, %v974, 0.0
  %v1089 = vadd.f32 %v1087, %v1088
  %v1090 = vsel %vm787, %v975, 0.0
  %v1091 = vadd.f32 %v1089, %v1090
  %v1092 = vsel %vm787, %v976, 0.0
  %v1093 = vadd.f32 %v1091, %v1092
  %v1094 = vsel %vm787, %v977, 0.0
  %v1095 = vadd.f32 %v1093, %v1094
  %v1096 = vsel %vm787, %v978, 0.0
  %v1097 = vadd.f32 %v1095, %v1096
  %v1098 = vsel %vm787, %v979, 0.0
  %v1099 = vadd.f32 %v1097, %v1098
  %v1100 = vsel %vm787, %v980, 0.0
  %v1101 = vadd.f32 %v1099, %v1100
  %v1102 = vsel %vm787, %v981, 0.0
  %v1103 = vadd.f32 %v1101, %v1102
  %v1104 = vsel %vm787, %v982, 0.0
  %v1105 = vadd.f32 %v1103, %v1104
  %v1106 = vsel %vm787, %v983, 0.0
  %v1107 = vadd.f32 %v1105, %v1106
  %v1108 = vsel %vm787, %v984, 0.0
  %v1109 = vadd.f32 %v1107, %v1108
  %v1110 = vsel %vm787, %v985, 0.0
  %v1111 = vadd.f32 %v1109, %v1110
  %v1112 = vsel %vm787, %v986, 0.0
  %v1113 = vadd.f32 %v1111, %v1112
  %v1114 = vrot.slane %v1113, 4
  %v1115 = vadd.f32 %v1113, %v1114
  %v1116 = vrot.slane %v1115, 2
  %v1117 = vadd.f32 %v1115, %v1116
  %v1118 = vrot.slane %v1117, 1
  %v1119 = vadd.f32 %v1117, %v1118
  %1120 = vst.msk [vmem:[%s6 + $0x1] sm:$0x1] %vm921, %v1119
  // Predicated region
  $region22: #{masked_bottleneck_block.4} parent=0 // pred_check
    _
  $region23: #{masked_bottleneck_block.4} parent=0 // pred_check_branch
    %1122 = sbr.rel (0) target = $region25
  $region24: #{masked_bottleneck_block.4} parent=0 // pred_region
    _
  $region25: #{masked_bottleneck_block.4} parent=0 // pred_fallthru
    _
  // Predicated region
  $region26: #{masked_bottleneck_block.4} parent=0 // pred_check
    _
  $region27: #{masked_bottleneck_block.4} parent=0 // pred_check_branch
    %1124 = sbr.rel (0) target = $region29
  $region28: #{masked_bottleneck_block.4} parent=0 // pred_region
    _
  $region29: #{masked_bottleneck_block.4} parent=0 // pred_fallthru
    _
  // Predicated region
  $region30: #{masked_bottleneck_block.4} parent=0 // pred_check
    _
  $region31: #{masked_bottleneck_block.4} parent=0 // pred_check_branch
    %1126 = sbr.rel (0) target = $region33
  $region32: #{masked_bottleneck_block.4} parent=0 // pred_region
    _
  $region33: #{masked_bottleneck_block.4} parent=0 // pred_fallthru
    _
  // Predicated region
  $region34: #{masked_bottleneck_block.4} parent=0 // pred_check
    _
  $region35: #{masked_bottleneck_block.4} parent=0 // pred_check_branch
    %1128 = sbr.rel (0) target = $region37
  $region36: #{masked_bottleneck_block.4} parent=0 // pred_region
    _
  $region37: #{masked_bottleneck_block.4} parent=0 // pred_fallthru
    _

// kernel: masked_bottleneck_block.5
$region0: #{masked_bottleneck_block.5}
  #allocation0 [shape = 'u32[]', space=smem, size = 0x4, offset = 0x4, fixed_abs, tag = 'smem constant byte address 0x4 - core index']
  #allocation1 [shape = 'u32[72,128]{1,0:T(1,128)}', space=vmem, size = 0x9000, scoped, tag = 'internal scratch']
  %s0 = inlined_call_operand.vmem [shape: bf16[2,16,16,32], index: 0, kind: input, shape index: {}]
  %s1 = inlined_call_operand.vmem [shape: f32[1,32], index: 1, kind: input, shape index: {}]
  %s2 = inlined_call_operand.vmem [shape: f32[1,32], index: 2, kind: input, shape index: {}]
  %s3 = inlined_call_operand.vmem [shape: bf16[288,8], index: 3, kind: input, shape index: {}]
  %s4 = inlined_call_operand.vmem [shape: f32[1,8], index: 4, kind: input, shape index: {}]
  %s5 = inlined_call_operand.vmem [shape: f32[2,256,8], index: 5, kind: output, shape index: {}]
  %s6 = sld [smem:[#allocation0]]
  $region53: #{masked_bottleneck_block.5} parent=0
    _
  %s8 = ssub.s32 1, %s6
  %s9 = scalar_select 0, %s8, %s6
  loop: start=0, step=1, limit=4
  $region2: #{masked_bottleneck_block.5} parent=0 // loop_pre_header
    _
  $region3: #{masked_bottleneck_block.5} parent=0 // loop_header
    %s11 = sphi 0, %s15
    %p12 = scmp.ge.s32.totalorder %s11, 4
    %s21 = sphi 0, %s23
    %s24 = sphi 0, %s21
    %s25 = sphi 0, %s24
    %s41 = sphi 0, %s25
    %s45 = sphi 0, %s45
    %s47 = sphi 0, %s45
    %s48 = sphi 0, %s47
    %s62 = sphi 0, %s48
    %s66 = sphi 0, %s66
    %s68 = sphi 0, %s66
    %s69 = sphi 0, %s68
    %s83 = sphi 0, %s69
    %s87 = sphi 0, %s87
    %s89 = sphi 0, %s87
    %s90 = sphi 0, %s89
    %s104 = sphi 0, %s90
    %s108 = sphi 0, %s108
    %s110 = sphi 0, %s108
    %s111 = sphi 0, %s110
    %s125 = sphi 0, %s111
    %s131 = sphi 0, %s133
    %s134 = sphi 0, %s131
    %s135 = sphi 0, %s134
    %s151 = sphi 0, %s135
  $region4: #{masked_bottleneck_block.5} parent=0 // loop_header_branch
    %14 = sbr.rel (%p12) target = $region8
  $region5: #{masked_bottleneck_block.5} parent=0 // loop_body
    %s16 = ssub.s32 %s11, 1
    %s17 = ssub.s32 %s11, 2
    %s18 = sadd.s32 %s11, 1
    %s19 = ssub.s32 %s11, %s18
    %p20 = scmp.eq.s32.totalorder %s19, 0
    %s22 = sadd.s32 %s21, 1
    %s23 = scalar_select %p20, %s21, %s22
    %p26 = pneg %p20
    %p27 = scmp.eq.s32.totalorder %s11, 1
    %p28 = por %p26, %p27
    %p29 = scmp.ne.s32.totalorder %s21, %s24
    %p30 = scmp.eq.s32.totalorder %s11, 0
    %p31 = por %p29, %p30
    %p32 = scmp.ne.s32.totalorder %s21, %s24
    %p33 = scmp.eq.s32.totalorder %s16, 1
    %p34 = por %p32, %p33
    %p35 = scmp.ne.s32.totalorder %s24, %s25
    %p36 = scmp.eq.s32.totalorder %s16, 0
    %p37 = por %p35, %p36
    %p38 = scmp.ne.s32.totalorder %s24, %s25
    %p39 = scmp.eq.s32.totalorder %s17, 1
    %p40 = por %p38, %p39
    %p42 = scmp.ne.s32.totalorder %s25, %s41
    %p43 = scmp.eq.s32.totalorder %s17, 0
    %p44 = por %p42, %p43
    %s46 = sadd.s32 %s45, 1
    %p49 = scmp.eq.s32.totalorder %s11, 1
    %p50 = scmp.ne.s32.totalorder %s45, %s47
    %p51 = scmp.eq.s32.totalorder %s11, 0
    %p52 = por %p50, %p51
    %p53 = scmp.ne.s32.totalorder %s45, %s47
    %p54 = scmp.eq.s32.totalorder %s16, 1
    %p55 = por %p53, %p54
    %p56 = scmp.ne.s32.totalorder %s47, %s48
    %p57 = scmp.eq.s32.totalorder %s16, 0
    %p58 = por %p56, %p57
    %p59 = scmp.ne.s32.totalorder %s47, %s48
    %p60 = scmp.eq.s32.totalorder %s17, 1
    %p61 = por %p59, %p60
    %p63 = scmp.ne.s32.totalorder %s48, %s62
    %p64 = scmp.eq.s32.totalorder %s17, 0
    %p65 = por %p63, %p64
    %s67 = sadd.s32 %s66, 1
    %p70 = scmp.eq.s32.totalorder %s11, 1
    %p71 = scmp.ne.s32.totalorder %s66, %s68
    %p72 = scmp.eq.s32.totalorder %s11, 0
    %p73 = por %p71, %p72
    %p74 = scmp.ne.s32.totalorder %s66, %s68
    %p75 = scmp.eq.s32.totalorder %s16, 1
    %p76 = por %p74, %p75
    %p77 = scmp.ne.s32.totalorder %s68, %s69
    %p78 = scmp.eq.s32.totalorder %s16, 0
    %p79 = por %p77, %p78
    %p80 = scmp.ne.s32.totalorder %s68, %s69
    %p81 = scmp.eq.s32.totalorder %s17, 1
    %p82 = por %p80, %p81
    %p84 = scmp.ne.s32.totalorder %s69, %s83
    %p85 = scmp.eq.s32.totalorder %s17, 0
    %p86 = por %p84, %p85
    %s88 = sadd.s32 %s87, 1
    %p91 = scmp.eq.s32.totalorder %s11, 1
    %p92 = scmp.ne.s32.totalorder %s87, %s89
    %p93 = scmp.eq.s32.totalorder %s11, 0
    %p94 = por %p92, %p93
    %p95 = scmp.ne.s32.totalorder %s87, %s89
    %p96 = scmp.eq.s32.totalorder %s16, 1
    %p97 = por %p95, %p96
    %p98 = scmp.ne.s32.totalorder %s89, %s90
    %p99 = scmp.eq.s32.totalorder %s16, 0
    %p100 = por %p98, %p99
    %p101 = scmp.ne.s32.totalorder %s89, %s90
    %p102 = scmp.eq.s32.totalorder %s17, 1
    %p103 = por %p101, %p102
    %p105 = scmp.ne.s32.totalorder %s90, %s104
    %p106 = scmp.eq.s32.totalorder %s17, 0
    %p107 = por %p105, %p106
    %s109 = sadd.s32 %s108, 1
    %p112 = scmp.eq.s32.totalorder %s11, 1
    %p113 = scmp.ne.s32.totalorder %s108, %s110
    %p114 = scmp.eq.s32.totalorder %s11, 0
    %p115 = por %p113, %p114
    %p116 = scmp.ne.s32.totalorder %s108, %s110
    %p117 = scmp.eq.s32.totalorder %s16, 1
    %p118 = por %p116, %p117
    %p119 = scmp.ne.s32.totalorder %s110, %s111
    %p120 = scmp.eq.s32.totalorder %s16, 0
    %p121 = por %p119, %p120
    %p122 = scmp.ne.s32.totalorder %s110, %s111
    %p123 = scmp.eq.s32.totalorder %s17, 1
    %p124 = por %p122, %p123
    %p126 = scmp.ne.s32.totalorder %s111, %s125
    %p127 = scmp.eq.s32.totalorder %s17, 0
    %p128 = por %p126, %p127
    %s129 = ssub.s32 %s11, %s18
    %p130 = scmp.eq.s32.totalorder %s129, 0
    %s132 = sadd.s32 %s131, 1
    %s133 = scalar_select %p130, %s131, %s132
    %p136 = pneg %p130
    %p137 = scmp.eq.s32.totalorder %s11, 1
    %p138 = por %p136, %p137
    %p139 = scmp.ne.s32.totalorder %s131, %s134
    %p140 = scmp.eq.s32.totalorder %s11, 0
    %p141 = por %p139, %p140
    %p142 = scmp.ne.s32.totalorder %s131, %s134
    %p143 = scmp.eq.s32.totalorder %s16, 1
    %p144 = por %p142, %p143
    %p145 = scmp.ne.s32.totalorder %s134, %s135
    %p146 = scmp.eq.s32.totalorder %s16, 0
    %p147 = por %p145, %p146
    %p148 = scmp.ne.s32.totalorder %s134, %s135
    %p149 = scmp.eq.s32.totalorder %s17, 1
    %p150 = por %p148, %p149
    %p152 = scmp.ne.s32.totalorder %s135, %s151
    %p153 = scmp.eq.s32.totalorder %s17, 0
    %p154 = por %p152, %p153
    %p155 = scmp.le.s32.totalorder 1, %s11
    %p156 = scmp.lt.s32.totalorder %s11, 3
    %p157 = pnand %p155, %p156
    %p158 = pneg %p157
    // Predicated region
    $region9: #{masked_bottleneck_block.5} parent=5 // pred_check
      _
    $region10: #{masked_bottleneck_block.5} parent=5 // pred_check_branch
      %160 = sbr.rel (%p157) target = $region12
    $region11: #{masked_bottleneck_block.5} parent=5 // pred_region
      %s161 = ssub.s32 %s11, 1
      // Predicated region
      $region13: #{masked_bottleneck_block.5} parent=11 // pred_check
        %p162 = pneg %p58
      $region14: #{masked_bottleneck_block.5} parent=11 // pred_check_branch
        %164 = sbr.rel (%p162) target = $region16
      $region15: #{masked_bottleneck_block.5} parent=11 // pred_region
        _
      $region16: #{masked_bottleneck_block.5} parent=11 // pred_fallthru
        _
      // Predicated region
      $region17: #{masked_bottleneck_block.5} parent=11 // pred_check
        %p165 = pneg %p79
      $region18: #{masked_bottleneck_block.5} parent=11 // pred_check_branch
        %167 = sbr.rel (%p165) target = $region20
      $region19: #{masked_bottleneck_block.5} parent=11 // pred_region
        _
      $region20: #{masked_bottleneck_block.5} parent=11 // pred_fallthru
        _
      // Predicated region
      $region21: #{masked_bottleneck_block.5} parent=11 // pred_check
        %p168 = pneg %p100
      $region22: #{masked_bottleneck_block.5} parent=11 // pred_check_branch
        %170 = sbr.rel (%p168) target = $region24
      $region23: #{masked_bottleneck_block.5} parent=11 // pred_region
        _
      $region24: #{masked_bottleneck_block.5} parent=11 // pred_fallthru
        _
      // Predicated region
      $region25: #{masked_bottleneck_block.5} parent=11 // pred_check
        %p171 = pneg %p121
      $region26: #{masked_bottleneck_block.5} parent=11 // pred_check_branch
        %173 = sbr.rel (%p171) target = $region28
      $region27: #{masked_bottleneck_block.5} parent=11 // pred_region
        _
      $region28: #{masked_bottleneck_block.5} parent=11 // pred_fallthru
        _
    $region12: #{masked_bottleneck_block.5} parent=5 // pred_fallthru
      _
    %p174 = scmp.lt.s32.totalorder %s11, 2
    // Predicated region
    $region29: #{masked_bottleneck_block.5} parent=5 // pred_check
      %p175 = pneg %p174
    $region30: #{masked_bottleneck_block.5} parent=5 // pred_check_branch
      %177 = sbr.rel (%p175) target = $region32
    $region31: #{masked_bottleneck_block.5} parent=5 // pred_region
      // Predicated region
      $region33: #{masked_bottleneck_block.5} parent=31 // pred_check
        %p178 = pneg %p31
      $region34: #{masked_bottleneck_block.5} parent=31 // pred_check_branch
        %180 = sbr.rel (%p178) target = $region36
      $region35: #{masked_bottleneck_block.5} parent=31 // pred_region
        %p181 = scmp.lt.s32.totalorder %s11, 1
        %s182 = scalar_select %p181, %s11, 1
        %s183 = smul.addr %s182, 32
        %s184 = smul.addr %s183, 4
        %s185 = scalar_lea.vmem %s0, %s184
      $region36: #{masked_bottleneck_block.5} parent=31 // pred_fallthru
        _
    $region32: #{masked_bottleneck_block.5} parent=5 // pred_fallthru
      _
    %p186 = scmp.le.s32.totalorder 1, %s11
    %p187 = scmp.lt.s32.totalorder %s11, 3
    %p188 = pnand %p186, %p187
    %p189 = pneg %p188
    // Predicated region
    $region37: #{masked_bottleneck_block.5} parent=5 // pred_check
      _
    $region38: #{masked_bottleneck_block.5} parent=5 // pred_check_branch
      %191 = sbr.rel (%p188) target = $region40
    $region39: #{masked_bottleneck_block.5} parent=5 // pred_region
      %s192 = ssub.s32 %s11, 1
      %p193 = scmp.lt.s32.totalorder %s16, 1
      %s194 = scalar_select %p193, %s16, 1
      %s195 = smul.addr %s194, 32
      %s196 = smul.addr %s195, 4
      %s197 = scalar_lea.vmem %s0, %s196
      %p198 = pneg %p37
      %p199 = pneg %p34
      %p200 = pneg %p58
      %p201 = pneg %p55
      %p202 = pneg %p79
      %p203 = pneg %p76
      %p204 = pneg %p100
      %p205 = pneg %p97
      %p206 = pneg %p121
      %p207 = pneg %p118
      %p208 = pneg %p147
      %p209 = pneg %p144
      %p210 = scmp.lt.s32.totalorder %s16, 1
      %s211 = scalar_select %p210, %s16, 1
      %s212 = smul.addr %s211, 32
      %s213 = smul.addr %s212, 8
      %s214 = scalar_lea.vmem %s5, %s213
      %p215 = scmp.lt.s32.totalorder %s16, 1
      %s216 = scalar_select %p215, %s16, 1
      %s217 = smul.addr %s216, 32
      %s218 = smul.addr %s217, 4
      %s219 = scalar_lea.vmem %s0, %s218
      %p220 = scmp.lt.s32.totalorder %s16, 1
      %s221 = scalar_select %p220, %s16, 1
      %s222 = smul.addr %s221, 32
      %s223 = smul.addr %s222, 8
      %s224 = scalar_lea.vmem %s5, %s223
      %v228 = vld [vmem:[%s219] sm:$0xf]
      %v229 = vld [vmem:[%s219 + $0x4] sm:$0xf]
      %v230 = vld [vmem:[%s219 + $0x8] sm:$0xf]
      %v231 = vld [vmem:[%s219 + $0xc] sm:$0xf]
      %v232 = vld [vmem:[%s219 + $0x10] sm:$0xf]
      %v233 = vld [vmem:[%s219 + $0x14] sm:$0xf]
      %v234 = vld [vmem:[%s219 + $0x18] sm:$0xf]
      %v235 = vld [vmem:[%s219 + $0x1c] sm:$0xf]
      %v236 = vld [vmem:[%s219 + $0x20] sm:$0xf]
      %v237 = vld [vmem:[%s219 + $0x24] sm:$0xf]
      %v238 = vld [vmem:[%s219 + $0x28] sm:$0xf]
      %v239 = vld [vmem:[%s219 + $0x2c] sm:$0xf]
      %v240 = vld [vmem:[%s219 + $0x30] sm:$0xf]
      %v241 = vld [vmem:[%s219 + $0x34] sm:$0xf]
      %v242 = vld [vmem:[%s219 + $0x38] sm:$0xf]
      %v243 = vld [vmem:[%s219 + $0x3c] sm:$0xf]
      %v244 = vld [vmem:[%s219 + $0x40] sm:$0xf]
      %v245 = vld [vmem:[%s219 + $0x44] sm:$0xf]
      %v246 = vld [vmem:[%s219 + $0x48] sm:$0xf]
      %v247 = vld [vmem:[%s219 + $0x4c] sm:$0xf]
      %v248 = vld [vmem:[%s219 + $0x50] sm:$0xf]
      %v249 = vld [vmem:[%s219 + $0x54] sm:$0xf]
      %v250 = vld [vmem:[%s219 + $0x58] sm:$0xf]
      %v251 = vld [vmem:[%s219 + $0x5c] sm:$0xf]
      %v252 = vld [vmem:[%s219 + $0x60] sm:$0xf]
      %v253 = vld [vmem:[%s219 + $0x64] sm:$0xf]
      %v254 = vld [vmem:[%s219 + $0x68] sm:$0xf]
      %v255 = vld [vmem:[%s219 + $0x6c] sm:$0xf]
      %v256 = vld [vmem:[%s219 + $0x70] sm:$0xf]
      %v257 = vld [vmem:[%s219 + $0x74] sm:$0xf]
      %v258 = vld [vmem:[%s219 + $0x78] sm:$0xf]
      %v259 = vld [vmem:[%s219 + $0x7c] sm:$0xf]
      %v260 = vunpack.c.l.bf16 %v228
      %v261 = vunpack.c.l.bf16 %v229
      %v262 = vunpack.c.l.bf16 %v230
      %v263 = vunpack.c.l.bf16 %v231
      %v264 = vunpack.c.l.bf16 %v232
      %v265 = vunpack.c.l.bf16 %v233
      %v266 = vunpack.c.l.bf16 %v234
      %v267 = vunpack.c.l.bf16 %v235
      %v268 = vunpack.c.l.bf16 %v236
      %v269 = vunpack.c.l.bf16 %v237
      %v270 = vunpack.c.l.bf16 %v238
      %v271 = vunpack.c.l.bf16 %v239
      %v272 = vunpack.c.l.bf16 %v240
      %v273 = vunpack.c.l.bf16 %v241
      %v274 = vunpack.c.l.bf16 %v242
      %v275 = vunpack.c.l.bf16 %v243
      %v276 = vunpack.c.l.bf16 %v244
      %v277 = vunpack.c.l.bf16 %v245
      %v278 = vunpack.c.l.bf16 %v246
      %v279 = vunpack.c.l.bf16 %v247
      %v280 = vunpack.c.l.bf16 %v248
      %v281 = vunpack.c.l.bf16 %v249
      %v282 = vunpack.c.l.bf16 %v250
      %v283 = vunpack.c.l.bf16 %v251
      %v284 = vunpack.c.l.bf16 %v252
      %v285 = vunpack.c.l.bf16 %v253
      %v286 = vunpack.c.l.bf16 %v254
      %v287 = vunpack.c.l.bf16 %v255
      %v288 = vunpack.c.l.bf16 %v256
      %v289 = vunpack.c.l.bf16 %v257
      %v290 = vunpack.c.l.bf16 %v258
      %v291 = vunpack.c.l.bf16 %v259
      %v292 = vld [vmem:[%s1] sm:$0x1]
      %v294 = vperm.slane %v292, 0
      %v296 = vmul.f32 %v260, %v294
      %v297 = vmul.f32 %v261, %v294
      %v298 = vmul.f32 %v262, %v294
      %v299 = vmul.f32 %v263, %v294
      %v300 = vmul.f32 %v264, %v294
      %v301 = vmul.f32 %v265, %v294
      %v302 = vmul.f32 %v266, %v294
      %v303 = vmul.f32 %v267, %v294
      %v304 = vmul.f32 %v268, %v294
      %v305 = vmul.f32 %v269, %v294
      %v306 = vmul.f32 %v270, %v294
      %v307 = vmul.f32 %v271, %v294
      %v308 = vmul.f32 %v272, %v294
      %v309 = vmul.f32 %v273, %v294
      %v310 = vmul.f32 %v274, %v294
      %v311 = vmul.f32 %v275, %v294
      %v312 = vmul.f32 %v276, %v294
      %v313 = vmul.f32 %v277, %v294
      %v314 = vmul.f32 %v278, %v294
      %v315 = vmul.f32 %v279, %v294
      %v316 = vmul.f32 %v280, %v294
      %v317 = vmul.f32 %v281, %v294
      %v318 = vmul.f32 %v282, %v294
      %v319 = vmul.f32 %v283, %v294
      %v320 = vmul.f32 %v284, %v294
      %v321 = vmul.f32 %v285, %v294
      %v322 = vmul.f32 %v286, %v294
      %v323 = vmul.f32 %v287, %v294
      %v324 = vmul.f32 %v288, %v294
      %v325 = vmul.f32 %v289, %v294
      %v326 = vmul.f32 %v290, %v294
      %v327 = vmul.f32 %v291, %v294
      %v328 = vld [vmem:[%s2] sm:$0x1]
      %v330 = vperm.slane %v328, 0
      %v332 = vadd.f32 %v296, %v330
      %v333 = vadd.f32 %v297, %v330
      %v334 = vadd.f32 %v298, %v330
      %v335 = vadd.f32 %v299, %v330
      %v336 = vadd.f32 %v300, %v330
      %v337 = vadd.f32 %v301, %v330
      %v338 = vadd.f32 %v302, %v330
      %v339 = vadd.f32 %v303, %v330
      %v340 = vadd.f32 %v304, %v330
      %v341 = vadd.f32 %v305, %v330
      %v342 = vadd.f32 %v306, %v330
      %v343 = vadd.f32 %v307, %v330
      %v344 = vadd.f32 %v308, %v330
      %v345 = vadd.f32 %v309, %v330
      %v346 = vadd.f32 %v310, %v330
      %v347 = vadd.f32 %v311, %v330
      %v348 = vadd.f32 %v312, %v330
      %v349 = vadd.f32 %v313, %v330
      %v350 = vadd.f32 %v314, %v330
      %v351 = vadd.f32 %v315, %v330
      %v352 = vadd.f32 %v316, %v330
      %v353 = vadd.f32 %v317, %v330
      %v354 = vadd.f32 %v318, %v330
      %v355 = vadd.f32 %v319, %v330
      %v356 = vadd.f32 %v320, %v330
      %v357 = vadd.f32 %v321, %v330
      %v358 = vadd.f32 %v322, %v330
      %v359 = vadd.f32 %v323, %v330
      %v360 = vadd.f32 %v324, %v330
      %v361 = vadd.f32 %v325, %v330
      %v362 = vadd.f32 %v326, %v330
      %v363 = vadd.f32 %v327, %v330
      %v364 = vmax.f32 %v332, 0.0
      %v365 = vmax.f32 %v333, 0.0
      %v366 = vmax.f32 %v334, 0.0
      %v367 = vmax.f32 %v335, 0.0
      %v368 = vmax.f32 %v336, 0.0
      %v369 = vmax.f32 %v337, 0.0
      %v370 = vmax.f32 %v338, 0.0
      %v371 = vmax.f32 %v339, 0.0
      %v372 = vmax.f32 %v340, 0.0
      %v373 = vmax.f32 %v341, 0.0
      %v374 = vmax.f32 %v342, 0.0
      %v375 = vmax.f32 %v343, 0.0
      %v376 = vmax.f32 %v344, 0.0
      %v377 = vmax.f32 %v345, 0.0
      %v378 = vmax.f32 %v346, 0.0
      %v379 = vmax.f32 %v347, 0.0
      %v380 = vmax.f32 %v348, 0.0
      %v381 = vmax.f32 %v349, 0.0
      %v382 = vmax.f32 %v350, 0.0
      %v383 = vmax.f32 %v351, 0.0
      %v384 = vmax.f32 %v352, 0.0
      %v385 = vmax.f32 %v353, 0.0
      %v386 = vmax.f32 %v354, 0.0
      %v387 = vmax.f32 %v355, 0.0
      %v388 = vmax.f32 %v356, 0.0
      %v389 = vmax.f32 %v357, 0.0
      %v390 = vmax.f32 %v358, 0.0
      %v391 = vmax.f32 %v359, 0.0
      %v392 = vmax.f32 %v360, 0.0
      %v393 = vmax.f32 %v361, 0.0
      %v394 = vmax.f32 %v362, 0.0
      %v395 = vmax.f32 %v363, 0.0
      %v396 = vpack.c.bf16 %v364, %v364
      %v397 = vpack.c.bf16 %v365, %v365
      %v398 = vpack.c.bf16 %v366, %v366
      %v399 = vpack.c.bf16 %v367, %v367
      %v400 = vpack.c.bf16 %v368, %v368
      %v401 = vpack.c.bf16 %v369, %v369
      %v402 = vpack.c.bf16 %v370, %v370
      %v403 = vpack.c.bf16 %v371, %v371
      %v404 = vpack.c.bf16 %v372, %v372
      %v405 = vpack.c.bf16 %v373, %v373
      %v406 = vpack.c.bf16 %v374, %v374
      %v407 = vpack.c.bf16 %v375, %v375
      %v408 = vpack.c.bf16 %v376, %v376
      %v409 = vpack.c.bf16 %v377, %v377
      %v410 = vpack.c.bf16 %v378, %v378
      %v411 = vpack.c.bf16 %v379, %v379
      %v412 = vpack.c.bf16 %v380, %v380
      %v413 = vpack.c.bf16 %v381, %v381
      %v414 = vpack.c.bf16 %v382, %v382
      %v415 = vpack.c.bf16 %v383, %v383
      %v416 = vpack.c.bf16 %v384, %v384
      %v417 = vpack.c.bf16 %v385, %v385
      %v418 = vpack.c.bf16 %v386, %v386
      %v419 = vpack.c.bf16 %v387, %v387
      %v420 = vpack.c.bf16 %v388, %v388
      %v421 = vpack.c.bf16 %v389, %v389
      %v422 = vpack.c.bf16 %v390, %v390
      %v423 = vpack.c.bf16 %v391, %v391
      %v424 = vpack.c.bf16 %v392, %v392
      %v425 = vpack.c.bf16 %v393, %v393
      %v426 = vpack.c.bf16 %v394, %v394
      %v427 = vpack.c.bf16 %v395, %v395
      %v428 = vld [vmem:[%s3] sm:$0xf]
      %v429 = vld [vmem:[%s3 + $0x4] sm:$0xf]
      %v430 = vld [vmem:[%s3 + $0x8] sm:$0xf]
      %v431 = vld [vmem:[%s3 + $0xc] sm:$0xf]
      %v432 = vld [vmem:[%s3 + $0x10] sm:$0xf]
      %v433 = vld [vmem:[%s3 + $0x14] sm:$0xf]
      %v434 = vld [vmem:[%s3 + $0x18] sm:$0xf]
      %v435 = vld [vmem:[%s3 + $0x1c] sm:$0xf]
      %v436 = vld [vmem:[%s3 + $0x20] sm:$0xf]
      %v437 = vld [vmem:[%s3 + $0x24] sm:$0xf]
      %v438 = vld [vmem:[%s3 + $0x28] sm:$0xf]
      %v439 = vld [vmem:[%s3 + $0x2c] sm:$0xf]
      %v440 = vld [vmem:[%s3 + $0x30] sm:$0xf]
      %v441 = vld [vmem:[%s3 + $0x34] sm:$0xf]
      %v442 = vld [vmem:[%s3 + $0x38] sm:$0xf]
      %v443 = vld [vmem:[%s3 + $0x3c] sm:$0xf]
      %v444 = vld [vmem:[%s3 + $0x40] sm:$0xf]
      %v445 = vld [vmem:[%s3 + $0x44] sm:$0xf]
      %v446 = vld [vmem:[%s3 + $0x48] sm:$0xf]
      %v447 = vld [vmem:[%s3 + $0x4c] sm:$0xf]
      %v448 = vld [vmem:[%s3 + $0x50] sm:$0xf]
      %v449 = vld [vmem:[%s3 + $0x54] sm:$0xf]
      %v450 = vld [vmem:[%s3 + $0x58] sm:$0xf]
      %v451 = vld [vmem:[%s3 + $0x5c] sm:$0xf]
      %v452 = vld [vmem:[%s3 + $0x60] sm:$0xf]
      %v453 = vld [vmem:[%s3 + $0x64] sm:$0xf]
      %v454 = vld [vmem:[%s3 + $0x68] sm:$0xf]
      %v455 = vld [vmem:[%s3 + $0x6c] sm:$0xf]
      %v456 = vld [vmem:[%s3 + $0x70] sm:$0xf]
      %v457 = vld [vmem:[%s3 + $0x74] sm:$0xf]
      %v458 = vld [vmem:[%s3 + $0x78] sm:$0xf]
      %v459 = vld [vmem:[%s3 + $0x7c] sm:$0xf]
      %v460 = vld [vmem:[%s3 + $0x80] sm:$0xf]
      %v461 = vld [vmem:[%s3 + $0x84] sm:$0xf]
      %v462 = vld [vmem:[%s3 + $0x88] sm:$0xf]
      %v463 = vld [vmem:[%s3 + $0x8c] sm:$0xf]
      %v464 = vlaneseq
      %v465 = vshrl.u32 %v464, 7
      %v466 = vadd.s32 %v465, 8
      %vm467 = vcmp.ge.s32.totalorder %v465, 1
      %vm468 = vcmp.ge.s32.totalorder %v466, 1
      %vm469 = vcmp.le.s32.totalorder %v465, 14
      %vm470 = vcmp.le.s32.totalorder %v466, 14
      %v501 = vunpack.c.l.b16 %v396
      %v502 = vunpack.c.l.b16 %v397
      %v503 = vunpack.c.l.b16 %v398
      %v504 = vunpack.c.l.b16 %v399
      %v505 = vunpack.c.l.b16 %v400
      %v506 = vunpack.c.l.b16 %v401
      %v507 = vunpack.c.l.b16 %v402
      %v508 = vunpack.c.l.b16 %v403
      %v509 = vunpack.c.l.b16 %v404
      %v510 = vunpack.c.l.b16 %v405
      %v511 = vunpack.c.l.b16 %v406
      %v512 = vunpack.c.l.b16 %v407
      %v513 = vunpack.c.l.b16 %v408
      %v514 = vunpack.c.l.b16 %v409
      %v515 = vunpack.c.l.b16 %v410
      %v516 = vunpack.c.l.b16 %v411
      %v517 = vunpack.c.l.b16 %v412
      %v518 = vunpack.c.l.b16 %v413
      %v519 = vunpack.c.l.b16 %v414
      %v520 = vunpack.c.l.b16 %v415
      %v521 = vunpack.c.l.b16 %v416
      %v522 = vunpack.c.l.b16 %v417
      %v523 = vunpack.c.l.b16 %v418
      %v524 = vunpack.c.l.b16 %v419
      %v525 = vunpack.c.l.b16 %v420
      %v526 = vunpack.c.l.b16 %v421
      %v527 = vunpack.c.l.b16 %v422
      %v528 = vunpack.c.l.b16 %v423
      %v529 = vunpack.c.l.b16 %v424
      %v530 = vunpack.c.l.b16 %v425
      %v531 = vpack.c.b16 %v502, %v501
      %v532 = vpack.c.b16 %v504, %v503
      %v533 = vpack.c.b16 %v506, %v505
      %v534 = vpack.c.b16 %v508, %v507
      %v535 = vpack.c.b16 %v510, %v509
      %v536 = vpack.c.b16 %v512, %v511
      %v537 = vpack.c.b16 %v514, %v513
      %v538 = vpack.c.b16 %v516, %v515
      %v539 = vpack.c.b16 %v518, %v517
      %v540 = vpack.c.b16 %v520, %v519
      %v541 = vpack.c.b16 %v522, %v521
      %v542 = vpack.c.b16 %v524, %v523
      %v543 = vpack.c.b16 %v526, %v525
      %v544 = vpack.c.b16 %v528, %v527
      %v545 = vpack.c.b16 %v530, %v529
      %vm546 = vsmask.f32 256
      %v548 = vshrl.u32 %v531, 16
      %v550 = vrot.slane %v548, 7
      %v551 = vshll.u32 %v531, 16
      %v553 = vor.u32 %v550, %v551
      %v555 = vshrl.u32 %v532, 16
      %v557 = vrot.slane %v555, 7
      %v558 = vshll.u32 %v532, 16
      %v560 = vor.u32 %v557, %v558
      %v561 = vsel %vm546, %v550, %v560
      %v563 = vshrl.u32 %v533, 16
      %v565 = vrot.slane %v563, 7
      %v566 = vshll.u32 %v533, 16
      %v568 = vor.u32 %v565, %v566
      %v569 = vsel %vm546, %v557, %v568
      %v571 = vshrl.u32 %v534, 16
      %v573 = vrot.slane %v571, 7
      %v574 = vshll.u32 %v534, 16
      %v576 = vor.u32 %v573, %v574
      %v577 = vsel %vm546, %v565, %v576
      %v579 = vshrl.u32 %v535, 16
      %v581 = vrot.slane %v579, 7
      %v582 = vshll.u32 %v535, 16
      %v584 = vor.u32 %v581, %v582
      %v585 = vsel %vm546, %v573, %v584
      %v587 = vshrl.u32 %v536, 16
      %v589 = vrot.slane %v587, 7
      %v590 = vshll.u32 %v536, 16
      %v592 = vor.u32 %v589, %v590
      %v593 = vsel %vm546, %v581, %v592
      %v595 = vshrl.u32 %v537, 16
      %v597 = vrot.slane %v595, 7
      %v598 = vshll.u32 %v537, 16
      %v600 = vor.u32 %v597, %v598
      %v601 = vsel %vm546, %v589, %v600
      %v603 = vshrl.u32 %v538, 16
      %v605 = vrot.slane %v603, 7
      %v606 = vshll.u32 %v538, 16
      %v608 = vor.u32 %v605, %v606
      %v609 = vsel %vm546, %v597, %v608
      %v611 = vshrl.u32 %v539, 16
      %v613 = vrot.slane %v611, 7
      %v614 = vshll.u32 %v539, 16
      %v616 = vor.u32 %v613, %v614
      %v617 = vsel %vm546, %v605, %v616
      %v619 = vshrl.u32 %v540, 16
      %v621 = vrot.slane %v619, 7
      %v622 = vshll.u32 %v540, 16
      %v624 = vor.u32 %v621, %v622
      %v625 = vsel %vm546, %v613, %v624
      %v627 = vshrl.u32 %v541, 16
      %v629 = vrot.slane %v627, 7
      %v630 = vshll.u32 %v541, 16
      %v632 = vor.u32 %v629, %v630
      %v633 = vsel %vm546, %v621, %v632
      %v635 = vshrl.u32 %v542, 16
      %v637 = vrot.slane %v635, 7
      %v638 = vshll.u32 %v542, 16
      %v640 = vor.u32 %v637, %v638
      %v641 = vsel %vm546, %v629, %v640
      %v643 = vshrl.u32 %v543, 16
      %v645 = vrot.slane %v643, 7
      %v646 = vshll.u32 %v543, 16
      %v648 = vor.u32 %v645, %v646
      %v649 = vsel %vm546, %v637, %v648
      %v651 = vshrl.u32 %v544, 16
      %v653 = vrot.slane %v651, 7
      %v654 = vshll.u32 %v544, 16
      %v656 = vor.u32 %v653, %v654
      %v657 = vsel %vm546, %v645, %v656
      %v659 = vshrl.u32 %v545, 16
      %v661 = vrot.slane %v659, 7
      %v662 = vshll.u32 %v545, 16
      %v664 = vor.u32 %v661, %v662
      %v665 = vsel %vm546, %v653, %v664
      %vm681 = vcmask 1040384
      %vm682 = vmand %vm681, %vm546
      %v683 = vsel %vm682, 0, %v553
      %v684 = vsel %vm467, 1, 0
      %v685 = vsel %vm468, 1, 0
      %vm686 = vcmp.eq.s32.totalorder %v684, 1
      %vm687 = vcmp.eq.s32.totalorder %v685, 1
      %vm688 = vmpackc.low %vm686, %vm686
      %vm689 = vmpackc.low %vm687, %vm687
      %v690 = vsel %vm688, 65537, 0
      %v691 = vsel %vm689, 65537, 0
      %v692 = vunpack.c.l.b16 %v690
      %v693 = vunpack.c.l.b16 %v691
      %v694 = vpack.c.b16 %v693, %v692
      %v695 = vunpack.c.l.b16 %v694
      %v696 = vunpack.c.h.b16 %v694
      %v697 = vunpack.c.l.b16 0
      %v698 = vunpack.c.h.b16 0
      %vm699 = vcmp.ne.s32.totalorder %v695, %v697
      %vm700 = vcmp.ne.s32.totalorder %v696, %v698
      %vm701 = vmpackc.low %vm700, %vm699
      %v702 = vsel %vm701, %v683, 0
      %v703 = vsel %vm701, %v561, 0
      %v704 = vsel %vm701, %v569, 0
      %v705 = vsel %vm701, %v577, 0
      %v706 = vsel %vm701, %v585, 0
      %v707 = vsel %vm701, %v593, 0
      %v708 = vsel %vm701, %v601, 0
      %v709 = vsel %vm701, %v609, 0
      %v710 = vsel %vm701, %v617, 0
      %v711 = vsel %vm701, %v625, 0
      %v712 = vsel %vm701, %v633, 0
      %v713 = vsel %vm701, %v641, 0
      %v714 = vsel %vm701, %v649, 0
      %v715 = vsel %vm701, %v657, 0
      %v716 = vsel %vm701, %v665, 0
      %v721 = vunpack.c.l.b16 %v432
      %v722 = vunpack.c.l.b16 %v433
      %v723 = vunpack.c.l.b16 %v434
      %v724 = vunpack.c.l.b16 %v435
      %v725 = vpack.c.b16 %v722, %v721
      %v726 = vpack.c.b16 %v724, %v723
      %vm729 = vcmask 261120
      %v731 = vsel %vm729, 0, 0
      %v733 = vsel %vm729, %v531, 0
      %v735 = vsel %vm729, %v532, 0
      %v737 = vsel %vm729, %v533, 0
      %v739 = vsel %vm729, %v534, 0
      %v741 = vsel %vm729, %v535, 0
      %v743 = vsel %vm729, %v536, 0
      %v745 = vsel %vm729, %v537, 0
      %v747 = vsel %vm729, %v538, 0
      %v749 = vsel %vm729, %v539, 0
      %v751 = vsel %vm729, %v540, 0
      %v753 = vsel %vm729, %v541, 0
      %v755 = vsel %vm729, %v542, 0
      %v757 = vsel %vm729, %v543, 0
      %v759 = vsel %vm729, %v544, 0
      %v761 = vsel %vm729, %v545, 0
      %763 = vmatpush.bf16.msra.mxu0 0
      %764 = vmatpush.bf16.msra.mxu0 0
      %765 = vmatpush.bf16.msra.mxu0 0
      %766 = vmatpush.bf16.msra.mxu0 0
      %767 = vmatpush.bf16.msra.mxu0 0
      %768 = vmatpush.bf16.msra.mxu0 0
      %769 = vmatpush.bf16.msra.mxu0 %v726
      %770 = vmatpush.bf16.msra.mxu0 %v725
      %771 = vmatmul.bf16.gmra.mxu0 %v731
      %v772 = vpop.f32.mrf.mxu0
      %v773 = vadd.f32 0.0, %v772
      %v774 = vpop.f32.mrf.mxu0
      %v775 = vadd.f32 0.0, %v774
      %776 = vmatmul.bf16.gmra.mxu0 %v733
      %v777 = vpop.f32.mrf.mxu0
      %v778 = vadd.f32 0.0, %v777
      %v779 = vpop.f32.mrf.mxu0
      %v780 = vadd.f32 0.0, %v779
      %781 = vmatmul.bf16.gmra.mxu0 %v735
      %v782 = vpop.f32.mrf.mxu0
      %v783 = vadd.f32 0.0, %v782
      %v784 = vpop.f32.mrf.mxu0
      %v785 = vadd.f32 0.0, %v784
      %786 = vmatmul.bf16.gmra.mxu0 %v737
      %v787 = vpop.f32.mrf.mxu0
      %v788 = vadd.f32 0.0, %v787
      %v789 = vpop.f32.mrf.mxu0
      %v790 = vadd.f32 0.0, %v789
      %791 = vmatmul.bf16.gmra.mxu0 %v739
      %v792 = vpop.f32.mrf.mxu0
      %v793 = vadd.f32 0.0, %v792
      %v794 = vpop.f32.mrf.mxu0
      %v795 = vadd.f32 0.0, %v794
      %796 = vmatmul.bf16.gmra.mxu0 %v741
      %v797 = vpop.f32.mrf.mxu0
      %v798 = vadd.f32 0.0, %v797
      %v799 = vpop.f32.mrf.mxu0
      %v800 = vadd.f32 0.0, %v799
      %801 = vmatmul.bf16.gmra.mxu0 %v743
      %v802 = vpop.f32.mrf.mxu0
      %v803 = vadd.f32 0.0, %v802
      %v804 = vpop.f32.mrf.mxu0
      %v805 = vadd.f32 0.0, %v804
      %806 = vmatmul.bf16.gmra.mxu0 %v745
      %v807 = vpop.f32.mrf.mxu0
      %v808 = vadd.f32 0.0, %v807
      %v809 = vpop.f32.mrf.mxu0
      %v810 = vadd.f32 0.0, %v809
      %811 = vmatmul.bf16.gmra.mxu0 %v747
      %v812 = vpop.f32.mrf.mxu0
      %v813 = vadd.f32 0.0, %v812
      %v814 = vpop.f32.mrf.mxu0
      %v815 = vadd.f32 0.0, %v814
      %816 = vmatmul.bf16.gmra.mxu0 %v749
      %v817 = vpop.f32.mrf.mxu0
      %v818 = vadd.f32 0.0, %v817
      %v819 = vpop.f32.mrf.mxu0
      %v820 = vadd.f32 0.0, %v819
      %821 = vmatmul.bf16.gmra.mxu0 %v751
      %v822 = vpop.f32.mrf.mxu0
      %v823 = vadd.f32 0.0, %v822
      %v824 = vpop.f32.mrf.mxu0
      %v825 = vadd.f32 0.0, %v824
      %826 = vmatmul.bf16.gmra.mxu0 %v753
      %v827 = vpop.f32.mrf.mxu0
      %v828 = vadd.f32 0.0, %v827
      %v829 = vpop.f32.mrf.mxu0
      %v830 = vadd.f32 0.0, %v829
      %831 = vmatmul.bf16.gmra.mxu0 %v755
      %v832 = vpop.f32.mrf.mxu0
      %v833 = vadd.f32 0.0, %v832
      %v834 = vpop.f32.mrf.mxu0
      %v835 = vadd.f32 0.0, %v834
      %836 = vmatmul.bf16.gmra.mxu0 %v757
      %v837 = vpop.f32.mrf.mxu0
      %v838 = vadd.f32 0.0, %v837
      %v839 = vpop.f32.mrf.mxu0
      %v840 = vadd.f32 0.0, %v839
      %841 = vmatmul.bf16.gmra.mxu0 %v759
      %v842 = vpop.f32.mrf.mxu0
      %v843 = vadd.f32 0.0, %v842
      %v844 = vpop.f32.mrf.mxu0
      %v845 = vadd.f32 0.0, %v844
      %846 = vmatmul.bf16.gmra.mxu0 %v761
      %v847 = vpop.f32.mrf.mxu0
      %v848 = vadd.f32 0.0, %v847
      %v849 = vpop.f32.mrf.mxu0
      %v850 = vadd.f32 0.0, %v849
      %851 = vdwg.mxu0
      %v856 = vunpack.c.l.b16 %v428
      %v857 = vunpack.c.l.b16 %v429
      %v858 = vunpack.c.l.b16 %v430
      %v859 = vunpack.c.l.b16 %v431
      %v860 = vpack.c.b16 %v857, %v856
      %v861 = vpack.c.b16 %v859, %v858
      %v865 = vsel %vm729, %v702, 0
      %v868 = vsel %vm729, %v703, 0
      %v871 = vsel %vm729, %v704, 0
      %v874 = vsel %vm729, %v705, 0
      %v877 = vsel %vm729, %v706, 0
      %v880 = vsel %vm729, %v707, 0
      %v883 = vsel %vm729, %v708, 0
      %v886 = vsel %vm729, %v709, 0
      %v889 = vsel %vm729, %v710, 0
      %v892 = vsel %vm729, %v711, 0
      %v895 = vsel %vm729, %v712, 0
      %v898 = vsel %vm729, %v713, 0
      %v901 = vsel %vm729, %v714, 0
      %v904 = vsel %vm729, %v715, 0
      %v907 = vsel %vm729, %v716, 0
      %909 = vmatpush.bf16.msra.mxu0 0
      %910 = vmatpush.bf16.msra.mxu0 0
      %911 = vmatpush.bf16.msra.mxu0 0
      %912 = vmatpush.bf16.msra.mxu0 0
      %913 = vmatpush.bf16.msra.mxu0 0
      %914 = vmatpush.bf16.msra.mxu0 0
      %915 = vmatpush.bf16.msra.mxu0 %v861
      %916 = vmatpush.bf16.msra.mxu0 %v860
      %917 = vmatmul.bf16.gmra.mxu0 %v731
      %v918 = vpop.f32.mrf.mxu0
      %v919 = vadd.f32 %v773, %v918
      %v920 = vpop.f32.mrf.mxu0
      %v921 = vadd.f32 %v775, %v920
      %922 = vmatmul.bf16.gmra.mxu0 %v865
      %v923 = vpop.f32.mrf.mxu0
      %v924 = vadd.f32 %v778, %v923
      %v925 = vpop.f32.mrf.mxu0
      %v926 = vadd.f32 %v780, %v925
      %927 = vmatmul.bf16.gmra.mxu0 %v868
      %v928 = vpop.f32.mrf.mxu0
      %v929 = vadd.f32 %v783, %v928
      %v930 = vpop.f32.mrf.mxu0
      %v931 = vadd.f32 %v785, %v930
      %932 = vmatmul.bf16.gmra.mxu0 %v871
      %v933 = vpop.f32.mrf.mxu0
      %v934 = vadd.f32 %v788, %v933
      %v935 = vpop.f32.mrf.mxu0
      %v936 = vadd.f32 %v790, %v935
      %937 = vmatmul.bf16.gmra.mxu0 %v874
      %v938 = vpop.f32.mrf.mxu0
      %v939 = vadd.f32 %v793, %v938
      %v940 = vpop.f32.mrf.mxu0
      %v941 = vadd.f32 %v795, %v940
      %942 = vmatmul.bf16.gmra.mxu0 %v877
      %v943 = vpop.f32.mrf.mxu0
      %v944 = vadd.f32 %v798, %v943
      %v945 = vpop.f32.mrf.mxu0
      %v946 = vadd.f32 %v800, %v945
      %947 = vmatmul.bf16.gmra.mxu0 %v880
      %v948 = vpop.f32.mrf.mxu0
      %v949 = vadd.f32 %v803, %v948
      %v950 = vpop.f32.mrf.mxu0
      %v951 = vadd.f32 %v805, %v950
      %952 = vmatmul.bf16.gmra.mxu0 %v883
      %v953 = vpop.f32.mrf.mxu0
      %v954 = vadd.f32 %v808, %v953
      %v955 = vpop.f32.mrf.mxu0
      %v956 = vadd.f32 %v810, %v955
      %957 = vmatmul.bf16.gmra.mxu0 %v886
      %v958 = vpop.f32.mrf.mxu0
      %v959 = vadd.f32 %v813, %v958
      %v960 = vpop.f32.mrf.mxu0
      %v961 = vadd.f32 %v815, %v960
      %962 = vmatmul.bf16.gmra.mxu0 %v889
      %v963 = vpop.f32.mrf.mxu0
      %v964 = vadd.f32 %v818, %v963
      %v965 = vpop.f32.mrf.mxu0
      %v966 = vadd.f32 %v820, %v965
      %967 = vmatmul.bf16.gmra.mxu0 %v892
      %v968 = vpop.f32.mrf.mxu0
      %v969 = vadd.f32 %v823, %v968
      %v970 = vpop.f32.mrf.mxu0
      %v971 = vadd.f32 %v825, %v970
      %972 = vmatmul.bf16.gmra.mxu0 %v895
      %v973 = vpop.f32.mrf.mxu0
      %v974 = vadd.f32 %v828, %v973
      %v975 = vpop.f32.mrf.mxu0
      %v976 = vadd.f32 %v830, %v975
      %977 = vmatmul.bf16.gmra.mxu0 %v898
      %v978 = vpop.f32.mrf.mxu0
      %v979 = vadd.f32 %v833, %v978
      %v980 = vpop.f32.mrf.mxu0
      %v981 = vadd.f32 %v835, %v980
      %982 = vmatmul.bf16.gmra.mxu0 %v901
      %v983 = vpop.f32.mrf.mxu0
      %v984 = vadd.f32 %v838, %v983
      %v985 = vpop.f32.mrf.mxu0
      %v986 = vadd.f32 %v840, %v985
      %987 = vmatmul.bf16.gmra.mxu0 %v904
      %v988 = vpop.f32.mrf.mxu0
      %v989 = vadd.f32 %v843, %v988
      %v990 = vpop.f32.mrf.mxu0
      %v991 = vadd.f32 %v845, %v990
      %992 = vmatmul.bf16.gmra.mxu0 %v907
      %v993 = vpop.f32.mrf.mxu0
      %v994 = vadd.f32 %v848, %v993
      %v995 = vpop.f32.mrf.mxu0
      %v996 = vadd.f32 %v850, %v995
      %997 = vdwg.mxu0
      %v999 = vunpack.c.l.b16 %v426
      %v1000 = vpack.c.b16 %v999, %v999
      %vm1001 = vsmask.f32 7424
      %v1002 = vrot.slane %v551, 1
      %v1003 = vor.u32 %v548, %v1002
      %v1004 = vrot.slane %v558, 1
      %v1005 = vsel %vm1001, %v1003, %v1004
      %v1006 = vor.u32 %v555, %v1004
      %v1007 = vrot.slane %v566, 1
      %v1008 = vsel %vm1001, %v1006, %v1007
      %v1009 = vor.u32 %v563, %v1007
      %v1010 = vrot.slane %v574, 1
      %v1011 = vsel %vm1001, %v1009, %v1010
      %v1012 = vor.u32 %v571, %v1010
      %v1013 = vrot.slane %v582, 1
      %v1014 = vsel %vm1001, %v1012, %v1013
      %v1015 = vor.u32 %v579, %v1013
      %v1016 = vrot.slane %v590, 1
      %v1017 = vsel %vm1001, %v1015, %v1016
      %v1018 = vor.u32 %v587, %v1016
      %v1019 = vrot.slane %v598, 1
      %v1020 = vsel %vm1001, %v1018, %v1019
      %v1021 = vor.u32 %v595, %v1019
      %v1022 = vrot.slane %v606, 1
      %v1023 = vsel %vm1001, %v1021, %v1022
      %v1024 = vor.u32 %v603, %v1022
      %v1025 = vrot.slane %v614, 1
      %v1026 = vsel %vm1001, %v1024, %v1025
      %v1027 = vor.u32 %v611, %v1025
      %v1028 = vrot.slane %v622, 1
      %v1029 = vsel %vm1001, %v1027, %v1028
      %v1030 = vor.u32 %v619, %v1028
      %v1031 = vrot.slane %v630, 1
      %v1032 = vsel %vm1001, %v1030, %v1031
      %v1033 = vor.u32 %v627, %v1031
      %v1034 = vrot.slane %v638, 1
      %v1035 = vsel %vm1001, %v1033, %v1034
      %v1036 = vor.u32 %v635, %v1034
      %v1037 = vrot.slane %v646, 1
      %v1038 = vsel %vm1001, %v1036, %v1037
      %v1039 = vor.u32 %v643, %v1037
      %v1040 = vrot.slane %v654, 1
      %v1041 = vsel %vm1001, %v1039, %v1040
      %v1042 = vor.u32 %v651, %v1040
      %v1043 = vrot.slane %v662, 1
      %v1044 = vsel %vm1001, %v1042, %v1043
      %v1045 = vor.u32 %v659, %v1043
      %v1047 = vshll.u32 %v1000, 16
      %v1049 = vrot.slane %v1047, 1
      %v1050 = vsel %vm1001, %v1045, %v1049
      %vm1067 = vcmask 1047552
      %vm1068 = vmand %vm1067, %vm1001
      %v1069 = vsel %vm1068, 0, %v1002
      %v1070 = vsel %vm469, 1, 0
      %v1071 = vsel %vm470, 1, 0
      %vm1072 = vcmp.eq.s32.totalorder %v1070, 1
      %vm1073 = vcmp.eq.s32.totalorder %v1071, 1
      %vm1074 = vmpackc.low %vm1072, %vm1072
      %vm1075 = vmpackc.low %vm1073, %vm1073
      %v1076 = vsel %vm1074, 65537, 0
      %v1077 = vsel %vm1075, 65537, 0
      %v1078 = vunpack.c.l.b16 %v1076
      %v1079 = vunpack.c.l.b16 %v1077
      %v1080 = vpack.c.b16 %v1079, %v1078
      %v1081 = vunpack.c.l.b16 %v1080
      %v1082 = vunpack.c.h.b16 %v1080
      %v1083 = vunpack.c.l.b16 0
      %v1084 = vunpack.c.h.b16 0
      %vm1085 = vcmp.ne.s32.totalorder %v1081, %v1083
      %vm1086 = vcmp.ne.s32.totalorder %v1082, %v1084
      %vm1087 = vmpackc.low %vm1086, %vm1085
      %v1088 = vsel %vm1087, %v1069, 0
      %v1089 = vsel %vm1087, %v1005, 0
      %v1090 = vsel %vm1087, %v1008, 0
      %v1091 = vsel %vm1087, %v1011, 0
      %v1092 = vsel %vm1087, %v1014, 0
      %v1093 = vsel %vm1087, %v1017, 0
      %v1094 = vsel %vm1087, %v1020, 0
      %v1095 = vsel %vm1087, %v1023, 0
      %v1096 = vsel %vm1087, %v1026, 0
      %v1097 = vsel %vm1087, %v1029, 0
      %v1098 = vsel %vm1087, %v1032, 0
      %v1099 = vsel %vm1087, %v1035, 0
      %v1100 = vsel %vm1087, %v1038, 0
      %v1101 = vsel %vm1087, %v1041, 0
      %v1102 = vsel %vm1087, %v1044, 0
      %v1103 = vsel %vm1087, %v1050, 0
      %v1108 = vunpack.c.l.b16 %v436
      %v1109 = vunpack.c.l.b16 %v437
      %v1110 = vunpack.c.l.b16 %v438
      %v1111 = vunpack.c.l.b16 %v439
      %v1112 = vpack.c.b16 %v1109, %v1108
      %v1113 = vpack.c.b16 %v1111, %v1110
      %v1117 = vsel %vm729, %v1088, 0
      %v1120 = vsel %vm729, %v1089, 0
      %v1123 = vsel %vm729, %v1090, 0
      %v1126 = vsel %vm729, %v1091, 0
      %v1129 = vsel %vm729, %v1092, 0
      %v1132 = vsel %vm729, %v1093, 0
      %v1135 = vsel %vm729, %v1094, 0
      %v1138 = vsel %vm729, %v1095, 0
      %v1141 = vsel %vm729, %v1096, 0
      %v1144 = vsel %vm729, %v1097, 0
      %v1147 = vsel %vm729, %v1098, 0
      %v1150 = vsel %vm729, %v1099, 0
      %v1153 = vsel %vm729, %v1100, 0
      %v1156 = vsel %vm729, %v1101, 0
      %v1159 = vsel %vm729, %v1102, 0
      %v1162 = vsel %vm729, %v1103, 0
      %1164 = vmatpush.bf16.msra.mxu0 0
      %1165 = vmatpush.bf16.msra.mxu0 0
      %1166 = vmatpush.bf16.msra.mxu0 0
      %1167 = vmatpush.bf16.msra.mxu0 0
      %1168 = vmatpush.bf16.msra.mxu0 0
      %1169 = vmatpush.bf16.msra.mxu0 0
      %1170 = vmatpush.bf16.msra.mxu0 %v1113
      %1171 = vmatpush.bf16.msra.mxu0 %v1112
      %1172 = vmatmul.bf16.gmra.mxu0 %v1117
      %v1173 = vpop.f32.mrf.mxu0
      %v1174 = vadd.f32 0.0, %v1173
      %v1175 = vpop.f32.mrf.mxu0
      %v1176 = vadd.f32 0.0, %v1175
      %1177 = vmatmul.bf16.gmra.mxu0 %v1120
      %v1178 = vpop.f32.mrf.mxu0
      %v1179 = vadd.f32 0.0, %v1178
      %v1180 = vpop.f32.mrf.mxu0
      %v1181 = vadd.f32 0.0, %v1180
      %1182 = vmatmul.bf16.gmra.mxu0 %v1123
      %v1183 = vpop.f32.mrf.mxu0
      %v1184 = vadd.f32 0.0, %v1183
      %v1185 = vpop.f32.mrf.mxu0
      %v1186 = vadd.f32 0.0, %v1185
      %1187 = vmatmul.bf16.gmra.mxu0 %v1126
      %v1188 = vpop.f32.mrf.mxu0
      %v1189 = vadd.f32 0.0, %v1188
      %v1190 = vpop.f32.mrf.mxu0
      %v1191 = vadd.f32 0.0, %v1190
      %1192 = vmatmul.bf16.gmra.mxu0 %v1129
      %v1193 = vpop.f32.mrf.mxu0
      %v1194 = vadd.f32 0.0, %v1193
      %v1195 = vpop.f32.mrf.mxu0
      %v1196 = vadd.f32 0.0, %v1195
      %1197 = vmatmul.bf16.gmra.mxu0 %v1132
      %v1198 = vpop.f32.mrf.mxu0
      %v1199 = vadd.f32 0.0, %v1198
      %v1200 = vpop.f32.mrf.mxu0
      %v1201 = vadd.f32 0.0, %v1200
      %1202 = vmatmul.bf16.gmra.mxu0 %v1135
      %v1203 = vpop.f32.mrf.mxu0
      %v1204 = vadd.f32 0.0, %v1203
      %v1205 = vpop.f32.mrf.mxu0
      %v1206 = vadd.f32 0.0, %v1205
      %1207 = vmatmul.bf16.gmra.mxu0 %v1138
      %v1208 = vpop.f32.mrf.mxu0
      %v1209 = vadd.f32 0.0, %v1208
      %v1210 = vpop.f32.mrf.mxu0
      %v1211 = vadd.f32 0.0, %v1210
      %1212 = vmatmul.bf16.gmra.mxu0 %v1141
      %v1213 = vpop.f32.mrf.mxu0
      %v1214 = vadd.f32 0.0, %v1213
      %v1215 = vpop.f32.mrf.mxu0
      %v1216 = vadd.f32 0.0, %v1215
      %1217 = vmatmul.bf16.gmra.mxu0 %v1144
      %v1218 = vpop.f32.mrf.mxu0
      %v1219 = vadd.f32 0.0, %v1218
      %v1220 = vpop.f32.mrf.mxu0
      %v1221 = vadd.f32 0.0, %v1220
      %1222 = vmatmul.bf16.gmra.mxu0 %v1147
      %v1223 = vpop.f32.mrf.mxu0
      %v1224 = vadd.f32 0.0, %v1223
      %v1225 = vpop.f32.mrf.mxu0
      %v1226 = vadd.f32 0.0, %v1225
      %1227 = vmatmul.bf16.gmra.mxu0 %v1150
      %v1228 = vpop.f32.mrf.mxu0
      %v1229 = vadd.f32 0.0, %v1228
      %v1230 = vpop.f32.mrf.mxu0
      %v1231 = vadd.f32 0.0, %v1230
      %1232 = vmatmul.bf16.gmra.mxu0 %v1153
      %v1233 = vpop.f32.mrf.mxu0
      %v1234 = vadd.f32 0.0, %v1233
      %v1235 = vpop.f32.mrf.mxu0
      %v1236 = vadd.f32 0.0, %v1235
      %1237 = vmatmul.bf16.gmra.mxu0 %v1156
      %v1238 = vpop.f32.mrf.mxu0
      %v1239 = vadd.f32 0.0, %v1238
      %v1240 = vpop.f32.mrf.mxu0
      %v1241 = vadd.f32 0.0, %v1240
      %1242 = vmatmul.bf16.gmra.mxu0 %v1159
      %v1243 = vpop.f32.mrf.mxu0
      %v1244 = vadd.f32 0.0, %v1243
      %v1245 = vpop.f32.mrf.mxu0
      %v1246 = vadd.f32 0.0, %v1245
      %1247 = vmatmul.bf16.gmra.mxu0 %v1162
      %v1248 = vpop.f32.mrf.mxu0
      %v1249 = vadd.f32 0.0, %v1248
      %v1250 = vpop.f32.mrf.mxu0
      %v1251 = vadd.f32 0.0, %v1250
      %1252 = vdwg.mxu0
      %v1253 = vadd.f32 %v919, %v1174
      %v1254 = vadd.f32 %v921, %v1176
      %v1255 = vadd.f32 %v924, %v1179
      %v1256 = vadd.f32 %v926, %v1181
      %v1257 = vadd.f32 %v929, %v1184
      %v1258 = vadd.f32 %v931, %v1186
      %v1259 = vadd.f32 %v934, %v1189
      %v1260 = vadd.f32 %v936, %v1191
      %v1261 = vadd.f32 %v939, %v1194
      %v1262 = vadd.f32 %v941, %v1196
      %v1263 = vadd.f32 %v944, %v1199
      %v1264 = vadd.f32 %v946, %v1201
      %v1265 = vadd.f32 %v949, %v1204
      %v1266 = vadd.f32 %v951, %v1206
      %v1267 = vadd.f32 %v954, %v1209
      %v1268 = vadd.f32 %v956, %v1211
      %v1269 = vadd.f32 %v959, %v1214
      %v1270 = vadd.f32 %v961, %v1216
      %v1271 = vadd.f32 %v964, %v1219
      %v1272 = vadd.f32 %v966, %v1221
      %v1273 = vadd.f32 %v969, %v1224
      %v1274 = vadd.f32 %v971, %v1226
      %v1275 = vadd.f32 %v974, %v1229
      %v1276 = vadd.f32 %v976, %v1231
      %v1277 = vadd.f32 %v979, %v1234
      %v1278 = vadd.f32 %v981, %v1236
      %v1279 = vadd.f32 %v984, %v1239
      %v1280 = vadd.f32 %v986, %v1241
      %v1281 = vadd.f32 %v989, %v1244
      %v1282 = vadd.f32 %v991, %v1246
      %v1283 = vadd.f32 %v994, %v1249
      %v1284 = vadd.f32 %v996, %v1251
      %v1286 = vunpack.c.l.b16 %v427
      %v1287 = vpack.c.b16 %v1286, %v999
      %v1289 = vshrl.u32 %v1287, 16
      %v1291 = vrot.slane %v1289, 7
      %v1292 = vshll.u32 %v1287, 16
      %v1294 = vor.u32 %v1291, %v1292
      %v1295 = vsel %vm546, %v661, %v1294
      %v1297 = vsel %vm701, %v1295, 0
      %v1302 = vunpack.c.l.b16 %v440
      %v1303 = vunpack.c.l.b16 %v441
      %v1304 = vunpack.c.l.b16 %v442
      %v1305 = vunpack.c.l.b16 %v443
      %v1306 = vpack.c.b16 %v1303, %v1302
      %v1307 = vpack.c.b16 %v1305, %v1304
      %v1311 = vsel %vm729, %v1297, 0
      %1313 = vmatpush.bf16.msra.mxu0 0
      %1314 = vmatpush.bf16.msra.mxu0 0
      %1315 = vmatpush.bf16.msra.mxu0 0
      %1316 = vmatpush.bf16.msra.mxu0 0
      %1317 = vmatpush.bf16.msra.mxu0 0
      %1318 = vmatpush.bf16.msra.mxu0 0
      %1319 = vmatpush.bf16.msra.mxu0 %v1307
      %1320 = vmatpush.bf16.msra.mxu0 %v1306
      %1321 = vmatmul.bf16.gmra.mxu0 %v865
      %v1322 = vpop.f32.mrf.mxu0
      %v1323 = vadd.f32 0.0, %v1322
      %v1324 = vpop.f32.mrf.mxu0
      %v1325 = vadd.f32 0.0, %v1324
      %1326 = vmatmul.bf16.gmra.mxu0 %v868
      %v1327 = vpop.f32.mrf.mxu0
      %v1328 = vadd.f32 0.0, %v1327
      %v1329 = vpop.f32.mrf.mxu0
      %v1330 = vadd.f32 0.0, %v1329
      %1331 = vmatmul.bf16.gmra.mxu0 %v871
      %v1332 = vpop.f32.mrf.mxu0
      %v1333 = vadd.f32 0.0, %v1332
      %v1334 = vpop.f32.mrf.mxu0
      %v1335 = vadd.f32 0.0, %v1334
      %1336 = vmatmul.bf16.gmra.mxu0 %v874
      %v1337 = vpop.f32.mrf.mxu0
      %v1338 = vadd.f32 0.0, %v1337
      %v1339 = vpop.f32.mrf.mxu0
      %v1340 = vadd.f32 0.0, %v1339
      %1341 = vmatmul.bf16.gmra.mxu0 %v877
      %v1342 = vpop.f32.mrf.mxu0
      %v1343 = vadd.f32 0.0, %v1342
      %v1344 = vpop.f32.mrf.mxu0
      %v1345 = vadd.f32 0.0, %v1344
      %1346 = vmatmul.bf16.gmra.mxu0 %v880
      %v1347 = vpop.f32.mrf.mxu0
      %v1348 = vadd.f32 0.0, %v1347
      %v1349 = vpop.f32.mrf.mxu0
      %v1350 = vadd.f32 0.0, %v1349
      %1351 = vmatmul.bf16.gmra.mxu0 %v883
      %v1352 = vpop.f32.mrf.mxu0
      %v1353 = vadd.f32 0.0, %v1352
      %v1354 = vpop.f32.mrf.mxu0
      %v1355 = vadd.f32 0.0, %v1354
      %1356 = vmatmul.bf16.gmra.mxu0 %v886
      %v1357 = vpop.f32.mrf.mxu0
      %v1358 = vadd.f32 0.0, %v1357
      %v1359 = vpop.f32.mrf.mxu0
      %v1360 = vadd.f32 0.0, %v1359
      %1361 = vmatmul.bf16.gmra.mxu0 %v889
      %v1362 = vpop.f32.mrf.mxu0
      %v1363 = vadd.f32 0.0, %v1362
      %v1364 = vpop.f32.mrf.mxu0
      %v1365 = vadd.f32 0.0, %v1364
      %1366 = vmatmul.bf16.gmra.mxu0 %v892
      %v1367 = vpop.f32.mrf.mxu0
      %v1368 = vadd.f32 0.0, %v1367
      %v1369 = vpop.f32.mrf.mxu0
      %v1370 = vadd.f32 0.0, %v1369
      %1371 = vmatmul.bf16.gmra.mxu0 %v895
      %v1372 = vpop.f32.mrf.mxu0
      %v1373 = vadd.f32 0.0, %v1372
      %v1374 = vpop.f32.mrf.mxu0
      %v1375 = vadd.f32 0.0, %v1374
      %1376 = vmatmul.bf16.gmra.mxu0 %v898
      %v1377 = vpop.f32.mrf.mxu0
      %v1378 = vadd.f32 0.0, %v1377
      %v1379 = vpop.f32.mrf.mxu0
      %v1380 = vadd.f32 0.0, %v1379
      %1381 = vmatmul.bf16.gmra.mxu0 %v901
      %v1382 = vpop.f32.mrf.mxu0
      %v1383 = vadd.f32 0.0, %v1382
      %v1384 = vpop.f32.mrf.mxu0
      %v1385 = vadd.f32 0.0, %v1384
      %1386 = vmatmul.bf16.gmra.mxu0 %v904
      %v1387 = vpop.f32.mrf.mxu0
      %v1388 = vadd.f32 0.0, %v1387
      %v1389 = vpop.f32.mrf.mxu0
      %v1390 = vadd.f32 0.0, %v1389
      %1391 = vmatmul.bf16.gmra.mxu0 %v907
      %v1392 = vpop.f32.mrf.mxu0
      %v1393 = vadd.f32 0.0, %v1392
      %v1394 = vpop.f32.mrf.mxu0
      %v1395 = vadd.f32 0.0, %v1394
      %1396 = vmatmul.bf16.gmra.mxu0 %v1311
      %v1397 = vpop.f32.mrf.mxu0
      %v1398 = vadd.f32 0.0, %v1397
      %v1399 = vpop.f32.mrf.mxu0
      %v1400 = vadd.f32 0.0, %v1399
      %1401 = vdwg.mxu0
      %v1402 = vadd.f32 %v1253, %v1323
      %v1403 = vadd.f32 %v1254, %v1325
      %v1404 = vadd.f32 %v1255, %v1328
      %v1405 = vadd.f32 %v1256, %v1330
      %v1406 = vadd.f32 %v1257, %v1333
      %v1407 = vadd.f32 %v1258, %v1335
      %v1408 = vadd.f32 %v1259, %v1338
      %v1409 = vadd.f32 %v1260, %v1340
      %v1410 = vadd.f32 %v1261, %v1343
      %v1411 = vadd.f32 %v1262, %v1345
      %v1412 = vadd.f32 %v1263, %v1348
      %v1413 = vadd.f32 %v1264, %v1350
      %v1414 = vadd.f32 %v1265, %v1353
      %v1415 = vadd.f32 %v1266, %v1355
      %v1416 = vadd.f32 %v1267, %v1358
      %v1417 = vadd.f32 %v1268, %v1360
      %v1418 = vadd.f32 %v1269, %v1363
      %v1419 = vadd.f32 %v1270, %v1365
      %v1420 = vadd.f32 %v1271, %v1368
      %v1421 = vadd.f32 %v1272, %v1370
      %v1422 = vadd.f32 %v1273, %v1373
      %v1423 = vadd.f32 %v1274, %v1375
      %v1424 = vadd.f32 %v1275, %v1378
      %v1425 = vadd.f32 %v1276, %v1380
      %v1426 = vadd.f32 %v1277, %v1383
      %v1427 = vadd.f32 %v1278, %v1385
      %v1428 = vadd.f32 %v1279, %v1388
      %v1429 = vadd.f32 %v1280, %v1390
      %v1430 = vadd.f32 %v1281, %v1393
      %v1431 = vadd.f32 %v1282, %v1395
      %v1432 = vadd.f32 %v1283, %v1398
      %v1433 = vadd.f32 %v1284, %v1400
      %v1438 = vunpack.c.l.b16 %v444
      %v1439 = vunpack.c.l.b16 %v445
      %v1440 = vunpack.c.l.b16 %v446
      %v1441 = vunpack.c.l.b16 %v447
      %v1442 = vpack.c.b16 %v1439, %v1438
      %v1443 = vpack.c.b16 %v1441, %v1440
      %v1446 = vsel %vm729, %v1287, 0
      %1448 = vmatpush.bf16.msra.mxu0 0
      %1449 = vmatpush.bf16.msra.mxu0 0
      %1450 = vmatpush.bf16.msra.mxu0 0
      %1451 = vmatpush.bf16.msra.mxu0 0
      %1452 = vmatpush.bf16.msra.mxu0 0
      %1453 = vmatpush.bf16.msra.mxu0 0
      %1454 = vmatpush.bf16.msra.mxu0 %v1443
      %1455 = vmatpush.bf16.msra.mxu0 %v1442
      %1456 = vmatmul.bf16.gmra.mxu0 %v733
      %v1457 = vpop.f32.mrf.mxu0
      %v1458 = vadd.f32 0.0, %v1457
      %v1459 = vpop.f32.mrf.mxu0
      %v1460 = vadd.f32 0.0, %v1459
      %1461 = vmatmul.bf16.gmra.mxu0 %v735
      %v1462 = vpop.f32.mrf.mxu0
      %v1463 = vadd.f32 0.0, %v1462
      %v1464 = vpop.f32.mrf.mxu0
      %v1465 = vadd.f32 0.0, %v1464
      %1466 = vmatmul.bf16.gmra.mxu0 %v737
      %v1467 = vpop.f32.mrf.mxu0
      %v1468 = vadd.f32 0.0, %v1467
      %v1469 = vpop.f32.mrf.mxu0
      %v1470 = vadd.f32 0.0, %v1469
      %1471 = vmatmul.bf16.gmra.mxu0 %v739
      %v1472 = vpop.f32.mrf.mxu0
      %v1473 = vadd.f32 0.0, %v1472
      %v1474 = vpop.f32.mrf.mxu0
      %v1475 = vadd.f32 0.0, %v1474
      %1476 = vmatmul.bf16.gmra.mxu0 %v741
      %v1477 = vpop.f32.mrf.mxu0
      %v1478 = vadd.f32 0.0, %v1477
      %v1479 = vpop.f32.mrf.mxu0
      %v1480 = vadd.f32 0.0, %v1479
      %1481 = vmatmul.bf16.gmra.mxu0 %v743
      %v1482 = vpop.f32.mrf.mxu0
      %v1483 = vadd.f32 0.0, %v1482
      %v1484 = vpop.f32.mrf.mxu0
      %v1485 = vadd.f32 0.0, %v1484
      %1486 = vmatmul.bf16.gmra.mxu0 %v745
      %v1487 = vpop.f32.mrf.mxu0
      %v1488 = vadd.f32 0.0, %v1487
      %v1489 = vpop.f32.mrf.mxu0
      %v1490 = vadd.f32 0.0, %v1489
      %1491 = vmatmul.bf16.gmra.mxu0 %v747
      %v1492 = vpop.f32.mrf.mxu0
      %v1493 = vadd.f32 0.0, %v1492
      %v1494 = vpop.f32.mrf.mxu0
      %v1495 = vadd.f32 0.0, %v1494
      %1496 = vmatmul.bf16.gmra.mxu0 %v749
      %v1497 = vpop.f32.mrf.mxu0
      %v1498 = vadd.f32 0.0, %v1497
      %v1499 = vpop.f32.mrf.mxu0
      %v1500 = vadd.f32 0.0, %v1499
      %1501 = vmatmul.bf16.gmra.mxu0 %v751
      %v1502 = vpop.f32.mrf.mxu0
      %v1503 = vadd.f32 0.0, %v1502
      %v1504 = vpop.f32.mrf.mxu0
      %v1505 = vadd.f32 0.0, %v1504
      %1506 = vmatmul.bf16.gmra.mxu0 %v753
      %v1507 = vpop.f32.mrf.mxu0
      %v1508 = vadd.f32 0.0, %v1507
      %v1509 = vpop.f32.mrf.mxu0
      %v1510 = vadd.f32 0.0, %v1509
      %1511 = vmatmul.bf16.gmra.mxu0 %v755
      %v1512 = vpop.f32.mrf.mxu0
      %v1513 = vadd.f32 0.0, %v1512
      %v1514 = vpop.f32.mrf.mxu0
      %v1515 = vadd.f32 0.0, %v1514
      %1516 = vmatmul.bf16.gmra.mxu0 %v757
      %v1517 = vpop.f32.mrf.mxu0
      %v1518 = vadd.f32 0.0, %v1517
      %v1519 = vpop.f32.mrf.mxu0
      %v1520 = vadd.f32 0.0, %v1519
      %1521 = vmatmul.bf16.gmra.mxu0 %v759
      %v1522 = vpop.f32.mrf.mxu0
      %v1523 = vadd.f32 0.0, %v1522
      %v1524 = vpop.f32.mrf.mxu0
      %v1525 = vadd.f32 0.0, %v1524
      %1526 = vmatmul.bf16.gmra.mxu0 %v761
      %v1527 = vpop.f32.mrf.mxu0
      %v1528 = vadd.f32 0.0, %v1527
      %v1529 = vpop.f32.mrf.mxu0
      %v1530 = vadd.f32 0.0, %v1529
      %1531 = vmatmul.bf16.gmra.mxu0 %v1446
      %v1532 = vpop.f32.mrf.mxu0
      %v1533 = vadd.f32 0.0, %v1532
      %v1534 = vpop.f32.mrf.mxu0
      %v1535 = vadd.f32 0.0, %v1534
      %1536 = vdwg.mxu0
      %v1537 = vadd.f32 %v1402, %v1458
      %v1538 = vadd.f32 %v1403, %v1460
      %v1539 = vadd.f32 %v1404, %v1463
      %v1540 = vadd.f32 %v1405, %v1465
      %v1541 = vadd.f32 %v1406, %v1468
      %v1542 = vadd.f32 %v1407, %v1470
      %v1543 = vadd.f32 %v1408, %v1473
      %v1544 = vadd.f32 %v1409, %v1475
      %v1545 = vadd.f32 %v1410, %v1478
      %v1546 = vadd.f32 %v1411, %v1480
      %v1547 = vadd.f32 %v1412, %v1483
      %v1548 = vadd.f32 %v1413, %v1485
      %v1549 = vadd.f32 %v1414, %v1488
      %v1550 = vadd.f32 %v1415, %v1490
      %v1551 = vadd.f32 %v1416, %v1493
      %v1552 = vadd.f32 %v1417, %v1495
      %v1553 = vadd.f32 %v1418, %v1498
      %v1554 = vadd.f32 %v1419, %v1500
      %v1555 = vadd.f32 %v1420, %v1503
      %v1556 = vadd.f32 %v1421, %v1505
      %v1557 = vadd.f32 %v1422, %v1508
      %v1558 = vadd.f32 %v1423, %v1510
      %v1559 = vadd.f32 %v1424, %v1513
      %v1560 = vadd.f32 %v1425, %v1515
      %v1561 = vadd.f32 %v1426, %v1518
      %v1562 = vadd.f32 %v1427, %v1520
      %v1563 = vadd.f32 %v1428, %v1523
      %v1564 = vadd.f32 %v1429, %v1525
      %v1565 = vadd.f32 %v1430, %v1528
      %v1566 = vadd.f32 %v1431, %v1530
      %v1567 = vadd.f32 %v1432, %v1533
      %v1568 = vadd.f32 %v1433, %v1535
      %v1569 = vrot.slane %v1292, 1
      %v1570 = vsel %vm1001, %v1045, %v1569
      %v1571 = vor.u32 %v1289, %v1569
      %v1574 = vsel %vm1068, %v1571, 0
      %v1575 = vsel %vm1087, %v1570, 0
      %v1576 = vsel %vm1087, %v1574, 0
      %v1581 = vunpack.c.l.b16 %v448
      %v1582 = vunpack.c.l.b16 %v449
      %v1583 = vunpack.c.l.b16 %v450
      %v1584 = vunpack.c.l.b16 %v451
      %v1585 = vpack.c.b16 %v1582, %v1581
      %v1586 = vpack.c.b16 %v1584, %v1583
      %v1590 = vsel %vm729, %v1575, 0
      %v1593 = vsel %vm729, %v1576, 0
      %1595 = vmatpush.bf16.msra.mxu0 0
      %1596 = vmatpush.bf16.msra.mxu0 0
      %1597 = vmatpush.bf16.msra.mxu0 0
      %1598 = vmatpush.bf16.msra.mxu0 0
      %1599 = vmatpush.bf16.msra.mxu0 0
      %1600 = vmatpush.bf16.msra.mxu0 0
      %1601 = vmatpush.bf16.msra.mxu0 %v1586
      %1602 = vmatpush.bf16.msra.mxu0 %v1585
      %1603 = vmatmul.bf16.gmra.mxu0 %v1120
      %v1604 = vpop.f32.mrf.mxu0
      %v1605 = vadd.f32 0.0, %v1604
      %v1606 = vpop.f32.mrf.mxu0
      %v1607 = vadd.f32 0.0, %v1606
      %1608 = vmatmul.bf16.gmra.mxu0 %v1123
      %v1609 = vpop.f32.mrf.mxu0
      %v1610 = vadd.f32 0.0, %v1609
      %v1611 = vpop.f32.mrf.mxu0
      %v1612 = vadd.f32 0.0, %v1611
      %1613 = vmatmul.bf16.gmra.mxu0 %v1126
      %v1614 = vpop.f32.mrf.mxu0
      %v1615 = vadd.f32 0.0, %v1614
      %v1616 = vpop.f32.mrf.mxu0
      %v1617 = vadd.f32 0.0, %v1616
      %1618 = vmatmul.bf16.gmra.mxu0 %v1129
      %v1619 = vpop.f32.mrf.mxu0
      %v1620 = vadd.f32 0.0, %v1619
      %v1621 = vpop.f32.mrf.mxu0
      %v1622 = vadd.f32 0.0, %v1621
      %1623 = vmatmul.bf16.gmra.mxu0 %v1132
      %v1624 = vpop.f32.mrf.mxu0
      %v1625 = vadd.f32 0.0, %v1624
      %v1626 = vpop.f32.mrf.mxu0
      %v1627 = vadd.f32 0.0, %v1626
      %1628 = vmatmul.bf16.gmra.mxu0 %v1135
      %v1629 = vpop.f32.mrf.mxu0
      %v1630 = vadd.f32 0.0, %v1629
      %v1631 = vpop.f32.mrf.mxu0
      %v1632 = vadd.f32 0.0, %v1631
      %1633 = vmatmul.bf16.gmra.mxu0 %v1138
      %v1634 = vpop.f32.mrf.mxu0
      %v1635 = vadd.f32 0.0, %v1634
      %v1636 = vpop.f32.mrf.mxu0
      %v1637 = vadd.f32 0.0, %v1636
      %1638 = vmatmul.bf16.gmra.mxu0 %v1141
      %v1639 = vpop.f32.mrf.mxu0
      %v1640 = vadd.f32 0.0, %v1639
      %v1641 = vpop.f32.mrf.mxu0
      %v1642 = vadd.f32 0.0, %v1641
      %1643 = vmatmul.bf16.gmra.mxu0 %v1144
      %v1644 = vpop.f32.mrf.mxu0
      %v1645 = vadd.f32 0.0, %v1644
      %v1646 = vpop.f32.mrf.mxu0
      %v1647 = vadd.f32 0.0, %v1646
      %1648 = vmatmul.bf16.gmra.mxu0 %v1147
      %v1649 = vpop.f32.mrf.mxu0
      %v1650 = vadd.f32 0.0, %v1649
      %v1651 = vpop.f32.mrf.mxu0
      %v1652 = vadd.f32 0.0, %v1651
      %1653 = vmatmul.bf16.gmra.mxu0 %v1150
      %v1654 = vpop.f32.mrf.mxu0
      %v1655 = vadd.f32 0.0, %v1654
      %v1656 = vpop.f32.mrf.mxu0
      %v1657 = vadd.f32 0.0, %v1656
      %1658 = vmatmul.bf16.gmra.mxu0 %v1153
      %v1659 = vpop.f32.mrf.mxu0
      %v1660 = vadd.f32 0.0, %v1659
      %v1661 = vpop.f32.mrf.mxu0
      %v1662 = vadd.f32 0.0, %v1661
      %1663 = vmatmul.bf16.gmra.mxu0 %v1156
      %v1664 = vpop.f32.mrf.mxu0
      %v1665 = vadd.f32 0.0, %v1664
      %v1666 = vpop.f32.mrf.mxu0
      %v1667 = vadd.f32 0.0, %v1666
      %1668 = vmatmul.bf16.gmra.mxu0 %v1159
      %v1669 = vpop.f32.mrf.mxu0
      %v1670 = vadd.f32 0.0, %v1669
      %v1671 = vpop.f32.mrf.mxu0
      %v1672 = vadd.f32 0.0, %v1671
      %1673 = vmatmul.bf16.gmra.mxu0 %v1590
      %v1674 = vpop.f32.mrf.mxu0
      %v1675 = vadd.f32 0.0, %v1674
      %v1676 = vpop.f32.mrf.mxu0
      %v1677 = vadd.f32 0.0, %v1676
      %1678 = vmatmul.bf16.gmra.mxu0 %v1593
      %v1679 = vpop.f32.mrf.mxu0
      %v1680 = vadd.f32 0.0, %v1679
      %v1681 = vpop.f32.mrf.mxu0
      %v1682 = vadd.f32 0.0, %v1681
      %1683 = vdwg.mxu0
      %v1684 = vadd.f32 %v1537, %v1605
      %v1685 = vadd.f32 %v1538, %v1607
      %v1686 = vadd.f32 %v1539, %v1610
      %v1687 = vadd.f32 %v1540, %v1612
      %v1688 = vadd.f32 %v1541, %v1615
      %v1689 = vadd.f32 %v1542, %v1617
      %v1690 = vadd.f32 %v1543, %v1620
      %v1691 = vadd.f32 %v1544, %v1622
      %v1692 = vadd.f32 %v1545, %v1625
      %v1693 = vadd.f32 %v1546, %v1627
      %v1694 = vadd.f32 %v1547, %v1630
      %v1695 = vadd.f32 %v1548, %v1632
      %v1696 = vadd.f32 %v1549, %v1635
      %v1697 = vadd.f32 %v1550, %v1637
      %v1698 = vadd.f32 %v1551, %v1640
      %v1699 = vadd.f32 %v1552, %v1642
      %v1700 = vadd.f32 %v1553, %v1645
      %v1701 = vadd.f32 %v1554, %v1647
      %v1702 = vadd.f32 %v1555, %v1650
      %v1703 = vadd.f32 %v1556, %v1652
      %v1704 = vadd.f32 %v1557, %v1655
      %v1705 = vadd.f32 %v1558, %v1657
      %v1706 = vadd.f32 %v1559, %v1660
      %v1707 = vadd.f32 %v1560, %v1662
      %v1708 = vadd.f32 %v1561, %v1665
      %v1709 = vadd.f32 %v1562, %v1667
      %v1710 = vadd.f32 %v1563, %v1670
      %v1711 = vadd.f32 %v1564, %v1672
      %v1712 = vadd.f32 %v1565, %v1675
      %v1713 = vadd.f32 %v1566, %v1677
      %v1714 = vadd.f32 %v1567, %v1680
      %v1715 = vadd.f32 %v1568, %v1682
      %v1716 = vpack.c.b16 %v503, %v502
      %v1717 = vpack.c.b16 %v505, %v504
      %v1718 = vpack.c.b16 %v507, %v506
      %v1719 = vpack.c.b16 %v509, %v508
      %v1720 = vpack.c.b16 %v511, %v510
      %v1721 = vpack.c.b16 %v513, %v512
      %v1722 = vpack.c.b16 %v515, %v514
      %v1723 = vpack.c.b16 %v517, %v516
      %v1724 = vpack.c.b16 %v519, %v518
      %v1725 = vpack.c.b16 %v521, %v520
      %v1726 = vpack.c.b16 %v523, %v522
      %v1727 = vpack.c.b16 %v525, %v524
      %v1728 = vpack.c.b16 %v527, %v526
      %v1729 = vpack.c.b16 %v529, %v528
      %v1730 = vpack.c.b16 %v999, %v530
      %v1731 = vpack.c.b16 %v1286, %v1286
      %vm1732 = vsmask.f32 4352
      %v1734 = vshrl.u32 %v1716, 16
      %v1736 = vrot.slane %v1734, 3
      %v1737 = vshll.u32 %v1716, 16
      %v1739 = vrot.slane %v1737, 4
      %v1740 = vor.u32 %v1736, %v1739
      %v1742 = vshrl.u32 %v1717, 16
      %v1744 = vrot.slane %v1742, 3
      %v1745 = vshll.u32 %v1717, 16
      %v1747 = vrot.slane %v1745, 4
      %v1748 = vor.u32 %v1744, %v1747
      %v1749 = vsel %vm1732, %v1740, %v1748
      %v1751 = vshrl.u32 %v1718, 16
      %v1753 = vrot.slane %v1751, 3
      %v1754 = vshll.u32 %v1718, 16
      %v1756 = vrot.slane %v1754, 4
      %v1757 = vor.u32 %v1753, %v1756
      %v1758 = vsel %vm1732, %v1748, %v1757
      %v1760 = vshrl.u32 %v1719, 16
      %v1762 = vrot.slane %v1760, 3
      %v1763 = vshll.u32 %v1719, 16
      %v1765 = vrot.slane %v1763, 4
      %v1766 = vor.u32 %v1762, %v1765
      %v1767 = vsel %vm1732, %v1757, %v1766
      %v1769 = vshrl.u32 %v1720, 16
      %v1771 = vrot.slane %v1769, 3
      %v1772 = vshll.u32 %v1720, 16
      %v1774 = vrot.slane %v1772, 4
      %v1775 = vor.u32 %v1771, %v1774
      %v1776 = vsel %vm1732, %v1766, %v1775
      %v1778 = vshrl.u32 %v1721, 16
      %v1780 = vrot.slane %v1778, 3
      %v1781 = vshll.u32 %v1721, 16
      %v1783 = vrot.slane %v1781, 4
      %v1784 = vor.u32 %v1780, %v1783
      %v1785 = vsel %vm1732, %v1775, %v1784
      %v1787 = vshrl.u32 %v1722, 16
      %v1789 = vrot.slane %v1787, 3
      %v1790 = vshll.u32 %v1722, 16
      %v1792 = vrot.slane %v1790, 4
      %v1793 = vor.u32 %v1789, %v1792
      %v1794 = vsel %vm1732, %v1784, %v1793
      %v1796 = vshrl.u32 %v1723, 16
      %v1798 = vrot.slane %v1796, 3
      %v1799 = vshll.u32 %v1723, 16
      %v1801 = vrot.slane %v1799, 4
      %v1802 = vor.u32 %v1798, %v1801
      %v1803 = vsel %vm1732, %v1793, %v1802
      %v1805 = vshrl.u32 %v1724, 16
      %v1807 = vrot.slane %v1805, 3
      %v1808 = vshll.u32 %v1724, 16
      %v1810 = vrot.slane %v1808, 4
      %v1811 = vor.u32 %v1807, %v1810
      %v1812 = vsel %vm1732, %v1802, %v1811
      %v1814 = vshrl.u32 %v1725, 16
      %v1816 = vrot.slane %v1814, 3
      %v1817 = vshll.u32 %v1725, 16
      %v1819 = vrot.slane %v1817, 4
      %v1820 = vor.u32 %v1816, %v1819
      %v1821 = vsel %vm1732, %v1811, %v1820
      %v1823 = vshrl.u32 %v1726, 16
      %v1825 = vrot.slane %v1823, 3
      %v1826 = vshll.u32 %v1726, 16
      %v1828 = vrot.slane %v1826, 4
      %v1829 = vor.u32 %v1825, %v1828
      %v1830 = vsel %vm1732, %v1820, %v1829
      %v1832 = vshrl.u32 %v1727, 16
      %v1834 = vrot.slane %v1832, 3
      %v1835 = vshll.u32 %v1727, 16
      %v1837 = vrot.slane %v1835, 4
      %v1838 = vor.u32 %v1834, %v1837
      %v1839 = vsel %vm1732, %v1829, %v1838
      %v1841 = vshrl.u32 %v1728, 16
      %v1843 = vrot.slane %v1841, 3
      %v1844 = vshll.u32 %v1728, 16
      %v1846 = vrot.slane %v1844, 4
      %v1847 = vor.u32 %v1843, %v1846
      %v1848 = vsel %vm1732, %v1838, %v1847
      %v1850 = vshrl.u32 %v1729, 16
      %v1852 = vrot.slane %v1850, 3
      %v1853 = vshll.u32 %v1729, 16
      %v1855 = vrot.slane %v1853, 4
      %v1856 = vor.u32 %v1852, %v1855
      %v1857 = vsel %vm1732, %v1847, %v1856
      %v1859 = vshrl.u32 %v1730, 16
      %v1861 = vrot.slane %v1859, 3
      %v1862 = vshll.u32 %v1730, 16
      %v1864 = vrot.slane %v1862, 4
      %v1865 = vor.u32 %v1861, %v1864
      %v1866 = vsel %vm1732, %v1856, %v1865
      %v1868 = vshrl.u32 %v1731, 16
      %v1870 = vrot.slane %v1868, 3
      %v1871 = vshll.u32 %v1731, 16
      %v1873 = vrot.slane %v1871, 4
      %v1874 = vor.u32 %v1870, %v1873
      %v1875 = vsel %vm1732, %v1865, %v1874
      %v1892 = vsel %vm682, %v1870, 0
      %v1893 = vsel %vm701, %v1749, 0
      %v1894 = vsel %vm701, %v1758, 0
      %v1895 = vsel %vm701, %v1767, 0
      %v1896 = vsel %vm701, %v1776, 0
      %v1897 = vsel %vm701, %v1785, 0
      %v1898 = vsel %vm701, %v1794, 0
      %v1899 = vsel %vm701, %v1803, 0
      %v1900 = vsel %vm701, %v1812, 0
      %v1901 = vsel %vm701, %v1821, 0
      %v1902 = vsel %vm701, %v1830, 0
      %v1903 = vsel %vm701, %v1839, 0
      %v1904 = vsel %vm701, %v1848, 0
      %v1905 = vsel %vm701, %v1857, 0
      %v1906 = vsel %vm701, %v1866, 0
      %v1907 = vsel %vm701, %v1875, 0
      %v1908 = vsel %vm701, %v1892, 0
      %v1913 = vunpack.c.l.b16 %v452
      %v1914 = vunpack.c.l.b16 %v453
      %v1915 = vunpack.c.l.b16 %v454
      %v1916 = vunpack.c.l.b16 %v455
      %v1917 = vpack.c.b16 %v1914, %v1913
      %v1918 = vpack.c.b16 %v1916, %v1915
      %v1922 = vsel %vm729, %v1893, 0
      %v1925 = vsel %vm729, %v1894, 0
      %v1928 = vsel %vm729, %v1895, 0
      %v1931 = vsel %vm729, %v1896, 0
      %v1934 = vsel %vm729, %v1897, 0
      %v1937 = vsel %vm729, %v1898, 0
      %v1940 = vsel %vm729, %v1899, 0
      %v1943 = vsel %vm729, %v1900, 0
      %v1946 = vsel %vm729, %v1901, 0
      %v1949 = vsel %vm729, %v1902, 0
      %v1952 = vsel %vm729, %v1903, 0
      %v1955 = vsel %vm729, %v1904, 0
      %v1958 = vsel %vm729, %v1905, 0
      %v1961 = vsel %vm729, %v1906, 0
      %v1964 = vsel %vm729, %v1907, 0
      %v1967 = vsel %vm729, %v1908, 0
      %1969 = vmatpush.bf16.msra.mxu0 0
      %1970 = vmatpush.bf16.msra.mxu0 0
      %1971 = vmatpush.bf16.msra.mxu0 0
      %1972 = vmatpush.bf16.msra.mxu0 0
      %1973 = vmatpush.bf16.msra.mxu0 0
      %1974 = vmatpush.bf16.msra.mxu0 0
      %1975 = vmatpush.bf16.msra.mxu0 %v1918
      %1976 = vmatpush.bf16.msra.mxu0 %v1917
      %1977 = vmatmul.bf16.gmra.mxu0 %v1922
      %v1978 = vpop.f32.mrf.mxu0
      %v1979 = vadd.f32 0.0, %v1978
      %v1980 = vpop.f32.mrf.mxu0
      %v1981 = vadd.f32 0.0, %v1980
      %1982 = vmatmul.bf16.gmra.mxu0 %v1925
      %v1983 = vpop.f32.mrf.mxu0
      %v1984 = vadd.f32 0.0, %v1983
      %v1985 = vpop.f32.mrf.mxu0
      %v1986 = vadd.f32 0.0, %v1985
      %1987 = vmatmul.bf16.gmra.mxu0 %v1928
      %v1988 = vpop.f32.mrf.mxu0
      %v1989 = vadd.f32 0.0, %v1988
      %v1990 = vpop.f32.mrf.mxu0
      %v1991 = vadd.f32 0.0, %v1990
      %1992 = vmatmul.bf16.gmra.mxu0 %v1931
      %v1993 = vpop.f32.mrf.mxu0
      %v1994 = vadd.f32 0.0, %v1993
      %v1995 = vpop.f32.mrf.mxu0
      %v1996 = vadd.f32 0.0, %v1995
      %1997 = vmatmul.bf16.gmra.mxu0 %v1934
      %v1998 = vpop.f32.mrf.mxu0
      %v1999 = vadd.f32 0.0, %v1998
      %v2000 = vpop.f32.mrf.mxu0
      %v2001 = vadd.f32 0.0, %v2000
      %2002 = vmatmul.bf16.gmra.mxu0 %v1937
      %v2003 = vpop.f32.mrf.mxu0
      %v2004 = vadd.f32 0.0, %v2003
      %v2005 = vpop.f32.mrf.mxu0
      %v2006 = vadd.f32 0.0, %v2005
      %2007 = vmatmul.bf16.gmra.mxu0 %v1940
      %v2008 = vpop.f32.mrf.mxu0
      %v2009 = vadd.f32 0.0, %v2008
      %v2010 = vpop.f32.mrf.mxu0
      %v2011 = vadd.f32 0.0, %v2010
      %2012 = vmatmul.bf16.gmra.mxu0 %v1943
      %v2013 = vpop.f32.mrf.mxu0
      %v2014 = vadd.f32 0.0, %v2013
      %v2015 = vpop.f32.mrf.mxu0
      %v2016 = vadd.f32 0.0, %v2015
      %2017 = vmatmul.bf16.gmra.mxu0 %v1946
      %v2018 = vpop.f32.mrf.mxu0
      %v2019 = vadd.f32 0.0, %v2018
      %v2020 = vpop.f32.mrf.mxu0
      %v2021 = vadd.f32 0.0, %v2020
      %2022 = vmatmul.bf16.gmra.mxu0 %v1949
      %v2023 = vpop.f32.mrf.mxu0
      %v2024 = vadd.f32 0.0, %v2023
      %v2025 = vpop.f32.mrf.mxu0
      %v2026 = vadd.f32 0.0, %v2025
      %2027 = vmatmul.bf16.gmra.mxu0 %v1952
      %v2028 = vpop.f32.mrf.mxu0
      %v2029 = vadd.f32 0.0, %v2028
      %v2030 = vpop.f32.mrf.mxu0
      %v2031 = vadd.f32 0.0, %v2030
      %2032 = vmatmul.bf16.gmra.mxu0 %v1955
      %v2033 = vpop.f32.mrf.mxu0
      %v2034 = vadd.f32 0.0, %v2033
      %v2035 = vpop.f32.mrf.mxu0
      %v2036 = vadd.f32 0.0, %v2035
      %2037 = vmatmul.bf16.gmra.mxu0 %v1958
      %v2038 = vpop.f32.mrf.mxu0
      %v2039 = vadd.f32 0.0, %v2038
      %v2040 = vpop.f32.mrf.mxu0
      %v2041 = vadd.f32 0.0, %v2040
      %2042 = vmatmul.bf16.gmra.mxu0 %v1961
      %v2043 = vpop.f32.mrf.mxu0
      %v2044 = vadd.f32 0.0, %v2043
      %v2045 = vpop.f32.mrf.mxu0
      %v2046 = vadd.f32 0.0, %v2045
      %2047 = vmatmul.bf16.gmra.mxu0 %v1964
      %v2048 = vpop.f32.mrf.mxu0
      %v2049 = vadd.f32 0.0, %v2048
      %v2050 = vpop.f32.mrf.mxu0
      %v2051 = vadd.f32 0.0, %v2050
      %2052 = vmatmul.bf16.gmra.mxu0 %v1967
      %v2053 = vpop.f32.mrf.mxu0
      %v2054 = vadd.f32 0.0, %v2053
      %v2055 = vpop.f32.mrf.mxu0
      %v2056 = vadd.f32 0.0, %v2055
      %2057 = vdwg.mxu0
      %v2058 = vadd.f32 %v1684, %v1979
      %v2059 = vadd.f32 %v1685, %v1981
      %v2060 = vadd.f32 %v1686, %v1984
      %v2061 = vadd.f32 %v1687, %v1986
      %v2062 = vadd.f32 %v1688, %v1989
      %v2063 = vadd.f32 %v1689, %v1991
      %v2064 = vadd.f32 %v1690, %v1994
      %v2065 = vadd.f32 %v1691, %v1996
      %v2066 = vadd.f32 %v1692, %v1999
      %v2067 = vadd.f32 %v1693, %v2001
      %v2068 = vadd.f32 %v1694, %v2004
      %v2069 = vadd.f32 %v1695, %v2006
      %v2070 = vadd.f32 %v1696, %v2009
      %v2071 = vadd.f32 %v1697, %v2011
      %v2072 = vadd.f32 %v1698, %v2014
      %v2073 = vadd.f32 %v1699, %v2016
      %v2074 = vadd.f32 %v1700, %v2019
      %v2075 = vadd.f32 %v1701, %v2021
      %v2076 = vadd.f32 %v1702, %v2024
      %v2077 = vadd.f32 %v1703, %v2026
      %v2078 = vadd.f32 %v1704, %v2029
      %v2079 = vadd.f32 %v1705, %v2031
      %v2080 = vadd.f32 %v1706, %v2034
      %v2081 = vadd.f32 %v1707, %v2036
      %v2082 = vadd.f32 %v1708, %v2039
      %v2083 = vadd.f32 %v1709, %v2041
      %v2084 = vadd.f32 %v1710, %v2044
      %v2085 = vadd.f32 %v1711, %v2046
      %v2086 = vadd.f32 %v1712, %v2049
      %v2087 = vadd.f32 %v1713, %v2051
      %v2088 = vadd.f32 %v1714, %v2054
      %v2089 = vadd.f32 %v1715, %v2056
      %v2094 = vunpack.c.l.b16 %v456
      %v2095 = vunpack.c.l.b16 %v457
      %v2096 = vunpack.c.l.b16 %v458
      %v2097 = vunpack.c.l.b16 %v459
      %v2098 = vpack.c.b16 %v2095, %v2094
      %v2099 = vpack.c.b16 %v2097, %v2096
      %2102 = vmatpush.bf16.msra.mxu0 0
      %2103 = vmatpush.bf16.msra.mxu0 0
      %2104 = vmatpush.bf16.msra.mxu0 0
      %2105 = vmatpush.bf16.msra.mxu0 0
      %2106 = vmatpush.bf16.msra.mxu0 0
      %2107 = vmatpush.bf16.msra.mxu0 0
      %2108 = vmatpush.bf16.msra.mxu0 %v2099
      %2109 = vmatpush.bf16.msra.mxu0 %v2098
      %2110 = vmatmul.bf16.gmra.mxu0 %v735
      %v2111 = vpop.f32.mrf.mxu0
      %v2112 = vadd.f32 0.0, %v2111
      %v2113 = vpop.f32.mrf.mxu0
      %v2114 = vadd.f32 0.0, %v2113
      %2115 = vmatmul.bf16.gmra.mxu0 %v737
      %v2116 = vpop.f32.mrf.mxu0
      %v2117 = vadd.f32 0.0, %v2116
      %v2118 = vpop.f32.mrf.mxu0
      %v2119 = vadd.f32 0.0, %v2118
      %2120 = vmatmul.bf16.gmra.mxu0 %v739
      %v2121 = vpop.f32.mrf.mxu0
      %v2122 = vadd.f32 0.0, %v2121
      %v2123 = vpop.f32.mrf.mxu0
      %v2124 = vadd.f32 0.0, %v2123
      %2125 = vmatmul.bf16.gmra.mxu0 %v741
      %v2126 = vpop.f32.mrf.mxu0
      %v2127 = vadd.f32 0.0, %v2126
      %v2128 = vpop.f32.mrf.mxu0
      %v2129 = vadd.f32 0.0, %v2128
      %2130 = vmatmul.bf16.gmra.mxu0 %v743
      %v2131 = vpop.f32.mrf.mxu0
      %v2132 = vadd.f32 0.0, %v2131
      %v2133 = vpop.f32.mrf.mxu0
      %v2134 = vadd.f32 0.0, %v2133
      %2135 = vmatmul.bf16.gmra.mxu0 %v745
      %v2136 = vpop.f32.mrf.mxu0
      %v2137 = vadd.f32 0.0, %v2136
      %v2138 = vpop.f32.mrf.mxu0
      %v2139 = vadd.f32 0.0, %v2138
      %2140 = vmatmul.bf16.gmra.mxu0 %v747
      %v2141 = vpop.f32.mrf.mxu0
      %v2142 = vadd.f32 0.0, %v2141
      %v2143 = vpop.f32.mrf.mxu0
      %v2144 = vadd.f32 0.0, %v2143
      %2145 = vmatmul.bf16.gmra.mxu0 %v749
      %v2146 = vpop.f32.mrf.mxu0
      %v2147 = vadd.f32 0.0, %v2146
      %v2148 = vpop.f32.mrf.mxu0
      %v2149 = vadd.f32 0.0, %v2148
      %2150 = vmatmul.bf16.gmra.mxu0 %v751
      %v2151 = vpop.f32.mrf.mxu0
      %v2152 = vadd.f32 0.0, %v2151
      %v2153 = vpop.f32.mrf.mxu0
      %v2154 = vadd.f32 0.0, %v2153
      %2155 = vmatmul.bf16.gmra.mxu0 %v753
      %v2156 = vpop.f32.mrf.mxu0
      %v2157 = vadd.f32 0.0, %v2156
      %v2158 = vpop.f32.mrf.mxu0
      %v2159 = vadd.f32 0.0, %v2158
      %2160 = vmatmul.bf16.gmra.mxu0 %v755
      %v2161 = vpop.f32.mrf.mxu0
      %v2162 = vadd.f32 0.0, %v2161
      %v2163 = vpop.f32.mrf.mxu0
      %v2164 = vadd.f32 0.0, %v2163
      %2165 = vmatmul.bf16.gmra.mxu0 %v757
      %v2166 = vpop.f32.mrf.mxu0
      %v2167 = vadd.f32 0.0, %v2166
      %v2168 = vpop.f32.mrf.mxu0
      %v2169 = vadd.f32 0.0, %v2168
      %2170 = vmatmul.bf16.gmra.mxu0 %v759
      %v2171 = vpop.f32.mrf.mxu0
      %v2172 = vadd.f32 0.0, %v2171
      %v2173 = vpop.f32.mrf.mxu0
      %v2174 = vadd.f32 0.0, %v2173
      %2175 = vmatmul.bf16.gmra.mxu0 %v761
      %v2176 = vpop.f32.mrf.mxu0
      %v2177 = vadd.f32 0.0, %v2176
      %v2178 = vpop.f32.mrf.mxu0
      %v2179 = vadd.f32 0.0, %v2178
      %2180 = vmatmul.bf16.gmra.mxu0 %v1446
      %v2181 = vpop.f32.mrf.mxu0
      %v2182 = vadd.f32 0.0, %v2181
      %v2183 = vpop.f32.mrf.mxu0
      %v2184 = vadd.f32 0.0, %v2183
      %2185 = vmatmul.bf16.gmra.mxu0 %v731
      %v2186 = vpop.f32.mrf.mxu0
      %v2187 = vadd.f32 0.0, %v2186
      %v2188 = vpop.f32.mrf.mxu0
      %v2189 = vadd.f32 0.0, %v2188
      %2190 = vdwg.mxu0
      %v2191 = vadd.f32 %v2058, %v2112
      %v2192 = vadd.f32 %v2059, %v2114
      %v2193 = vadd.f32 %v2060, %v2117
      %v2194 = vadd.f32 %v2061, %v2119
      %v2195 = vadd.f32 %v2062, %v2122
      %v2196 = vadd.f32 %v2063, %v2124
      %v2197 = vadd.f32 %v2064, %v2127
      %v2198 = vadd.f32 %v2065, %v2129
      %v2199 = vadd.f32 %v2066, %v2132
      %v2200 = vadd.f32 %v2067, %v2134
      %v2201 = vadd.f32 %v2068, %v2137
      %v2202 = vadd.f32 %v2069, %v2139
      %v2203 = vadd.f32 %v2070, %v2142
      %v2204 = vadd.f32 %v2071, %v2144
      %v2205 = vadd.f32 %v2072, %v2147
      %v2206 = vadd.f32 %v2073, %v2149
      %v2207 = vadd.f32 %v2074, %v2152
      %v2208 = vadd.f32 %v2075, %v2154
      %v2209 = vadd.f32 %v2076, %v2157
      %v2210 = vadd.f32 %v2077, %v2159
      %v2211 = vadd.f32 %v2078, %v2162
      %v2212 = vadd.f32 %v2079, %v2164
      %v2213 = vadd.f32 %v2080, %v2167
      %v2214 = vadd.f32 %v2081, %v2169
      %v2215 = vadd.f32 %v2082, %v2172
      %v2216 = vadd.f32 %v2083, %v2174
      %v2217 = vadd.f32 %v2084, %v2177
      %v2218 = vadd.f32 %v2085, %v2179
      %v2219 = vadd.f32 %v2086, %v2182
      %v2220 = vadd.f32 %v2087, %v2184
      %v2221 = vadd.f32 %v2088, %v2187
      %v2222 = vadd.f32 %v2089, %v2189
      %v2227 = vunpack.c.l.b16 %v460
      %v2228 = vunpack.c.l.b16 %v461
      %v2229 = vunpack.c.l.b16 %v462
      %v2230 = vunpack.c.l.b16 %v463
      %v2231 = vpack.c.b16 %v2228, %v2227
      %v2232 = vpack.c.b16 %v2230, %v2229
      %2235 = vmatpush.bf16.msra.mxu0 0
      %2236 = vmatpush.bf16.msra.mxu0 0
      %2237 = vmatpush.bf16.msra.mxu0 0
      %2238 = vmatpush.bf16.msra.mxu0 0
      %2239 = vmatpush.bf16.msra.mxu0 0
      %2240 = vmatpush.bf16.msra.mxu0 0
      %2241 = vmatpush.bf16.msra.mxu0 %v2232
      %2242 = vmatpush.bf16.msra.mxu0 %v2231
      %2243 = vmatmul.bf16.gmra.mxu0 %v1123
      %v2244 = vpop.f32.mrf.mxu0
      %v2245 = vadd.f32 0.0, %v2244
      %v2246 = vpop.f32.mrf.mxu0
      %v2247 = vadd.f32 0.0, %v2246
      %2248 = vmatmul.bf16.gmra.mxu0 %v1126
      %v2249 = vpop.f32.mrf.mxu0
      %v2250 = vadd.f32 0.0, %v2249
      %v2251 = vpop.f32.mrf.mxu0
      %v2252 = vadd.f32 0.0, %v2251
      %2253 = vmatmul.bf16.gmra.mxu0 %v1129
      %v2254 = vpop.f32.mrf.mxu0
      %v2255 = vadd.f32 0.0, %v2254
      %v2256 = vpop.f32.mrf.mxu0
      %v2257 = vadd.f32 0.0, %v2256
      %2258 = vmatmul.bf16.gmra.mxu0 %v1132
      %v2259 = vpop.f32.mrf.mxu0
      %v2260 = vadd.f32 0.0, %v2259
      %v2261 = vpop.f32.mrf.mxu0
      %v2262 = vadd.f32 0.0, %v2261
      %2263 = vmatmul.bf16.gmra.mxu0 %v1135
      %v2264 = vpop.f32.mrf.mxu0
      %v2265 = vadd.f32 0.0, %v2264
      %v2266 = vpop.f32.mrf.mxu0
      %v2267 = vadd.f32 0.0, %v2266
      %2268 = vmatmul.bf16.gmra.mxu0 %v1138
      %v2269 = vpop.f32.mrf.mxu0
      %v2270 = vadd.f32 0.0, %v2269
      %v2271 = vpop.f32.mrf.mxu0
      %v2272 = vadd.f32 0.0, %v2271
      %2273 = vmatmul.bf16.gmra.mxu0 %v1141
      %v2274 = vpop.f32.mrf.mxu0
      %v2275 = vadd.f32 0.0, %v2274
      %v2276 = vpop.f32.mrf.mxu0
      %v2277 = vadd.f32 0.0, %v2276
      %2278 = vmatmul.bf16.gmra.mxu0 %v1144
      %v2279 = vpop.f32.mrf.mxu0
      %v2280 = vadd.f32 0.0, %v2279
      %v2281 = vpop.f32.mrf.mxu0
      %v2282 = vadd.f32 0.0, %v2281
      %2283 = vmatmul.bf16.gmra.mxu0 %v1147
      %v2284 = vpop.f32.mrf.mxu0
      %v2285 = vadd.f32 0.0, %v2284
      %v2286 = vpop.f32.mrf.mxu0
      %v2287 = vadd.f32 0.0, %v2286
      %2288 = vmatmul.bf16.gmra.mxu0 %v1150
      %v2289 = vpop.f32.mrf.mxu0
      %v2290 = vadd.f32 0.0, %v2289
      %v2291 = vpop.f32.mrf.mxu0
      %v2292 = vadd.f32 0.0, %v2291
      %2293 = vmatmul.bf16.gmra.mxu0 %v1153
      %v2294 = vpop.f32.mrf.mxu0
      %v2295 = vadd.f32 0.0, %v2294
      %v2296 = vpop.f32.mrf.mxu0
      %v2297 = vadd.f32 0.0, %v2296
      %2298 = vmatmul.bf16.gmra.mxu0 %v1156
      %v2299 = vpop.f32.mrf.mxu0
      %v2300 = vadd.f32 0.0, %v2299
      %v2301 = vpop.f32.mrf.mxu0
      %v2302 = vadd.f32 0.0, %v2301
      %2303 = vmatmul.bf16.gmra.mxu0 %v1159
      %v2304 = vpop.f32.mrf.mxu0
      %v2305 = vadd.f32 0.0, %v2304
      %v2306 = vpop.f32.mrf.mxu0
      %v2307 = vadd.f32 0.0, %v2306
      %2308 = vmatmul.bf16.gmra.mxu0 %v1590
      %v2309 = vpop.f32.mrf.mxu0
      %v2310 = vadd.f32 0.0, %v2309
      %v2311 = vpop.f32.mrf.mxu0
      %v2312 = vadd.f32 0.0, %v2311
      %2313 = vmatmul.bf16.gmra.mxu0 %v1593
      %v2314 = vpop.f32.mrf.mxu0
      %v2315 = vadd.f32 0.0, %v2314
      %v2316 = vpop.f32.mrf.mxu0
      %v2317 = vadd.f32 0.0, %v2316
      %2318 = vmatmul.bf16.gmra.mxu0 %v731
      %v2319 = vpop.f32.mrf.mxu0
      %v2320 = vadd.f32 0.0, %v2319
      %v2321 = vpop.f32.mrf.mxu0
      %v2322 = vadd.f32 0.0, %v2321
      %2323 = vdwg.mxu0
      %v2324 = vadd.f32 %v2191, %v2245
      %v2325 = vadd.f32 %v2192, %v2247
      %v2326 = vadd.f32 %v2193, %v2250
      %v2327 = vadd.f32 %v2194, %v2252
      %v2328 = vadd.f32 %v2195, %v2255
      %v2329 = vadd.f32 %v2196, %v2257
      %v2330 = vadd.f32 %v2197, %v2260
      %v2331 = vadd.f32 %v2198, %v2262
      %v2332 = vadd.f32 %v2199, %v2265
      %v2333 = vadd.f32 %v2200, %v2267
      %v2334 = vadd.f32 %v2201, %v2270
      %v2335 = vadd.f32 %v2202, %v2272
      %v2336 = vadd.f32 %v2203, %v2275
      %v2337 = vadd.f32 %v2204, %v2277
      %v2338 = vadd.f32 %v2205, %v2280
      %v2339 = vadd.f32 %v2206, %v2282
      %v2340 = vadd.f32 %v2207, %v2285
      %v2341 = vadd.f32 %v2208, %v2287
      %v2342 = vadd.f32 %v2209, %v2290
      %v2343 = vadd.f32 %v2210, %v2292
      %v2344 = vadd.f32 %v2211, %v2295
      %v2345 = vadd.f32 %v2212, %v2297
      %v2346 = vadd.f32 %v2213, %v2300
      %v2347 = vadd.f32 %v2214, %v2302
      %v2348 = vadd.f32 %v2215, %v2305
      %v2349 = vadd.f32 %v2216, %v2307
      %v2350 = vadd.f32 %v2217, %v2310
      %v2351 = vadd.f32 %v2218, %v2312
      %v2352 = vadd.f32 %v2219, %v2315
      %v2353 = vadd.f32 %v2220, %v2317
      %v2354 = vadd.f32 %v2221, %v2320
      %v2355 = vadd.f32 %v2222, %v2322
      %v2356 = vld [vmem:[%s4] sm:$0x1]
      %v2358 = vperm.slane %v2356, 0
      %v2360 = vadd.f32 %v2324, %v2358
      %v2361 = vadd.f32 %v2325, %v2358
      %v2362 = vadd.f32 %v2326, %v2358
      %v2363 = vadd.f32 %v2327, %v2358
      %v2364 = vadd.f32 %v2328, %v2358
      %v2365 = vadd.f32 %v2329, %v2358
      %v2366 = vadd.f32 %v2330, %v2358
      %v2367 = vadd.f32 %v2331, %v2358
      %v2368 = vadd.f32 %v2332, %v2358
      %v2369 = vadd.f32 %v2333, %v2358
      %v2370 = vadd.f32 %v2334, %v2358
      %v2371 = vadd.f32 %v2335, %v2358
      %v2372 = vadd.f32 %v2336, %v2358
      %v2373 = vadd.f32 %v2337, %v2358
      %v2374 = vadd.f32 %v2338, %v2358
      %v2375 = vadd.f32 %v2339, %v2358
      %v2376 = vadd.f32 %v2340, %v2358
      %v2377 = vadd.f32 %v2341, %v2358
      %v2378 = vadd.f32 %v2342, %v2358
      %v2379 = vadd.f32 %v2343, %v2358
      %v2380 = vadd.f32 %v2344, %v2358
      %v2381 = vadd.f32 %v2345, %v2358
      %v2382 = vadd.f32 %v2346, %v2358
      %v2383 = vadd.f32 %v2347, %v2358
      %v2384 = vadd.f32 %v2348, %v2358
      %v2385 = vadd.f32 %v2349, %v2358
      %v2386 = vadd.f32 %v2350, %v2358
      %v2387 = vadd.f32 %v2351, %v2358
      %v2388 = vadd.f32 %v2352, %v2358
      %v2389 = vadd.f32 %v2353, %v2358
      %v2390 = vadd.f32 %v2354, %v2358
      %v2391 = vadd.f32 %v2355, %v2358
      %vm2392 = vcmask 64512
      %2393 = vst.msk [vmem:[%s224] sm:$0xff] %vm2392, %v2360
      %2394 = vst.msk [vmem:[%s224 + $0x8] sm:$0xff] %vm2392, %v2361
      %2395 = vst.msk [vmem:[%s224 + $0x10] sm:$0xff] %vm2392, %v2362
      %2396 = vst.msk [vmem:[%s224 + $0x18] sm:$0xff] %vm2392, %v2363
      %2397 = vst.msk [vmem:[%s224 + $0x20] sm:$0xff] %vm2392, %v2364
      %2398 = vst.msk [vmem:[%s224 + $0x28] sm:$0xff] %vm2392, %v2365
      %2399 = vst.msk [vmem:[%s224 + $0x30] sm:$0xff] %vm2392, %v2366
      %2400 = vst.msk [vmem:[%s224 + $0x38] sm:$0xff] %vm2392, %v2367
      %2401 = vst.msk [vmem:[%s224 + $0x40] sm:$0xff] %vm2392, %v2368
      %2402 = vst.msk [vmem:[%s224 + $0x48] sm:$0xff] %vm2392, %v2369
      %2403 = vst.msk [vmem:[%s224 + $0x50] sm:$0xff] %vm2392, %v2370
      %2404 = vst.msk [vmem:[%s224 + $0x58] sm:$0xff] %vm2392, %v2371
      %2405 = vst.msk [vmem:[%s224 + $0x60] sm:$0xff] %vm2392, %v2372
      %2406 = vst.msk [vmem:[%s224 + $0x68] sm:$0xff] %vm2392, %v2373
      %2407 = vst.msk [vmem:[%s224 + $0x70] sm:$0xff] %vm2392, %v2374
      %2408 = vst.msk [vmem:[%s224 + $0x78] sm:$0xff] %vm2392, %v2375
      %2409 = vst.msk [vmem:[%s224 + $0x80] sm:$0xff] %vm2392, %v2376
      %2410 = vst.msk [vmem:[%s224 + $0x88] sm:$0xff] %vm2392, %v2377
      %2411 = vst.msk [vmem:[%s224 + $0x90] sm:$0xff] %vm2392, %v2378
      %2412 = vst.msk [vmem:[%s224 + $0x98] sm:$0xff] %vm2392, %v2379
      %2413 = vst.msk [vmem:[%s224 + $0xa0] sm:$0xff] %vm2392, %v2380
      %2414 = vst.msk [vmem:[%s224 + $0xa8] sm:$0xff] %vm2392, %v2381
      %2415 = vst.msk [vmem:[%s224 + $0xb0] sm:$0xff] %vm2392, %v2382
      %2416 = vst.msk [vmem:[%s224 + $0xb8] sm:$0xff] %vm2392, %v2383
      %2417 = vst.msk [vmem:[%s224 + $0xc0] sm:$0xff] %vm2392, %v2384
      %2418 = vst.msk [vmem:[%s224 + $0xc8] sm:$0xff] %vm2392, %v2385
      %2419 = vst.msk [vmem:[%s224 + $0xd0] sm:$0xff] %vm2392, %v2386
      %2420 = vst.msk [vmem:[%s224 + $0xd8] sm:$0xff] %vm2392, %v2387
      %2421 = vst.msk [vmem:[%s224 + $0xe0] sm:$0xff] %vm2392, %v2388
      %2422 = vst.msk [vmem:[%s224 + $0xe8] sm:$0xff] %vm2392, %v2389
      %2423 = vst.msk [vmem:[%s224 + $0xf0] sm:$0xff] %vm2392, %v2390
      %2424 = vst.msk [vmem:[%s224 + $0xf8] sm:$0xff] %vm2392, %v2391
      %p2425 = scmp.lt.s32.totalorder %s16, 1
      %s2426 = scalar_select %p2425, %s16, 1
      %s2427 = smul.addr %s2426, 32
      %s2428 = smul.addr %s2427, 8
      %s2429 = scalar_lea.vmem %s5, %s2428
      // Predicated region
      $region41: #{masked_bottleneck_block.5} parent=39 // pred_check
        %p2430 = pneg %p144
      $region42: #{masked_bottleneck_block.5} parent=39 // pred_check_branch
        %2432 = sbr.rel (%p2430) target = $region44
      $region43: #{masked_bottleneck_block.5} parent=39 // pred_region
        _
      $region44: #{masked_bottleneck_block.5} parent=39 // pred_fallthru
        _
    $region40: #{masked_bottleneck_block.5} parent=5 // pred_fallthru
      _
    %p2433 = scmp.le.s32.totalorder 2, %s11
    // Predicated region
    $region45: #{masked_bottleneck_block.5} parent=5 // pred_check
      %p2434 = pneg %p2433
    $region46: #{masked_bottleneck_block.5} parent=5 // pred_check_branch
      %2436 = sbr.rel (%p2434) target = $region48
    $region47: #{masked_bottleneck_block.5} parent=5 // pred_region
      %s2437 = ssub.s32 %s11, 2
      // Predicated region
      $region49: #{masked_bottleneck_block.5} parent=47 // pred_check
        %p2438 = pneg %p150
      $region50: #{masked_bottleneck_block.5} parent=47 // pred_check_branch
        %2440 = sbr.rel (%p2438) target = $region52
      $region51: #{masked_bottleneck_block.5} parent=47 // pred_region
        %p2441 = scmp.lt.s32.totalorder %s17, 1
        %s2442 = scalar_select %p2441, %s17, 1
        %s2443 = smul.addr %s2442, 32
        %s2444 = smul.addr %s2443, 8
        %s2445 = scalar_lea.vmem %s5, %s2444
      $region52: #{masked_bottleneck_block.5} parent=47 // pred_fallthru
        _
    $region48: #{masked_bottleneck_block.5} parent=5 // pred_fallthru
      _
  $region6: #{masked_bottleneck_block.5} parent=0 // loop_footer
    %s15 = sadd.s32 1, %s11
  $region7: #{masked_bottleneck_block.5} parent=0 // loop_footer_branch
    %10 = sbr.rel target = $region3
  $region8: #{masked_bottleneck_block.5} parent=0 // loop_exit
    _

</llo_original>
